<compile_context>
chip_gen: v7x
topology: tpu7x:2x2x1
jax: 0.10.0
libtpu: 0.0.40
codegen_flags: <defaults>
</compile_context>

<pallas_src>
import functools

import jax
import jax.numpy as jnp
from jax.experimental import pallas as pl
from jax.experimental.pallas import tpu as pltpu

N_CLASSES = 2
OUT_PAD = 128  # fc2 output padded to 128 lanes for a lane-dense store


# -----------------------------------------------------------------------------
# Elementwise activations
# -----------------------------------------------------------------------------
def _silu(x, act_dtype=jnp.float32):
    # SiLU with the transcendental optionally computed in bf16 (v6e/v7x EUP).
    xa = x.astype(act_dtype)
    sig = 1.0 / (1.0 + jnp.exp(-xa))
    return x * sig.astype(jnp.float32)


def _sigmoid(x):
    return 1.0 / (1.0 + jnp.exp(-x))


def _mish(x):
    # mish(x) = x * tanh(softplus(x)), numerically stable softplus (f32, tiny tensor)
    sp = jnp.maximum(x, 0.0) + jnp.log1p(jnp.exp(-jnp.abs(x)))
    return x * jnp.tanh(sp)


@functools.lru_cache(maxsize=1)
def _act_dtype_for_device():
    """bf16 activation transcendentals on v6e/v7x (bf16 EUP); f32 elsewhere (v5e-safe)."""
    try:
        kind = jax.devices()[0].device_kind.lower()
    except Exception:
        return jnp.float32
    if any(s in kind for s in ("v6", "v7", "tpu6", "tpu7")):
        return jnp.bfloat16
    return jnp.float32


def _full_spec(arr):
    """BlockSpec covering the whole (small) array, constant across the 1-D grid."""
    shape = arr.shape
    zeros = (0,) * len(shape)
    return pl.BlockSpec(shape, lambda g, _z=zeros: _z)


def _choose_tiling(n, max_tile=8):
    """Pick (grid_steps, images_per_step).  Keeps the grid a multiple of 2 for
    small N (v7x has 2 TensorCores sharing the parallel grid axis)."""
    b_tile = min(max_tile, max(n, 1))
    g = -(-n // b_tile)
    if g == 1 and n > 1:
        b_tile = -(-n // 2)
        g = 2
    return g, b_tile


# -----------------------------------------------------------------------------
# The single fused kernel: backbone + classifier head, one grid step = B_TILE images.
# -----------------------------------------------------------------------------
def _fused_kernel(patch_ref, dw_mw_ref, stem_w_ref, stem_b_ref, exp_w_ref,
                  exp_b_ref, dw_b_ref, se1_w_ref, se1_b_ref, se2_w_ref,
                  se2_b_ref, ph_w_ref, ph_b_ref, cf_w_ref, cf_b_ref,
                  fc2_w_ref, fc2_b_ref, out_ref, *, H, W, B_TILE, act_dtype):
    HW = H * W
    BHW = B_TILE * HW

    # ---- stem conv (matmul over im2col patches, K padded to 32) + SiLU
    x = patch_ref[...]                                                  # (BHW, Kp) bf16
    stem = jnp.dot(x, stem_w_ref[...], preferred_element_type=jnp.float32)
    stem = _silu(stem + stem_b_ref[...], act_dtype)                     # (BHW, C_stem)

    # ---- MBConv expand 1x1 + SiLU
    exp = jnp.dot(stem.astype(jnp.bfloat16), exp_w_ref[...],
                  preferred_element_type=jnp.float32)
    exp = _silu(exp + exp_b_ref[...], act_dtype)                        # (BHW, C_exp)
    c_exp = exp.shape[1]

    # ---- depthwise 3x3, stride 1, zero halo.
    # Spatial (dy,dx) shifts are XLU rolls of the flattened (BHW, C) view;
    # halo masking is folded into the precomputed mask*tap array dw_mw
    # (one multiply-add per tap; no in-kernel iota/compare/select).
    acc = jnp.zeros_like(exp)
    for dy in range(3):
        for dx in range(3):
            off = (dy - 1) * W + (dx - 1)
            if off == 0:
                shifted = exp
            else:
                shifted = pltpu.roll(exp, shift=(-off) % BHW, axis=0)
            acc = acc + shifted * dw_mw_ref[dy * 3 + dx]                # (BHW, C_exp)
    dw = _silu(acc + dw_b_ref[...], act_dtype)                          # (BHW, C_exp)

    # ---- squeeze-and-excite (per-image pooling), fully in-register
    if B_TILE == 1:
        sq = jnp.mean(dw, axis=0, keepdims=True)                        # (1, C_exp)
    else:
        sq = jnp.mean(dw.reshape(B_TILE, HW, c_exp), axis=1)            # (B, C_exp)
    s1 = _silu(jnp.dot(sq.astype(jnp.bfloat16), se1_w_ref[...],
                       preferred_element_type=jnp.float32) + se1_b_ref[...])
    gate = _sigmoid(jnp.dot(s1.astype(jnp.bfloat16), se2_w_ref[...],
                            preferred_element_type=jnp.float32) + se2_b_ref[...])
    if B_TILE == 1:
        gated = dw * gate                                               # (HW, C_exp)
    else:
        gated = (dw.reshape(B_TILE, HW, c_exp) * gate[:, None, :]).reshape(BHW, c_exp)

    # ---- folded project(no act) @ head 1x1 conv + SiLU
    head = jnp.dot(gated.astype(jnp.bfloat16), ph_w_ref[...],
                   preferred_element_type=jnp.float32) + ph_b_ref[...]
    head = _silu(head, act_dtype)                                       # (BHW, 128)
    c_head = head.shape[1]

    # ---- global average pool -> per-image feature rows (lane-dense, 128 wide)
    if B_TILE == 1:
        feat = jnp.mean(head, axis=0, keepdims=True)                    # (1, 128)
    else:
        feat = jnp.mean(head.reshape(B_TILE, HW, c_head), axis=1)       # (B, 128)

    # ---- classifier epilogue: folded cls@fc1 -> Mish -> (Dropout eval id) -> fc2
    h = jnp.dot(feat.astype(jnp.bfloat16), cf_w_ref[...],
                preferred_element_type=jnp.float32) + cf_b_ref[...]
    h = _mish(h)                                                        # (B, 512)
    # TODO(synk): Dropout(0.3) applied as eval-mode identity (no stochastic mask).
    o = jnp.dot(h.astype(jnp.bfloat16), fc2_w_ref[...],
                preferred_element_type=jnp.float32) + fc2_b_ref[...]    # (B, 128 padded)
    out_ref[...] = o.reshape(out_ref.shape).astype(out_ref.dtype)


# -----------------------------------------------------------------------------
# Wrapper: mask precompute, tiling choice, pallas_call
# -----------------------------------------------------------------------------
def _dw_mask_taps(dw_w, H, W):
    """(9, H*W, C) f32 = halo_mask(dy,dx,pos) * tap(dy,dx,c).  No power-of-two
    restriction on W; works for arbitrary feature-map sizes."""
    HW = H * W
    pos = jnp.arange(HW, dtype=jnp.int32)
    r = pos // W
    c = pos % W
    mts = []
    for dy in range(3):
        for dx in range(3):
            rr = r + (dy - 1)
            cc = c + (dx - 1)
            valid = (rr >= 0) & (rr < H) & (cc >= 0) & (cc < W)
            mts.append(valid.astype(jnp.float32)[:, None] * dw_w[dy, dx][None, :])
    return jnp.stack(mts, axis=0)


def backbone_classify_fused(patches, fp, N, H, W):
    HW = H * W
    Kp = patches.shape[1]
    G, B_TILE = _choose_tiling(N)
    N_pad = G * B_TILE
    if N_pad > N:
        patches = jnp.pad(patches, ((0, (N_pad - N) * HW), (0, 0)))

    # precomputed mask*tap constants (tiled per in-step image so the flattened
    # roll-based depthwise is exact across the B_TILE*HW axis)
    dw_mw = _dw_mask_taps(fp["dw_w"], H, W)                             # (9, HW, C_exp)
    if B_TILE > 1:
        dw_mw = jnp.tile(dw_mw, (1, B_TILE, 1))

    weight_names = ("stem_w", "stem_b", "exp_w", "exp_b", "dw_b",
                    "se1_w", "se1_b", "se2_w", "se2_b",
                    "ph_w", "ph_b", "cf_w", "cf_b", "fc2_w", "fc2_b")
    weights = [fp[name] for name in weight_names]

    out = pl.pallas_call(
        functools.partial(_fused_kernel, H=H, W=W, B_TILE=B_TILE,
                          act_dtype=_act_dtype_for_device()),
        out_shape=jax.ShapeDtypeStruct((G, B_TILE, OUT_PAD), jnp.float32),
        grid=(G,),
        in_specs=[pl.BlockSpec((B_TILE * HW, Kp), lambda g: (g, 0)),
                  _full_spec(dw_mw)]
                 + [_full_spec(w) for w in weights],
        out_specs=pl.BlockSpec((1, B_TILE, OUT_PAD), lambda g: (g, 0, 0)),
        compiler_params=pltpu.CompilerParams(
            dimension_semantics=("parallel",)),  # image-parallel (2 TCs on v7x)
    )(patches, dw_mw, *weights)
    return out.reshape(N_pad, OUT_PAD)[:N, :N_CLASSES]


# -----------------------------------------------------------------------------
# Glue (plain JAX): im2col for the strided stem conv; patches emitted as bf16
# -----------------------------------------------------------------------------
def im2col_3x3_s2(x_nhwc, k_pad):
    # 3x3, stride 2, pad 1 (EfficientNet stem).  Patch channel order: (dy, dx, cin).
    N, H, W, C = x_nhwc.shape
    xp = jnp.pad(x_nhwc, ((0, 0), (1, 1), (1, 1), (0, 0)))
    Hp, Wp = H + 2, W + 2
    Ho = (Hp - 3) // 2 + 1
    Wo = (Wp - 3) // 2 + 1
    cols = []
    for dy in range(3):
        for dx in range(3):
            cols.append(xp[:, dy:dy + 2 * Ho:2, dx:dx + 2 * Wo:2, :])
    patches = jnp.concatenate(cols, axis=-1).reshape(N * Ho * Wo, 9 * C)
    assert k_pad >= 9 * C
    patches = jnp.pad(patches, ((0, 0), (0, k_pad - 9 * C)))            # K 27 -> 32
    return patches.astype(jnp.bfloat16), (N, Ho, Wo)


# -----------------------------------------------------------------------------
# Parameter construction (deterministic, synthetic; BN folded into conv weights)
# -----------------------------------------------------------------------------
def init_params(key):
    c_stem, c_exp, c_proj, c_head, c_se = 24, 96, 32, 128, 6
    names_shapes = {
        "stem_w": (27, c_stem), "stem_b": (c_stem,),
        "exp_w": (c_stem, c_exp), "exp_b": (c_exp,),
        "dw_w": (3, 3, c_exp), "dw_b": (c_exp,),
        "se1_w": (c_exp, c_se), "se1_b": (c_se,),
        "se2_w": (c_se, c_exp), "se2_b": (c_exp,),
        "proj_w": (c_exp, c_proj), "proj_b": (c_proj,),
        "head_w": (c_proj, c_head), "head_b": (c_head,),
        "cls_w": (c_head, 1000), "cls_b": (1000,),
        "fc1_w": (1000, 512), "fc1_b": (512,),
        "fc2_w": (512, N_CLASSES), "fc2_b": (N_CLASSES,),
    }
    params = {}
    keys = jax.random.split(key, len(names_shapes))
    for k, (name, shape) in zip(keys, names_shapes.items()):
        scale = 0.05 if name.endswith("_w") else 0.01
        params[name] = scale * jax.random.normal(k, shape, dtype=jnp.float32)
    return params


def fold_params(p):
    """One-time init-time algebraic folding + bf16 cast of MXU weights.

    Valid because project->head and cls->fc1 have no activation between them.
    """
    f = {}
    # stem: pad contraction K from 27 to 32 so the patch matmul is aligned
    f["stem_w"] = jnp.pad(p["stem_w"], ((0, 5), (0, 0))).astype(jnp.bfloat16)
    f["stem_b"] = p["stem_b"].reshape(1, -1)
    f["exp_w"] = p["exp_w"].astype(jnp.bfloat16)
    f["exp_b"] = p["exp_b"].reshape(1, -1)
    f["dw_w"] = p["dw_w"]                               # (3,3,C) f32, combined w/ mask at call
    f["dw_b"] = p["dw_b"].reshape(1, -1)
    f["se1_w"] = p["se1_w"].astype(jnp.bfloat16)
    f["se1_b"] = p["se1_b"].reshape(1, -1)
    f["se2_w"] = p["se2_w"].astype(jnp.bfloat16)
    f["se2_b"] = p["se2_b"].reshape(1, -1)
    # fold project (act=none) into head 1x1
    ph_w = p["proj_w"] @ p["head_w"]
    ph_b = p["proj_b"] @ p["head_w"] + p["head_b"]
    f["ph_w"] = ph_w.astype(jnp.bfloat16)
    f["ph_b"] = ph_b.reshape(1, -1)
    # fold cls (128->1000, act=none) into fc1 (1000->512): 1000-wide path disappears
    cf_w = p["cls_w"] @ p["fc1_w"]
    cf_b = p["cls_b"] @ p["fc1_w"] + p["fc1_b"]
    f["cf_w"] = cf_w.astype(jnp.bfloat16)
    f["cf_b"] = cf_b.reshape(1, -1)
    # fc2 padded to 128 output lanes for a lane-dense final store
    fc2_w = jnp.pad(p["fc2_w"], ((0, 0), (0, OUT_PAD - p["fc2_w"].shape[1])))
    fc2_b = jnp.pad(p["fc2_b"], ((0, OUT_PAD - p["fc2_b"].shape[0]),))
    f["fc2_w"] = fc2_w.astype(jnp.bfloat16)
    f["fc2_b"] = fc2_b.reshape(1, -1)
    return f


# -----------------------------------------------------------------------------
# Forward pass: NCHW -> (im2col) -> single fused backbone+classifier kernel
# -----------------------------------------------------------------------------
@jax.jit
def model_classify_forward(x_nchw, fparams):
    x = jnp.transpose(x_nchw, (0, 2, 3, 1)).astype(jnp.float32)         # NCHW -> NHWC
    patches, (N, Ho, Wo) = im2col_3x3_s2(x, k_pad=fparams["stem_w"].shape[0])
    return backbone_classify_fused(patches, fparams, N, Ho, Wo)          # (N, 2)


# -----------------------------------------------------------------------------
if __name__ == "__main__":
    key = jax.random.PRNGKey(0)
    k_x, k_p = jax.random.split(key)
    x = jax.random.normal(k_x, (2, 3, 32, 32), dtype=jnp.float32)        # NCHW input
    params = init_params(k_p)
    fparams = fold_params(params)                                        # folded once, outside jit

    out = model_classify_forward(x, fparams)
    out = jax.block_until_ready(out)
    assert out.shape == (2, N_CLASSES) and out.dtype == jnp.float32
    assert bool(jnp.all(jnp.isfinite(out)))
    print("KERNEL_OK")
</pallas_src>

<mosaic_0001>
module attributes {stable_mosaic.version = 11 : i64} {
  func.func @_fused_kernel(%arg0: i32, %arg1: memref<256x32xbf16, #tpu.memory_space<vmem>>, %arg2: memref<9x256x96xf32, #tpu.memory_space<vmem>>, %arg3: memref<32x24xbf16, #tpu.memory_space<vmem>>, %arg4: memref<1x24xf32, #tpu.memory_space<vmem>>, %arg5: memref<24x96xbf16, #tpu.memory_space<vmem>>, %arg6: memref<1x96xf32, #tpu.memory_space<vmem>>, %arg7: memref<1x96xf32, #tpu.memory_space<vmem>>, %arg8: memref<96x6xbf16, #tpu.memory_space<vmem>>, %arg9: memref<1x6xf32, #tpu.memory_space<vmem>>, %arg10: memref<6x96xbf16, #tpu.memory_space<vmem>>, %arg11: memref<1x96xf32, #tpu.memory_space<vmem>>, %arg12: memref<96x128xbf16, #tpu.memory_space<vmem>>, %arg13: memref<1x128xf32, #tpu.memory_space<vmem>>, %arg14: memref<128x512xbf16, #tpu.memory_space<vmem>>, %arg15: memref<1x512xf32, #tpu.memory_space<vmem>>, %arg16: memref<512x128xbf16, #tpu.memory_space<vmem>>, %arg17: memref<1x128xf32, #tpu.memory_space<vmem>>, %arg18: memref<1x1x128xf32, #tpu.memory_space<vmem>>) attributes {dimension_semantics = [#tpu.dimension_semantics<parallel>], iteration_bounds = array<i64: 2>, scalar_prefetch = 0 : i64, scratch_operands = 0 : i64, tpu.core_type = #tpu.core_type<tc>, window_params = [{transform_indices = @transform_0, window_bounds = array<i64: 256, 32>}, {pipeline_mode = #tpu.pipeline_mode<synchronous>, transform_indices = @transform_1, window_bounds = array<i64: 9, 256, 96>}, {pipeline_mode = #tpu.pipeline_mode<synchronous>, transform_indices = @transform_2, window_bounds = array<i64: 32, 24>}, {pipeline_mode = #tpu.pipeline_mode<synchronous>, transform_indices = @transform_3, window_bounds = array<i64: 1, 24>}, {pipeline_mode = #tpu.pipeline_mode<synchronous>, transform_indices = @transform_4, window_bounds = array<i64: 24, 96>}, {pipeline_mode = #tpu.pipeline_mode<synchronous>, transform_indices = @transform_5, window_bounds = array<i64: 1, 96>}, {pipeline_mode = #tpu.pipeline_mode<synchronous>, transform_indices = @transform_6, window_bounds = array<i64: 1, 96>}, {pipeline_mode = #tpu.pipeline_mode<synchronous>, transform_indices = @transform_7, window_bounds = array<i64: 96, 6>}, {pipeline_mode = #tpu.pipeline_mode<synchronous>, transform_indices = @transform_8, window_bounds = array<i64: 1, 6>}, {pipeline_mode = #tpu.pipeline_mode<synchronous>, transform_indices = @transform_9, window_bounds = array<i64: 6, 96>}, {pipeline_mode = #tpu.pipeline_mode<synchronous>, transform_indices = @transform_10, window_bounds = array<i64: 1, 96>}, {pipeline_mode = #tpu.pipeline_mode<synchronous>, transform_indices = @transform_11, window_bounds = array<i64: 96, 128>}, {pipeline_mode = #tpu.pipeline_mode<synchronous>, transform_indices = @transform_12, window_bounds = array<i64: 1, 128>}, {pipeline_mode = #tpu.pipeline_mode<synchronous>, transform_indices = @transform_13, window_bounds = array<i64: 128, 512>}, {pipeline_mode = #tpu.pipeline_mode<synchronous>, transform_indices = @transform_14, window_bounds = array<i64: 1, 512>}, {pipeline_mode = #tpu.pipeline_mode<synchronous>, transform_indices = @transform_15, window_bounds = array<i64: 512, 128>}, {pipeline_mode = #tpu.pipeline_mode<synchronous>, transform_indices = @transform_16, window_bounds = array<i64: 1, 128>}, {transform_indices = @transform_17, window_bounds = array<i64: 1, 1, 128>}]} {
    %c0 = arith.constant 0 : index
    %c0_0 = arith.constant 0 : index
    %0 = vector.load %arg1[%c0, %c0_0] : memref<256x32xbf16, #tpu.memory_space<vmem>>, vector<256x32xbf16>
    %c0_1 = arith.constant 0 : index
    %c0_2 = arith.constant 0 : index
    %1 = vector.load %arg3[%c0_1, %c0_2] : memref<32x24xbf16, #tpu.memory_space<vmem>>, vector<32x24xbf16>
    %cst = arith.constant dense<0.000000e+00> : vector<256x24xf32>
    %2 = tpu.matmul %0, %1, %cst {dimension_numbers = #tpu.dot_dimension_numbers<[1], [0], [0], [1], [0, 0, 1, 1], [], []>} : vector<256x32xbf16>, vector<32x24xbf16>, vector<256x24xf32> -> vector<256x24xf32>
    %c0_3 = arith.constant 0 : index
    %c0_4 = arith.constant 0 : index
    %3 = vector.load %arg4[%c0_3, %c0_4] : memref<1x24xf32, #tpu.memory_space<vmem>>, vector<1x24xf32>
    %4 = vector.broadcast %3 : vector<1x24xf32> to vector<256x24xf32>
    %5 = arith.addf %2, %4 : vector<256x24xf32>
    %cst_5 = arith.constant 0.000000e+00 : f32
    %6 = vector.broadcast %cst_5 : f32 to vector<256x24xf32>
    %7 = arith.subf %6, %5 : vector<256x24xf32>
    %8 = math.exp %7 : vector<256x24xf32>
    %cst_6 = arith.constant 1.000000e+00 : f32
    %9 = vector.broadcast %cst_6 : f32 to vector<256x24xf32>
    %10 = arith.addf %9, %8 : vector<256x24xf32>
    %cst_7 = arith.constant 1.000000e+00 : f32
    %11 = vector.broadcast %cst_7 : f32 to vector<256x24xf32>
    %12 = arith.divf %11, %10 : vector<256x24xf32>
    %13 = arith.mulf %5, %12 : vector<256x24xf32>
    %14 = arith.truncf %13 : vector<256x24xf32> to vector<256x24xbf16>
    %c0_8 = arith.constant 0 : index
    %c0_9 = arith.constant 0 : index
    %15 = vector.load %arg5[%c0_8, %c0_9] : memref<24x96xbf16, #tpu.memory_space<vmem>>, vector<24x96xbf16>
    %cst_10 = arith.constant dense<0.000000e+00> : vector<256x96xf32>
    %16 = tpu.matmul %14, %15, %cst_10 {dimension_numbers = #tpu.dot_dimension_numbers<[1], [0], [0], [1], [0, 0, 1, 1], [], []>} : vector<256x24xbf16>, vector<24x96xbf16>, vector<256x96xf32> -> vector<256x96xf32>
    %c0_11 = arith.constant 0 : index
    %c0_12 = arith.constant 0 : index
    %17 = vector.load %arg6[%c0_11, %c0_12] : memref<1x96xf32, #tpu.memory_space<vmem>>, vector<1x96xf32>
    %18 = vector.broadcast %17 : vector<1x96xf32> to vector<256x96xf32>
    %19 = arith.addf %16, %18 : vector<256x96xf32>
    %cst_13 = arith.constant 0.000000e+00 : f32
    %20 = vector.broadcast %cst_13 : f32 to vector<256x96xf32>
    %21 = arith.subf %20, %19 : vector<256x96xf32>
    %22 = math.exp %21 : vector<256x96xf32>
    %cst_14 = arith.constant 1.000000e+00 : f32
    %23 = vector.broadcast %cst_14 : f32 to vector<256x96xf32>
    %24 = arith.addf %23, %22 : vector<256x96xf32>
    %cst_15 = arith.constant 1.000000e+00 : f32
    %25 = vector.broadcast %cst_15 : f32 to vector<256x96xf32>
    %26 = arith.divf %25, %24 : vector<256x96xf32>
    %27 = arith.mulf %19, %26 : vector<256x96xf32>
    %cst_16 = arith.constant 0.000000e+00 : f32
    %28 = vector.broadcast %cst_16 : f32 to vector<256x96xf32>
    %c17_i32 = arith.constant 17 : i32
    %29 = tpu.dynamic_rotate %27 by %c17_i32 dim 0 : vector<256x96xf32>, i32 -> vector<256x96xf32>
    %c0_17 = arith.constant 0 : index
    %c0_18 = arith.constant 0 : index
    %c0_19 = arith.constant 0 : index
    %30 = vector.load %arg2[%c0_17, %c0_18, %c0_19] : memref<9x256x96xf32, #tpu.memory_space<vmem>>, vector<1x256x96xf32>
    %31 = vector.shape_cast %30 : vector<1x256x96xf32> to vector<256x96xf32>
    %32 = arith.mulf %29, %31 : vector<256x96xf32>
    %33 = arith.addf %28, %32 : vector<256x96xf32>
    %c16_i32 = arith.constant 16 : i32
    %34 = tpu.dynamic_rotate %27 by %c16_i32 dim 0 : vector<256x96xf32>, i32 -> vector<256x96xf32>
    %c1 = arith.constant 1 : index
    %c0_20 = arith.constant 0 : index
    %c0_21 = arith.constant 0 : index
    %35 = vector.load %arg2[%c1, %c0_20, %c0_21] : memref<9x256x96xf32, #tpu.memory_space<vmem>>, vector<1x256x96xf32>
    %36 = vector.shape_cast %35 : vector<1x256x96xf32> to vector<256x96xf32>
    %37 = arith.mulf %34, %36 : vector<256x96xf32>
    %38 = arith.addf %33, %37 : vector<256x96xf32>
    %c15_i32 = arith.constant 15 : i32
    %39 = tpu.dynamic_rotate %27 by %c15_i32 dim 0 : vector<256x96xf32>, i32 -> vector<256x96xf32>
    %c2 = arith.constant 2 : index
    %c0_22 = arith.constant 0 : index
    %c0_23 = arith.constant 0 : index
    %40 = vector.load %arg2[%c2, %c0_22, %c0_23] : memref<9x256x96xf32, #tpu.memory_space<vmem>>, vector<1x256x96xf32>
    %41 = vector.shape_cast %40 : vector<1x256x96xf32> to vector<256x96xf32>
    %42 = arith.mulf %39, %41 : vector<256x96xf32>
    %43 = arith.addf %38, %42 : vector<256x96xf32>
    %c1_i32 = arith.constant 1 : i32
    %44 = tpu.dynamic_rotate %27 by %c1_i32 dim 0 : vector<256x96xf32>, i32 -> vector<256x96xf32>
    %c3 = arith.constant 3 : index
    %c0_24 = arith.constant 0 : index
    %c0_25 = arith.constant 0 : index
    %45 = vector.load %arg2[%c3, %c0_24, %c0_25] : memref<9x256x96xf32, #tpu.memory_space<vmem>>, vector<1x256x96xf32>
    %46 = vector.shape_cast %45 : vector<1x256x96xf32> to vector<256x96xf32>
    %47 = arith.mulf %44, %46 : vector<256x96xf32>
    %48 = arith.addf %43, %47 : vector<256x96xf32>
    %c4 = arith.constant 4 : index
    %c0_26 = arith.constant 0 : index
    %c0_27 = arith.constant 0 : index
    %49 = vector.load %arg2[%c4, %c0_26, %c0_27] : memref<9x256x96xf32, #tpu.memory_space<vmem>>, vector<1x256x96xf32>
    %50 = vector.shape_cast %49 : vector<1x256x96xf32> to vector<256x96xf32>
    %51 = arith.mulf %27, %50 : vector<256x96xf32>
    %52 = arith.addf %48, %51 : vector<256x96xf32>
    %c255_i32 = arith.constant 255 : i32
    %53 = tpu.dynamic_rotate %27 by %c255_i32 dim 0 : vector<256x96xf32>, i32 -> vector<256x96xf32>
    %c5 = arith.constant 5 : index
    %c0_28 = arith.constant 0 : index
    %c0_29 = arith.constant 0 : index
    %54 = vector.load %arg2[%c5, %c0_28, %c0_29] : memref<9x256x96xf32, #tpu.memory_space<vmem>>, vector<1x256x96xf32>
    %55 = vector.shape_cast %54 : vector<1x256x96xf32> to vector<256x96xf32>
    %56 = arith.mulf %53, %55 : vector<256x96xf32>
    %57 = arith.addf %52, %56 : vector<256x96xf32>
    %c241_i32 = arith.constant 241 : i32
    %58 = tpu.dynamic_rotate %27 by %c241_i32 dim 0 : vector<256x96xf32>, i32 -> vector<256x96xf32>
    %c6 = arith.constant 6 : index
    %c0_30 = arith.constant 0 : index
    %c0_31 = arith.constant 0 : index
    %59 = vector.load %arg2[%c6, %c0_30, %c0_31] : memref<9x256x96xf32, #tpu.memory_space<vmem>>, vector<1x256x96xf32>
    %60 = vector.shape_cast %59 : vector<1x256x96xf32> to vector<256x96xf32>
    %61 = arith.mulf %58, %60 : vector<256x96xf32>
    %62 = arith.addf %57, %61 : vector<256x96xf32>
    %c240_i32 = arith.constant 240 : i32
    %63 = tpu.dynamic_rotate %27 by %c240_i32 dim 0 : vector<256x96xf32>, i32 -> vector<256x96xf32>
    %c7 = arith.constant 7 : index
    %c0_32 = arith.constant 0 : index
    %c0_33 = arith.constant 0 : index
    %64 = vector.load %arg2[%c7, %c0_32, %c0_33] : memref<9x256x96xf32, #tpu.memory_space<vmem>>, vector<1x256x96xf32>
    %65 = vector.shape_cast %64 : vector<1x256x96xf32> to vector<256x96xf32>
    %66 = arith.mulf %63, %65 : vector<256x96xf32>
    %67 = arith.addf %62, %66 : vector<256x96xf32>
    %c239_i32 = arith.constant 239 : i32
    %68 = tpu.dynamic_rotate %27 by %c239_i32 dim 0 : vector<256x96xf32>, i32 -> vector<256x96xf32>
    %c8 = arith.constant 8 : index
    %c0_34 = arith.constant 0 : index
    %c0_35 = arith.constant 0 : index
    %69 = vector.load %arg2[%c8, %c0_34, %c0_35] : memref<9x256x96xf32, #tpu.memory_space<vmem>>, vector<1x256x96xf32>
    %70 = vector.shape_cast %69 : vector<1x256x96xf32> to vector<256x96xf32>
    %71 = arith.mulf %68, %70 : vector<256x96xf32>
    %72 = arith.addf %67, %71 : vector<256x96xf32>
    %c0_36 = arith.constant 0 : index
    %c0_37 = arith.constant 0 : index
    %73 = vector.load %arg7[%c0_36, %c0_37] : memref<1x96xf32, #tpu.memory_space<vmem>>, vector<1x96xf32>
    %74 = vector.broadcast %73 : vector<1x96xf32> to vector<256x96xf32>
    %75 = arith.addf %72, %74 : vector<256x96xf32>
    %cst_38 = arith.constant 0.000000e+00 : f32
    %76 = vector.broadcast %cst_38 : f32 to vector<256x96xf32>
    %77 = arith.subf %76, %75 : vector<256x96xf32>
    %78 = math.exp %77 : vector<256x96xf32>
    %cst_39 = arith.constant 1.000000e+00 : f32
    %79 = vector.broadcast %cst_39 : f32 to vector<256x96xf32>
    %80 = arith.addf %79, %78 : vector<256x96xf32>
    %cst_40 = arith.constant 1.000000e+00 : f32
    %81 = vector.broadcast %cst_40 : f32 to vector<256x96xf32>
    %82 = arith.divf %81, %80 : vector<256x96xf32>
    %83 = arith.mulf %75, %82 : vector<256x96xf32>
    %cst_41 = arith.constant dense<0.000000e+00> : vector<96xf32>
    %84 = vector.multi_reduction <add>, %83, %cst_41 [0] : vector<256x96xf32> to vector<96xf32>
    %85 = vector.shape_cast %84 : vector<96xf32> to vector<1x96xf32>
    %cst_42 = arith.constant 2.560000e+02 : f32
    %86 = vector.broadcast %cst_42 : f32 to vector<1x96xf32>
    %87 = arith.divf %85, %86 : vector<1x96xf32>
    %88 = arith.truncf %87 : vector<1x96xf32> to vector<1x96xbf16>
    %c0_43 = arith.constant 0 : index
    %c0_44 = arith.constant 0 : index
    %89 = vector.load %arg8[%c0_43, %c0_44] : memref<96x6xbf16, #tpu.memory_space<vmem>>, vector<96x6xbf16>
    %cst_45 = arith.constant dense<0.000000e+00> : vector<1x6xf32>
    %90 = tpu.matmul %88, %89, %cst_45 {dimension_numbers = #tpu.dot_dimension_numbers<[1], [0], [0], [1], [0, 0, 1, 1], [], []>} : vector<1x96xbf16>, vector<96x6xbf16>, vector<1x6xf32> -> vector<1x6xf32>
    %c0_46 = arith.constant 0 : index
    %c0_47 = arith.constant 0 : index
    %91 = vector.load %arg9[%c0_46, %c0_47] : memref<1x6xf32, #tpu.memory_space<vmem>>, vector<1x6xf32>
    %92 = arith.addf %90, %91 : vector<1x6xf32>
    %cst_48 = arith.constant 0.000000e+00 : f32
    %93 = vector.broadcast %cst_48 : f32 to vector<1x6xf32>
    %94 = arith.subf %93, %92 : vector<1x6xf32>
    %95 = math.exp %94 : vector<1x6xf32>
    %cst_49 = arith.constant 1.000000e+00 : f32
    %96 = vector.broadcast %cst_49 : f32 to vector<1x6xf32>
    %97 = arith.addf %96, %95 : vector<1x6xf32>
    %cst_50 = arith.constant 1.000000e+00 : f32
    %98 = vector.broadcast %cst_50 : f32 to vector<1x6xf32>
    %99 = arith.divf %98, %97 : vector<1x6xf32>
    %100 = arith.mulf %92, %99 : vector<1x6xf32>
    %101 = arith.truncf %100 : vector<1x6xf32> to vector<1x6xbf16>
    %c0_51 = arith.constant 0 : index
    %c0_52 = arith.constant 0 : index
    %102 = vector.load %arg10[%c0_51, %c0_52] : memref<6x96xbf16, #tpu.memory_space<vmem>>, vector<6x96xbf16>
    %cst_53 = arith.constant dense<0.000000e+00> : vector<1x96xf32>
    %103 = tpu.matmul %101, %102, %cst_53 {dimension_numbers = #tpu.dot_dimension_numbers<[1], [0], [0], [1], [0, 0, 1, 1], [], []>} : vector<1x6xbf16>, vector<6x96xbf16>, vector<1x96xf32> -> vector<1x96xf32>
    %c0_54 = arith.constant 0 : index
    %c0_55 = arith.constant 0 : index
    %104 = vector.load %arg11[%c0_54, %c0_55] : memref<1x96xf32, #tpu.memory_space<vmem>>, vector<1x96xf32>
    %105 = arith.addf %103, %104 : vector<1x96xf32>
    %cst_56 = arith.constant 0.000000e+00 : f32
    %106 = vector.broadcast %cst_56 : f32 to vector<1x96xf32>
    %107 = arith.subf %106, %105 : vector<1x96xf32>
    %108 = math.exp %107 : vector<1x96xf32>
    %cst_57 = arith.constant 1.000000e+00 : f32
    %109 = vector.broadcast %cst_57 : f32 to vector<1x96xf32>
    %110 = arith.addf %109, %108 : vector<1x96xf32>
    %cst_58 = arith.constant 1.000000e+00 : f32
    %111 = vector.broadcast %cst_58 : f32 to vector<1x96xf32>
    %112 = arith.divf %111, %110 : vector<1x96xf32>
    %113 = vector.broadcast %112 : vector<1x96xf32> to vector<256x96xf32>
    %114 = arith.mulf %83, %113 : vector<256x96xf32>
    %115 = arith.truncf %114 : vector<256x96xf32> to vector<256x96xbf16>
    %c0_59 = arith.constant 0 : index
    %c0_60 = arith.constant 0 : index
    %116 = vector.load %arg12[%c0_59, %c0_60] : memref<96x128xbf16, #tpu.memory_space<vmem>>, vector<96x128xbf16>
    %cst_61 = arith.constant dense<0.000000e+00> : vector<256x128xf32>
    %117 = tpu.matmul %115, %116, %cst_61 {dimension_numbers = #tpu.dot_dimension_numbers<[1], [0], [0], [1], [0, 0, 1, 1], [], []>} : vector<256x96xbf16>, vector<96x128xbf16>, vector<256x128xf32> -> vector<256x128xf32>
    %c0_62 = arith.constant 0 : index
    %c0_63 = arith.constant 0 : index
    %118 = vector.load %arg13[%c0_62, %c0_63] : memref<1x128xf32, #tpu.memory_space<vmem>>, vector<1x128xf32>
    %119 = vector.broadcast %118 : vector<1x128xf32> to vector<256x128xf32>
    %120 = arith.addf %117, %119 : vector<256x128xf32>
    %cst_64 = arith.constant 0.000000e+00 : f32
    %121 = vector.broadcast %cst_64 : f32 to vector<256x128xf32>
    %122 = arith.subf %121, %120 : vector<256x128xf32>
    %123 = math.exp %122 : vector<256x128xf32>
    %cst_65 = arith.constant 1.000000e+00 : f32
    %124 = vector.broadcast %cst_65 : f32 to vector<256x128xf32>
    %125 = arith.addf %124, %123 : vector<256x128xf32>
    %cst_66 = arith.constant 1.000000e+00 : f32
    %126 = vector.broadcast %cst_66 : f32 to vector<256x128xf32>
    %127 = arith.divf %126, %125 : vector<256x128xf32>
    %128 = arith.mulf %120, %127 : vector<256x128xf32>
    %cst_67 = arith.constant dense<0.000000e+00> : vector<128xf32>
    %129 = vector.multi_reduction <add>, %128, %cst_67 [0] : vector<256x128xf32> to vector<128xf32>
    %130 = vector.shape_cast %129 : vector<128xf32> to vector<1x128xf32>
    %cst_68 = arith.constant 2.560000e+02 : f32
    %131 = vector.broadcast %cst_68 : f32 to vector<1x128xf32>
    %132 = arith.divf %130, %131 : vector<1x128xf32>
    %133 = arith.truncf %132 : vector<1x128xf32> to vector<1x128xbf16>
    %c0_69 = arith.constant 0 : index
    %c0_70 = arith.constant 0 : index
    %134 = vector.load %arg14[%c0_69, %c0_70] : memref<128x512xbf16, #tpu.memory_space<vmem>>, vector<128x512xbf16>
    %cst_71 = arith.constant dense<0.000000e+00> : vector<1x512xf32>
    %135 = tpu.matmul %133, %134, %cst_71 {dimension_numbers = #tpu.dot_dimension_numbers<[1], [0], [0], [1], [0, 0, 1, 1], [], []>} : vector<1x128xbf16>, vector<128x512xbf16>, vector<1x512xf32> -> vector<1x512xf32>
    %c0_72 = arith.constant 0 : index
    %c0_73 = arith.constant 0 : index
    %136 = vector.load %arg15[%c0_72, %c0_73] : memref<1x512xf32, #tpu.memory_space<vmem>>, vector<1x512xf32>
    %137 = arith.addf %135, %136 : vector<1x512xf32>
    %cst_74 = arith.constant 0.000000e+00 : f32
    %138 = vector.broadcast %cst_74 : f32 to vector<1x512xf32>
    %139 = arith.maximumf %137, %138 : vector<1x512xf32>
    %140 = math.absf %137 : vector<1x512xf32>
    %cst_75 = arith.constant 0.000000e+00 : f32
    %141 = vector.broadcast %cst_75 : f32 to vector<1x512xf32>
    %142 = arith.subf %141, %140 : vector<1x512xf32>
    %143 = math.exp %142 : vector<1x512xf32>
    %144 = math.log1p %143 : vector<1x512xf32>
    %145 = arith.addf %139, %144 : vector<1x512xf32>
    %146 = math.tanh %145 : vector<1x512xf32>
    %147 = arith.mulf %137, %146 : vector<1x512xf32>
    %148 = arith.truncf %147 : vector<1x512xf32> to vector<1x512xbf16>
    %c0_76 = arith.constant 0 : index
    %c0_77 = arith.constant 0 : index
    %149 = vector.load %arg16[%c0_76, %c0_77] : memref<512x128xbf16, #tpu.memory_space<vmem>>, vector<512x128xbf16>
    %cst_78 = arith.constant dense<0.000000e+00> : vector<1x128xf32>
    %150 = tpu.matmul %148, %149, %cst_78 {dimension_numbers = #tpu.dot_dimension_numbers<[1], [0], [0], [1], [0, 0, 1, 1], [], []>} : vector<1x512xbf16>, vector<512x128xbf16>, vector<1x128xf32> -> vector<1x128xf32>
    %c0_79 = arith.constant 0 : index
    %c0_80 = arith.constant 0 : index
    %151 = vector.load %arg17[%c0_79, %c0_80] : memref<1x128xf32, #tpu.memory_space<vmem>>, vector<1x128xf32>
    %152 = arith.addf %150, %151 : vector<1x128xf32>
    %153 = vector.shape_cast %152 : vector<1x128xf32> to vector<1x1x128xf32>
    %c0_81 = arith.constant 0 : index
    %c0_82 = arith.constant 0 : index
    %c0_83 = arith.constant 0 : index
    %154 = vector.load %arg18[%c0_81, %c0_82, %c0_83] : memref<1x1x128xf32, #tpu.memory_space<vmem>>, vector<1x1x128xf32>
    tpu.vector_store %arg18[%c0_81, %c0_82, %c0_83], %153 {strides = array<i32>} : memref<1x1x128xf32, #tpu.memory_space<vmem>>, vector<1x1x128xf32>,
    return
  }
  func.func @transform_0(%arg0: i32) -> (i32, i32) {
    %c0_i32 = arith.constant 0 : i32
    %c0_i32_0 = arith.constant 0 : i32
    return %arg0, %c0_i32 : i32, i32
  }
  func.func @transform_1(%arg0: i32) -> (i32, i32, i32) {
    %c0_i32 = arith.constant 0 : i32
    %c0_i32_0 = arith.constant 0 : i32
    %c0_i32_1 = arith.constant 0 : i32
    %c0_i32_2 = arith.constant 0 : i32
    return %c0_i32, %c0_i32_0, %c0_i32_1 : i32, i32, i32
  }
  func.func @transform_2(%arg0: i32) -> (i32, i32) {
    %c0_i32 = arith.constant 0 : i32
    %c0_i32_0 = arith.constant 0 : i32
    %c0_i32_1 = arith.constant 0 : i32
    return %c0_i32, %c0_i32_0 : i32, i32
  }
  func.func @transform_3(%arg0: i32) -> (i32, i32) {
    %c0_i32 = arith.constant 0 : i32
    %c0_i32_0 = arith.constant 0 : i32
    %c0_i32_1 = arith.constant 0 : i32
    return %c0_i32, %c0_i32_0 : i32, i32
  }
  func.func @transform_4(%arg0: i32) -> (i32, i32) {
    %c0_i32 = arith.constant 0 : i32
    %c0_i32_0 = arith.constant 0 : i32
    %c0_i32_1 = arith.constant 0 : i32
    return %c0_i32, %c0_i32_0 : i32, i32
  }
  func.func @transform_5(%arg0: i32) -> (i32, i32) {
    %c0_i32 = arith.constant 0 : i32
    %c0_i32_0 = arith.constant 0 : i32
    %c0_i32_1 = arith.constant 0 : i32
    return %c0_i32, %c0_i32_0 : i32, i32
  }
  func.func @transform_6(%arg0: i32) -> (i32, i32) {
    %c0_i32 = arith.constant 0 : i32
    %c0_i32_0 = arith.constant 0 : i32
    %c0_i32_1 = arith.constant 0 : i32
    return %c0_i32, %c0_i32_0 : i32, i32
  }
  func.func @transform_7(%arg0: i32) -> (i32, i32) {
    %c0_i32 = arith.constant 0 : i32
    %c0_i32_0 = arith.constant 0 : i32
    %c0_i32_1 = arith.constant 0 : i32
    return %c0_i32, %c0_i32_0 : i32, i32
  }
  func.func @transform_8(%arg0: i32) -> (i32, i32) {
    %c0_i32 = arith.constant 0 : i32
    %c0_i32_0 = arith.constant 0 : i32
    %c0_i32_1 = arith.constant 0 : i32
    return %c0_i32, %c0_i32_0 : i32, i32
  }
  func.func @transform_9(%arg0: i32) -> (i32, i32) {
    %c0_i32 = arith.constant 0 : i32
    %c0_i32_0 = arith.constant 0 : i32
    %c0_i32_1 = arith.constant 0 : i32
    return %c0_i32, %c0_i32_0 : i32, i32
  }
  func.func @transform_10(%arg0: i32) -> (i32, i32) {
    %c0_i32 = arith.constant 0 : i32
    %c0_i32_0 = arith.constant 0 : i32
    %c0_i32_1 = arith.constant 0 : i32
    return %c0_i32, %c0_i32_0 : i32, i32
  }
  func.func @transform_11(%arg0: i32) -> (i32, i32) {
    %c0_i32 = arith.constant 0 : i32
    %c0_i32_0 = arith.constant 0 : i32
    %c0_i32_1 = arith.constant 0 : i32
    return %c0_i32, %c0_i32_0 : i32, i32
  }
  func.func @transform_12(%arg0: i32) -> (i32, i32) {
    %c0_i32 = arith.constant 0 : i32
    %c0_i32_0 = arith.constant 0 : i32
    %c0_i32_1 = arith.constant 0 : i32
    return %c0_i32, %c0_i32_0 : i32, i32
  }
  func.func @transform_13(%arg0: i32) -> (i32, i32) {
    %c0_i32 = arith.constant 0 : i32
    %c0_i32_0 = arith.constant 0 : i32
    %c0_i32_1 = arith.constant 0 : i32
    return %c0_i32, %c0_i32_0 : i32, i32
  }
  func.func @transform_14(%arg0: i32) -> (i32, i32) {
    %c0_i32 = arith.constant 0 : i32
    %c0_i32_0 = arith.constant 0 : i32
    %c0_i32_1 = arith.constant 0 : i32
    return %c0_i32, %c0_i32_0 : i32, i32
  }
  func.func @transform_15(%arg0: i32) -> (i32, i32) {
    %c0_i32 = arith.constant 0 : i32
    %c0_i32_0 = arith.constant 0 : i32
    %c0_i32_1 = arith.constant 0 : i32
    return %c0_i32, %c0_i32_0 : i32, i32
  }
  func.func @transform_16(%arg0: i32) -> (i32, i32) {
    %c0_i32 = arith.constant 0 : i32
    %c0_i32_0 = arith.constant 0 : i32
    %c0_i32_1 = arith.constant 0 : i32
    return %c0_i32, %c0_i32_0 : i32, i32
  }
  func.func @transform_17(%arg0: i32) -> (i32, i32, i32) {
    %c0_i32 = arith.constant 0 : i32
    %c0_i32_0 = arith.constant 0 : i32
    %c0_i32_1 = arith.constant 0 : i32
    return %arg0, %c0_i32, %c0_i32_0 : i32, i32, i32
  }
}

</mosaic_0001>

<llo_original>
// kernel: model_classify_forward.1
$region0: #{model_classify_forward.1}
  #allocation0 [shape = 'u32[]', space=smem, size = 0x4, offset = 0x4, fixed_abs, tag = 'smem constant byte address 0x4 - core index']
  #allocation1 [shape = 'u32[144,128]{1,0:T(1,128)}', space=vmem, size = 0x12000, scoped, tag = 'internal scratch']
  %s0 = inlined_call_operand.vmem [shape: bf16[512,32], index: 0, kind: input, shape index: {}]
  %s1 = inlined_call_operand.vmem [shape: f32[9,256,96], index: 1, kind: input, shape index: {}]
  %s2 = inlined_call_operand.vmem [shape: bf16[32,24], index: 2, kind: input, shape index: {}]
  %s3 = inlined_call_operand.vmem [shape: f32[1,24], index: 3, kind: input, shape index: {}]
  %s4 = inlined_call_operand.vmem [shape: bf16[24,96], index: 4, kind: input, shape index: {}]
  %s5 = inlined_call_operand.vmem [shape: f32[1,96], index: 5, kind: input, shape index: {}]
  %s6 = inlined_call_operand.vmem [shape: f32[1,96], index: 6, kind: input, shape index: {}]
  %s7 = inlined_call_operand.vmem [shape: bf16[96,6], index: 7, kind: input, shape index: {}]
  %s8 = inlined_call_operand.vmem [shape: f32[1,6], index: 8, kind: input, shape index: {}]
  %s9 = inlined_call_operand.vmem [shape: bf16[6,96], index: 9, kind: input, shape index: {}]
  %s10 = inlined_call_operand.vmem [shape: f32[1,96], index: 10, kind: input, shape index: {}]
  %s11 = inlined_call_operand.vmem [shape: bf16[96,128], index: 11, kind: input, shape index: {}]
  %s12 = inlined_call_operand.vmem [shape: f32[1,128], index: 12, kind: input, shape index: {}]
  %s13 = inlined_call_operand.vmem [shape: bf16[128,512], index: 13, kind: input, shape index: {}]
  %s14 = inlined_call_operand.vmem [shape: f32[1,512], index: 14, kind: input, shape index: {}]
  %s15 = inlined_call_operand.vmem [shape: bf16[512,128], index: 15, kind: input, shape index: {}]
  %s16 = inlined_call_operand.vmem [shape: f32[1,128], index: 16, kind: input, shape index: {}]
  %s17 = inlined_call_operand.hbm [shape: f32[2,1,128], index: 17, kind: output, shape index: {}]
  %s18 = sld [smem:[#allocation0]]
  $region101: #{model_classify_forward.1} parent=0
    _
  %s20 = ssub.s32 1, %s18
  %s21 = scalar_select 0, %s20, %s18
  $region1: #{model_classify_forward.1} parent=0
    #allocation2 [shape = 'u8[1024]{0}', space=vmem, size = 0x400, scoped, tag = 'output window, operand 0']
    #allocation3 [shape = 's32[2]{0}', space=sflag, size = 0x8, scoped, tag = 'scoped memory for model_classify_forward.1']
    %22 = vsyncpa [#allocation3], 0
    %s23 = scalar_lea.sflag [#allocation3], 1
    %24 = vsyncpa %s23, 0
    loop: start=0, step=1, limit=4
    $region2: #{model_classify_forward.1} parent=1 // loop_pre_header
      _
    $region3: #{model_classify_forward.1} parent=1 // loop_header
      %s26 = sphi 0, %s30
      %p27 = scmp.ge.s32.totalorder %s26, 4
      %s36 = sphi 0, %s38
      %s39 = sphi 0, %s36
      %s40 = sphi 0, %s39
      %s56 = sphi 0, %s40
      %s60 = sphi 0, %s60
      %s62 = sphi 0, %s60
      %s63 = sphi 0, %s62
      %s77 = sphi 0, %s63
      %s81 = sphi 0, %s81
      %s83 = sphi 0, %s81
      %s84 = sphi 0, %s83
      %s98 = sphi 0, %s84
      %s102 = sphi 0, %s102
      %s104 = sphi 0, %s102
      %s105 = sphi 0, %s104
      %s119 = sphi 0, %s105
      %s123 = sphi 0, %s123
      %s125 = sphi 0, %s123
      %s126 = sphi 0, %s125
      %s140 = sphi 0, %s126
      %s144 = sphi 0, %s144
      %s146 = sphi 0, %s144
      %s147 = sphi 0, %s146
      %s161 = sphi 0, %s147
      %s165 = sphi 0, %s165
      %s167 = sphi 0, %s165
      %s168 = sphi 0, %s167
      %s182 = sphi 0, %s168
      %s186 = sphi 0, %s186
      %s188 = sphi 0, %s186
      %s189 = sphi 0, %s188
      %s203 = sphi 0, %s189
      %s207 = sphi 0, %s207
      %s209 = sphi 0, %s207
      %s210 = sphi 0, %s209
      %s224 = sphi 0, %s210
      %s228 = sphi 0, %s228
      %s230 = sphi 0, %s228
      %s231 = sphi 0, %s230
      %s245 = sphi 0, %s231
      %s249 = sphi 0, %s249
      %s251 = sphi 0, %s249
      %s252 = sphi 0, %s251
      %s266 = sphi 0, %s252
      %s270 = sphi 0, %s270
      %s272 = sphi 0, %s270
      %s273 = sphi 0, %s272
      %s287 = sphi 0, %s273
      %s291 = sphi 0, %s291
      %s293 = sphi 0, %s291
      %s294 = sphi 0, %s293
      %s308 = sphi 0, %s294
      %s312 = sphi 0, %s312
      %s314 = sphi 0, %s312
      %s315 = sphi 0, %s314
      %s329 = sphi 0, %s315
      %s333 = sphi 0, %s333
      %s335 = sphi 0, %s333
      %s336 = sphi 0, %s335
      %s350 = sphi 0, %s336
      %s354 = sphi 0, %s354
      %s356 = sphi 0, %s354
      %s357 = sphi 0, %s356
      %s371 = sphi 0, %s357
      %s375 = sphi 0, %s375
      %s377 = sphi 0, %s375
      %s378 = sphi 0, %s377
      %s392 = sphi 0, %s378
      %s398 = sphi 0, %s400
      %s401 = sphi 0, %s398
      %s402 = sphi 0, %s401
      %s418 = sphi 0, %s402
    $region4: #{model_classify_forward.1} parent=1 // loop_header_branch
      %29 = sbr.rel (%p27) target = $region8
    $region5: #{model_classify_forward.1} parent=1 // loop_body
      %s31 = ssub.s32 %s26, 1
      %s32 = ssub.s32 %s26, 2
      %s33 = sadd.s32 %s26, 1
      %s34 = ssub.s32 %s26, %s33
      %p35 = scmp.eq.s32.totalorder %s34, 0
      %s37 = sadd.s32 %s36, 1
      %s38 = scalar_select %p35, %s36, %s37
      %p41 = pneg %p35
      %p42 = scmp.eq.s32.totalorder %s26, 1
      %p43 = por %p41, %p42
      %p44 = scmp.ne.s32.totalorder %s36, %s39
      %p45 = scmp.eq.s32.totalorder %s26, 0
      %p46 = por %p44, %p45
      %p47 = scmp.ne.s32.totalorder %s36, %s39
      %p48 = scmp.eq.s32.totalorder %s31, 1
      %p49 = por %p47, %p48
      %p50 = scmp.ne.s32.totalorder %s39, %s40
      %p51 = scmp.eq.s32.totalorder %s31, 0
      %p52 = por %p50, %p51
      %p53 = scmp.ne.s32.totalorder %s39, %s40
      %p54 = scmp.eq.s32.totalorder %s32, 1
      %p55 = por %p53, %p54
      %p57 = scmp.ne.s32.totalorder %s40, %s56
      %p58 = scmp.eq.s32.totalorder %s32, 0
      %p59 = por %p57, %p58
      %s61 = sadd.s32 %s60, 1
      %p64 = scmp.eq.s32.totalorder %s26, 1
      %p65 = scmp.ne.s32.totalorder %s60, %s62
      %p66 = scmp.eq.s32.totalorder %s26, 0
      %p67 = por %p65, %p66
      %p68 = scmp.ne.s32.totalorder %s60, %s62
      %p69 = scmp.eq.s32.totalorder %s31, 1
      %p70 = por %p68, %p69
      %p71 = scmp.ne.s32.totalorder %s62, %s63
      %p72 = scmp.eq.s32.totalorder %s31, 0
      %p73 = por %p71, %p72
      %p74 = scmp.ne.s32.totalorder %s62, %s63
      %p75 = scmp.eq.s32.totalorder %s32, 1
      %p76 = por %p74, %p75
      %p78 = scmp.ne.s32.totalorder %s63, %s77
      %p79 = scmp.eq.s32.totalorder %s32, 0
      %p80 = por %p78, %p79
      %s82 = sadd.s32 %s81, 1
      %p85 = scmp.eq.s32.totalorder %s26, 1
      %p86 = scmp.ne.s32.totalorder %s81, %s83
      %p87 = scmp.eq.s32.totalorder %s26, 0
      %p88 = por %p86, %p87
      %p89 = scmp.ne.s32.totalorder %s81, %s83
      %p90 = scmp.eq.s32.totalorder %s31, 1
      %p91 = por %p89, %p90
      %p92 = scmp.ne.s32.totalorder %s83, %s84
      %p93 = scmp.eq.s32.totalorder %s31, 0
      %p94 = por %p92, %p93
      %p95 = scmp.ne.s32.totalorder %s83, %s84
      %p96 = scmp.eq.s32.totalorder %s32, 1
      %p97 = por %p95, %p96
      %p99 = scmp.ne.s32.totalorder %s84, %s98
      %p100 = scmp.eq.s32.totalorder %s32, 0
      %p101 = por %p99, %p100
      %s103 = sadd.s32 %s102, 1
      %p106 = scmp.eq.s32.totalorder %s26, 1
      %p107 = scmp.ne.s32.totalorder %s102, %s104
      %p108 = scmp.eq.s32.totalorder %s26, 0
      %p109 = por %p107, %p108
      %p110 = scmp.ne.s32.totalorder %s102, %s104
      %p111 = scmp.eq.s32.totalorder %s31, 1
      %p112 = por %p110, %p111
      %p113 = scmp.ne.s32.totalorder %s104, %s105
      %p114 = scmp.eq.s32.totalorder %s31, 0
      %p115 = por %p113, %p114
      %p116 = scmp.ne.s32.totalorder %s104, %s105
      %p117 = scmp.eq.s32.totalorder %s32, 1
      %p118 = por %p116, %p117
      %p120 = scmp.ne.s32.totalorder %s105, %s119
      %p121 = scmp.eq.s32.totalorder %s32, 0
      %p122 = por %p120, %p121
      %s124 = sadd.s32 %s123, 1
      %p127 = scmp.eq.s32.totalorder %s26, 1
      %p128 = scmp.ne.s32.totalorder %s123, %s125
      %p129 = scmp.eq.s32.totalorder %s26, 0
      %p130 = por %p128, %p129
      %p131 = scmp.ne.s32.totalorder %s123, %s125
      %p132 = scmp.eq.s32.totalorder %s31, 1
      %p133 = por %p131, %p132
      %p134 = scmp.ne.s32.totalorder %s125, %s126
      %p135 = scmp.eq.s32.totalorder %s31, 0
      %p136 = por %p134, %p135
      %p137 = scmp.ne.s32.totalorder %s125, %s126
      %p138 = scmp.eq.s32.totalorder %s32, 1
      %p139 = por %p137, %p138
      %p141 = scmp.ne.s32.totalorder %s126, %s140
      %p142 = scmp.eq.s32.totalorder %s32, 0
      %p143 = por %p141, %p142
      %s145 = sadd.s32 %s144, 1
      %p148 = scmp.eq.s32.totalorder %s26, 1
      %p149 = scmp.ne.s32.totalorder %s144, %s146
      %p150 = scmp.eq.s32.totalorder %s26, 0
      %p151 = por %p149, %p150
      %p152 = scmp.ne.s32.totalorder %s144, %s146
      %p153 = scmp.eq.s32.totalorder %s31, 1
      %p154 = por %p152, %p153
      %p155 = scmp.ne.s32.totalorder %s146, %s147
      %p156 = scmp.eq.s32.totalorder %s31, 0
      %p157 = por %p155, %p156
      %p158 = scmp.ne.s32.totalorder %s146, %s147
      %p159 = scmp.eq.s32.totalorder %s32, 1
      %p160 = por %p158, %p159
      %p162 = scmp.ne.s32.totalorder %s147, %s161
      %p163 = scmp.eq.s32.totalorder %s32, 0
      %p164 = por %p162, %p163
      %s166 = sadd.s32 %s165, 1
      %p169 = scmp.eq.s32.totalorder %s26, 1
      %p170 = scmp.ne.s32.totalorder %s165, %s167
      %p171 = scmp.eq.s32.totalorder %s26, 0
      %p172 = por %p170, %p171
      %p173 = scmp.ne.s32.totalorder %s165, %s167
      %p174 = scmp.eq.s32.totalorder %s31, 1
      %p175 = por %p173, %p174
      %p176 = scmp.ne.s32.totalorder %s167, %s168
      %p177 = scmp.eq.s32.totalorder %s31, 0
      %p178 = por %p176, %p177
      %p179 = scmp.ne.s32.totalorder %s167, %s168
      %p180 = scmp.eq.s32.totalorder %s32, 1
      %p181 = por %p179, %p180
      %p183 = scmp.ne.s32.totalorder %s168, %s182
      %p184 = scmp.eq.s32.totalorder %s32, 0
      %p185 = por %p183, %p184
      %s187 = sadd.s32 %s186, 1
      %p190 = scmp.eq.s32.totalorder %s26, 1
      %p191 = scmp.ne.s32.totalorder %s186, %s188
      %p192 = scmp.eq.s32.totalorder %s26, 0
      %p193 = por %p191, %p192
      %p194 = scmp.ne.s32.totalorder %s186, %s188
      %p195 = scmp.eq.s32.totalorder %s31, 1
      %p196 = por %p194, %p195
      %p197 = scmp.ne.s32.totalorder %s188, %s189
      %p198 = scmp.eq.s32.totalorder %s31, 0
      %p199 = por %p197, %p198
      %p200 = scmp.ne.s32.totalorder %s188, %s189
      %p201 = scmp.eq.s32.totalorder %s32, 1
      %p202 = por %p200, %p201
      %p204 = scmp.ne.s32.totalorder %s189, %s203
      %p205 = scmp.eq.s32.totalorder %s32, 0
      %p206 = por %p204, %p205
      %s208 = sadd.s32 %s207, 1
      %p211 = scmp.eq.s32.totalorder %s26, 1
      %p212 = scmp.ne.s32.totalorder %s207, %s209
      %p213 = scmp.eq.s32.totalorder %s26, 0
      %p214 = por %p212, %p213
      %p215 = scmp.ne.s32.totalorder %s207, %s209
      %p216 = scmp.eq.s32.totalorder %s31, 1
      %p217 = por %p215, %p216
      %p218 = scmp.ne.s32.totalorder %s209, %s210
      %p219 = scmp.eq.s32.totalorder %s31, 0
      %p220 = por %p218, %p219
      %p221 = scmp.ne.s32.totalorder %s209, %s210
      %p222 = scmp.eq.s32.totalorder %s32, 1
      %p223 = por %p221, %p222
      %p225 = scmp.ne.s32.totalorder %s210, %s224
      %p226 = scmp.eq.s32.totalorder %s32, 0
      %p227 = por %p225, %p226
      %s229 = sadd.s32 %s228, 1
      %p232 = scmp.eq.s32.totalorder %s26, 1
      %p233 = scmp.ne.s32.totalorder %s228, %s230
      %p234 = scmp.eq.s32.totalorder %s26, 0
      %p235 = por %p233, %p234
      %p236 = scmp.ne.s32.totalorder %s228, %s230
      %p237 = scmp.eq.s32.totalorder %s31, 1
      %p238 = por %p236, %p237
      %p239 = scmp.ne.s32.totalorder %s230, %s231
      %p240 = scmp.eq.s32.totalorder %s31, 0
      %p241 = por %p239, %p240
      %p242 = scmp.ne.s32.totalorder %s230, %s231
      %p243 = scmp.eq.s32.totalorder %s32, 1
      %p244 = por %p242, %p243
      %p246 = scmp.ne.s32.totalorder %s231, %s245
      %p247 = scmp.eq.s32.totalorder %s32, 0
      %p248 = por %p246, %p247
      %s250 = sadd.s32 %s249, 1
      %p253 = scmp.eq.s32.totalorder %s26, 1
      %p254 = scmp.ne.s32.totalorder %s249, %s251
      %p255 = scmp.eq.s32.totalorder %s26, 0
      %p256 = por %p254, %p255
      %p257 = scmp.ne.s32.totalorder %s249, %s251
      %p258 = scmp.eq.s32.totalorder %s31, 1
      %p259 = por %p257, %p258
      %p260 = scmp.ne.s32.totalorder %s251, %s252
      %p261 = scmp.eq.s32.totalorder %s31, 0
      %p262 = por %p260, %p261
      %p263 = scmp.ne.s32.totalorder %s251, %s252
      %p264 = scmp.eq.s32.totalorder %s32, 1
      %p265 = por %p263, %p264
      %p267 = scmp.ne.s32.totalorder %s252, %s266
      %p268 = scmp.eq.s32.totalorder %s32, 0
      %p269 = por %p267, %p268
      %s271 = sadd.s32 %s270, 1
      %p274 = scmp.eq.s32.totalorder %s26, 1
      %p275 = scmp.ne.s32.totalorder %s270, %s272
      %p276 = scmp.eq.s32.totalorder %s26, 0
      %p277 = por %p275, %p276
      %p278 = scmp.ne.s32.totalorder %s270, %s272
      %p279 = scmp.eq.s32.totalorder %s31, 1
      %p280 = por %p278, %p279
      %p281 = scmp.ne.s32.totalorder %s272, %s273
      %p282 = scmp.eq.s32.totalorder %s31, 0
      %p283 = por %p281, %p282
      %p284 = scmp.ne.s32.totalorder %s272, %s273
      %p285 = scmp.eq.s32.totalorder %s32, 1
      %p286 = por %p284, %p285
      %p288 = scmp.ne.s32.totalorder %s273, %s287
      %p289 = scmp.eq.s32.totalorder %s32, 0
      %p290 = por %p288, %p289
      %s292 = sadd.s32 %s291, 1
      %p295 = scmp.eq.s32.totalorder %s26, 1
      %p296 = scmp.ne.s32.totalorder %s291, %s293
      %p297 = scmp.eq.s32.totalorder %s26, 0
      %p298 = por %p296, %p297
      %p299 = scmp.ne.s32.totalorder %s291, %s293
      %p300 = scmp.eq.s32.totalorder %s31, 1
      %p301 = por %p299, %p300
      %p302 = scmp.ne.s32.totalorder %s293, %s294
      %p303 = scmp.eq.s32.totalorder %s31, 0
      %p304 = por %p302, %p303
      %p305 = scmp.ne.s32.totalorder %s293, %s294
      %p306 = scmp.eq.s32.totalorder %s32, 1
      %p307 = por %p305, %p306
      %p309 = scmp.ne.s32.totalorder %s294, %s308
      %p310 = scmp.eq.s32.totalorder %s32, 0
      %p311 = por %p309, %p310
      %s313 = sadd.s32 %s312, 1
      %p316 = scmp.eq.s32.totalorder %s26, 1
      %p317 = scmp.ne.s32.totalorder %s312, %s314
      %p318 = scmp.eq.s32.totalorder %s26, 0
      %p319 = por %p317, %p318
      %p320 = scmp.ne.s32.totalorder %s312, %s314
      %p321 = scmp.eq.s32.totalorder %s31, 1
      %p322 = por %p320, %p321
      %p323 = scmp.ne.s32.totalorder %s314, %s315
      %p324 = scmp.eq.s32.totalorder %s31, 0
      %p325 = por %p323, %p324
      %p326 = scmp.ne.s32.totalorder %s314, %s315
      %p327 = scmp.eq.s32.totalorder %s32, 1
      %p328 = por %p326, %p327
      %p330 = scmp.ne.s32.totalorder %s315, %s329
      %p331 = scmp.eq.s32.totalorder %s32, 0
      %p332 = por %p330, %p331
      %s334 = sadd.s32 %s333, 1
      %p337 = scmp.eq.s32.totalorder %s26, 1
      %p338 = scmp.ne.s32.totalorder %s333, %s335
      %p339 = scmp.eq.s32.totalorder %s26, 0
      %p340 = por %p338, %p339
      %p341 = scmp.ne.s32.totalorder %s333, %s335
      %p342 = scmp.eq.s32.totalorder %s31, 1
      %p343 = por %p341, %p342
      %p344 = scmp.ne.s32.totalorder %s335, %s336
      %p345 = scmp.eq.s32.totalorder %s31, 0
      %p346 = por %p344, %p345
      %p347 = scmp.ne.s32.totalorder %s335, %s336
      %p348 = scmp.eq.s32.totalorder %s32, 1
      %p349 = por %p347, %p348
      %p351 = scmp.ne.s32.totalorder %s336, %s350
      %p352 = scmp.eq.s32.totalorder %s32, 0
      %p353 = por %p351, %p352
      %s355 = sadd.s32 %s354, 1
      %p358 = scmp.eq.s32.totalorder %s26, 1
      %p359 = scmp.ne.s32.totalorder %s354, %s356
      %p360 = scmp.eq.s32.totalorder %s26, 0
      %p361 = por %p359, %p360
      %p362 = scmp.ne.s32.totalorder %s354, %s356
      %p363 = scmp.eq.s32.totalorder %s31, 1
      %p364 = por %p362, %p363
      %p365 = scmp.ne.s32.totalorder %s356, %s357
      %p366 = scmp.eq.s32.totalorder %s31, 0
      %p367 = por %p365, %p366
      %p368 = scmp.ne.s32.totalorder %s356, %s357
      %p369 = scmp.eq.s32.totalorder %s32, 1
      %p370 = por %p368, %p369
      %p372 = scmp.ne.s32.totalorder %s357, %s371
      %p373 = scmp.eq.s32.totalorder %s32, 0
      %p374 = por %p372, %p373
      %s376 = sadd.s32 %s375, 1
      %p379 = scmp.eq.s32.totalorder %s26, 1
      %p380 = scmp.ne.s32.totalorder %s375, %s377
      %p381 = scmp.eq.s32.totalorder %s26, 0
      %p382 = por %p380, %p381
      %p383 = scmp.ne.s32.totalorder %s375, %s377
      %p384 = scmp.eq.s32.totalorder %s31, 1
      %p385 = por %p383, %p384
      %p386 = scmp.ne.s32.totalorder %s377, %s378
      %p387 = scmp.eq.s32.totalorder %s31, 0
      %p388 = por %p386, %p387
      %p389 = scmp.ne.s32.totalorder %s377, %s378
      %p390 = scmp.eq.s32.totalorder %s32, 1
      %p391 = por %p389, %p390
      %p393 = scmp.ne.s32.totalorder %s378, %s392
      %p394 = scmp.eq.s32.totalorder %s32, 0
      %p395 = por %p393, %p394
      %s396 = ssub.s32 %s26, %s33
      %p397 = scmp.eq.s32.totalorder %s396, 0
      %s399 = sadd.s32 %s398, 1
      %s400 = scalar_select %p397, %s398, %s399
      %p403 = pneg %p397
      %p404 = scmp.eq.s32.totalorder %s26, 1
      %p405 = por %p403, %p404
      %p406 = scmp.ne.s32.totalorder %s398, %s401
      %p407 = scmp.eq.s32.totalorder %s26, 0
      %p408 = por %p406, %p407
      %p409 = scmp.ne.s32.totalorder %s398, %s401
      %p410 = scmp.eq.s32.totalorder %s31, 1
      %p411 = por %p409, %p410
      %p412 = scmp.ne.s32.totalorder %s401, %s402
      %p413 = scmp.eq.s32.totalorder %s31, 0
      %p414 = por %p412, %p413
      %p415 = scmp.ne.s32.totalorder %s401, %s402
      %p416 = scmp.eq.s32.totalorder %s32, 1
      %p417 = por %p415, %p416
      %p419 = scmp.ne.s32.totalorder %s402, %s418
      %p420 = scmp.eq.s32.totalorder %s32, 0
      %p421 = por %p419, %p420
      %p422 = scmp.le.s32.totalorder 1, %s26
      %p423 = scmp.lt.s32.totalorder %s26, 3
      %p424 = pnand %p422, %p423
      %p425 = pneg %p424
      // Predicated region
      $region9: #{model_classify_forward.1} parent=5 // pred_check
        _
      $region10: #{model_classify_forward.1} parent=5 // pred_check_branch
        %427 = sbr.rel (%p424) target = $region12
      $region11: #{model_classify_forward.1} parent=5 // pred_region
        %s428 = ssub.s32 %s26, 1
        // Predicated region
        $region13: #{model_classify_forward.1} parent=11 // pred_check
          %p429 = pneg %p73
        $region14: #{model_classify_forward.1} parent=11 // pred_check_branch
          %431 = sbr.rel (%p429) target = $region16
        $region15: #{model_classify_forward.1} parent=11 // pred_region
          _
        $region16: #{model_classify_forward.1} parent=11 // pred_fallthru
          _
        // Predicated region
        $region17: #{model_classify_forward.1} parent=11 // pred_check
          %p432 = pneg %p94
        $region18: #{model_classify_forward.1} parent=11 // pred_check_branch
          %434 = sbr.rel (%p432) target = $region20
        $region19: #{model_classify_forward.1} parent=11 // pred_region
          _
        $region20: #{model_classify_forward.1} parent=11 // pred_fallthru
          _
        // Predicated region
        $region21: #{model_classify_forward.1} parent=11 // pred_check
          %p435 = pneg %p115
        $region22: #{model_classify_forward.1} parent=11 // pred_check_branch
          %437 = sbr.rel (%p435) target = $region24
        $region23: #{model_classify_forward.1} parent=11 // pred_region
          _
        $region24: #{model_classify_forward.1} parent=11 // pred_fallthru
          _
        // Predicated region
        $region25: #{model_classify_forward.1} parent=11 // pred_check
          %p438 = pneg %p136
        $region26: #{model_classify_forward.1} parent=11 // pred_check_branch
          %440 = sbr.rel (%p438) target = $region28
        $region27: #{model_classify_forward.1} parent=11 // pred_region
          _
        $region28: #{model_classify_forward.1} parent=11 // pred_fallthru
          _
        // Predicated region
        $region29: #{model_classify_forward.1} parent=11 // pred_check
          %p441 = pneg %p157
        $region30: #{model_classify_forward.1} parent=11 // pred_check_branch
          %443 = sbr.rel (%p441) target = $region32
        $region31: #{model_classify_forward.1} parent=11 // pred_region
          _
        $region32: #{model_classify_forward.1} parent=11 // pred_fallthru
          _
        // Predicated region
        $region33: #{model_classify_forward.1} parent=11 // pred_check
          %p444 = pneg %p178
        $region34: #{model_classify_forward.1} parent=11 // pred_check_branch
          %446 = sbr.rel (%p444) target = $region36
        $region35: #{model_classify_forward.1} parent=11 // pred_region
          _
        $region36: #{model_classify_forward.1} parent=11 // pred_fallthru
          _
        // Predicated region
        $region37: #{model_classify_forward.1} parent=11 // pred_check
          %p447 = pneg %p199
        $region38: #{model_classify_forward.1} parent=11 // pred_check_branch
          %449 = sbr.rel (%p447) target = $region40
        $region39: #{model_classify_forward.1} parent=11 // pred_region
          _
        $region40: #{model_classify_forward.1} parent=11 // pred_fallthru
          _
        // Predicated region
        $region41: #{model_classify_forward.1} parent=11 // pred_check
          %p450 = pneg %p220
        $region42: #{model_classify_forward.1} parent=11 // pred_check_branch
          %452 = sbr.rel (%p450) target = $region44
        $region43: #{model_classify_forward.1} parent=11 // pred_region
          _
        $region44: #{model_classify_forward.1} parent=11 // pred_fallthru
          _
        // Predicated region
        $region45: #{model_classify_forward.1} parent=11 // pred_check
          %p453 = pneg %p241
        $region46: #{model_classify_forward.1} parent=11 // pred_check_branch
          %455 = sbr.rel (%p453) target = $region48
        $region47: #{model_classify_forward.1} parent=11 // pred_region
          _
        $region48: #{model_classify_forward.1} parent=11 // pred_fallthru
          _
        // Predicated region
        $region49: #{model_classify_forward.1} parent=11 // pred_check
          %p456 = pneg %p262
        $region50: #{model_classify_forward.1} parent=11 // pred_check_branch
          %458 = sbr.rel (%p456) target = $region52
        $region51: #{model_classify_forward.1} parent=11 // pred_region
          _
        $region52: #{model_classify_forward.1} parent=11 // pred_fallthru
          _
        // Predicated region
        $region53: #{model_classify_forward.1} parent=11 // pred_check
          %p459 = pneg %p283
        $region54: #{model_classify_forward.1} parent=11 // pred_check_branch
          %461 = sbr.rel (%p459) target = $region56
        $region55: #{model_classify_forward.1} parent=11 // pred_region
          _
        $region56: #{model_classify_forward.1} parent=11 // pred_fallthru
          _
        // Predicated region
        $region57: #{model_classify_forward.1} parent=11 // pred_check
          %p462 = pneg %p304
        $region58: #{model_classify_forward.1} parent=11 // pred_check_branch
          %464 = sbr.rel (%p462) target = $region60
        $region59: #{model_classify_forward.1} parent=11 // pred_region
          _
        $region60: #{model_classify_forward.1} parent=11 // pred_fallthru
          _
        // Predicated region
        $region61: #{model_classify_forward.1} parent=11 // pred_check
          %p465 = pneg %p325
        $region62: #{model_classify_forward.1} parent=11 // pred_check_branch
          %467 = sbr.rel (%p465) target = $region64
        $region63: #{model_classify_forward.1} parent=11 // pred_region
          _
        $region64: #{model_classify_forward.1} parent=11 // pred_fallthru
          _
        // Predicated region
        $region65: #{model_classify_forward.1} parent=11 // pred_check
          %p468 = pneg %p346
        $region66: #{model_classify_forward.1} parent=11 // pred_check_branch
          %470 = sbr.rel (%p468) target = $region68
        $region67: #{model_classify_forward.1} parent=11 // pred_region
          _
        $region68: #{model_classify_forward.1} parent=11 // pred_fallthru
          _
        // Predicated region
        $region69: #{model_classify_forward.1} parent=11 // pred_check
          %p471 = pneg %p367
        $region70: #{model_classify_forward.1} parent=11 // pred_check_branch
          %473 = sbr.rel (%p471) target = $region72
        $region71: #{model_classify_forward.1} parent=11 // pred_region
          _
        $region72: #{model_classify_forward.1} parent=11 // pred_fallthru
          _
        // Predicated region
        $region73: #{model_classify_forward.1} parent=11 // pred_check
          %p474 = pneg %p388
        $region74: #{model_classify_forward.1} parent=11 // pred_check_branch
          %476 = sbr.rel (%p474) target = $region76
        $region75: #{model_classify_forward.1} parent=11 // pred_region
          _
        $region76: #{model_classify_forward.1} parent=11 // pred_fallthru
          _
      $region12: #{model_classify_forward.1} parent=5 // pred_fallthru
        _
      %p477 = scmp.lt.s32.totalorder %s26, 2
      // Predicated region
      $region77: #{model_classify_forward.1} parent=5 // pred_check
        %p478 = pneg %p477
      $region78: #{model_classify_forward.1} parent=5 // pred_check_branch
        %480 = sbr.rel (%p478) target = $region80
      $region79: #{model_classify_forward.1} parent=5 // pred_region
        // Predicated region
        $region81: #{model_classify_forward.1} parent=79 // pred_check
          %p481 = pneg %p46
        $region82: #{model_classify_forward.1} parent=79 // pred_check_branch
          %483 = sbr.rel (%p481) target = $region84
        $region83: #{model_classify_forward.1} parent=79 // pred_region
          %s484 = smul.u32 32, %s26
          %p485 = scmp.lt.s32.totalorder %s484, 63
          %s486 = scalar_select %p485, %s484, 63
          %s487 = smul.addr %s486, 4
          %s488 = scalar_lea.vmem %s0, %s487
          %s489 = smul.u32 32, %s26
        $region84: #{model_classify_forward.1} parent=79 // pred_fallthru
          _
      $region80: #{model_classify_forward.1} parent=5 // pred_fallthru
        _
      %p490 = scmp.le.s32.totalorder 1, %s26
      %p491 = scmp.lt.s32.totalorder %s26, 3
      %p492 = pnand %p490, %p491
      %p493 = pneg %p492
      // Predicated region
      $region85: #{model_classify_forward.1} parent=5 // pred_check
        _
      $region86: #{model_classify_forward.1} parent=5 // pred_check_branch
        %495 = sbr.rel (%p492) target = $region88
      $region87: #{model_classify_forward.1} parent=5 // pred_region
        %s496 = ssub.s32 %s26, 1
        %s497 = smul.u32 32, %s31
        %p498 = scmp.lt.s32.totalorder %s497, 63
        %s499 = scalar_select %p498, %s497, 63
        %s500 = smul.addr %s499, 4
        %s501 = scalar_lea.vmem %s0, %s500
        %p502 = pneg %p52
        %p503 = pneg %p49
        %p504 = pneg %p73
        %p505 = pneg %p70
        %p506 = pneg %p94
        %p507 = pneg %p91
        %p508 = pneg %p115
        %p509 = pneg %p112
        %p510 = pneg %p136
        %p511 = pneg %p133
        %p512 = pneg %p157
        %p513 = pneg %p154
        %p514 = pneg %p178
        %p515 = pneg %p175
        %p516 = pneg %p199
        %p517 = pneg %p196
        %p518 = pneg %p220
        %p519 = pneg %p217
        %p520 = pneg %p241
        %p521 = pneg %p238
        %p522 = pneg %p262
        %p523 = pneg %p259
        %p524 = pneg %p283
        %p525 = pneg %p280
        %p526 = pneg %p304
        %p527 = pneg %p301
        %p528 = pneg %p325
        %p529 = pneg %p322
        %p530 = pneg %p346
        %p531 = pneg %p343
        %p532 = pneg %p367
        %p533 = pneg %p364
        %p534 = pneg %p388
        %p535 = pneg %p385
        %p536 = pneg %p414
        %p537 = pneg %p411
        %s538 = sand.u32 %s401, 1
        %s539 = scalar_lea.sflag [#allocation3], %s538
        %s540 = sand.u32 %s401, 1
        %s541 = scalar_lea.vmem [#allocation2], %s540
        %s542 = smul.u32 32, %s31
        %p543 = scmp.lt.s32.totalorder %s542, 63
        %s544 = scalar_select %p543, %s542, 63
        %s545 = smul.addr %s544, 4
        %s546 = scalar_lea.vmem %s0, %s545
        %s547 = smul.u32 32, %s31
        %v549 = vld [vmem:[%s546] sm:$0xf]
        %v550 = vld [vmem:[%s546 + $0x4] sm:$0xf]
        %v551 = vld [vmem:[%s546 + $0x8] sm:$0xf]
        %v552 = vld [vmem:[%s546 + $0xc] sm:$0xf]
        %v553 = vld [vmem:[%s546 + $0x10] sm:$0xf]
        %v554 = vld [vmem:[%s546 + $0x14] sm:$0xf]
        %v555 = vld [vmem:[%s546 + $0x18] sm:$0xf]
        %v556 = vld [vmem:[%s546 + $0x1c] sm:$0xf]
        %v557 = vld [vmem:[%s546 + $0x20] sm:$0xf]
        %v558 = vld [vmem:[%s546 + $0x24] sm:$0xf]
        %v559 = vld [vmem:[%s546 + $0x28] sm:$0xf]
        %v560 = vld [vmem:[%s546 + $0x2c] sm:$0xf]
        %v561 = vld [vmem:[%s546 + $0x30] sm:$0xf]
        %v562 = vld [vmem:[%s546 + $0x34] sm:$0xf]
        %v563 = vld [vmem:[%s546 + $0x38] sm:$0xf]
        %v564 = vld [vmem:[%s546 + $0x3c] sm:$0xf]
        %v565 = vld [vmem:[%s546 + $0x40] sm:$0xf]
        %v566 = vld [vmem:[%s546 + $0x44] sm:$0xf]
        %v567 = vld [vmem:[%s546 + $0x48] sm:$0xf]
        %v568 = vld [vmem:[%s546 + $0x4c] sm:$0xf]
        %v569 = vld [vmem:[%s546 + $0x50] sm:$0xf]
        %v570 = vld [vmem:[%s546 + $0x54] sm:$0xf]
        %v571 = vld [vmem:[%s546 + $0x58] sm:$0xf]
        %v572 = vld [vmem:[%s546 + $0x5c] sm:$0xf]
        %v573 = vld [vmem:[%s546 + $0x60] sm:$0xf]
        %v574 = vld [vmem:[%s546 + $0x64] sm:$0xf]
        %v575 = vld [vmem:[%s546 + $0x68] sm:$0xf]
        %v576 = vld [vmem:[%s546 + $0x6c] sm:$0xf]
        %v577 = vld [vmem:[%s546 + $0x70] sm:$0xf]
        %v578 = vld [vmem:[%s546 + $0x74] sm:$0xf]
        %v579 = vld [vmem:[%s546 + $0x78] sm:$0xf]
        %v580 = vld [vmem:[%s546 + $0x7c] sm:$0xf]
        %v581 = vld [vmem:[%s2] sm:$0xf]
        %v582 = vld [vmem:[%s2 + $0x4] sm:$0xf]
        %v583 = vld [vmem:[%s2 + $0x8] sm:$0xf]
        %v584 = vld [vmem:[%s2 + $0xc] sm:$0xf]
        %v585 = vld [vmem:[%s3] sm:$0x1]
        %v587 = vlaneseq
        %v588 = vshrl.u32 %v587, 7
        %v589 = vsub.s32 0, %v588
        %v590 = vrot.slane %v585, %v589
        %v624 = vunpack.c.l.b16 %v549
        %v625 = vunpack.c.l.b16 %v550
        %v626 = vunpack.c.l.b16 %v551
        %v627 = vunpack.c.l.b16 %v552
        %v628 = vunpack.c.l.b16 %v553
        %v629 = vunpack.c.l.b16 %v554
        %v630 = vunpack.c.l.b16 %v555
        %v631 = vunpack.c.l.b16 %v556
        %v632 = vunpack.c.l.b16 %v557
        %v633 = vunpack.c.l.b16 %v558
        %v634 = vunpack.c.l.b16 %v559
        %v635 = vunpack.c.l.b16 %v560
        %v636 = vunpack.c.l.b16 %v561
        %v637 = vunpack.c.l.b16 %v562
        %v638 = vunpack.c.l.b16 %v563
        %v639 = vunpack.c.l.b16 %v564
        %v640 = vunpack.c.l.b16 %v565
        %v641 = vunpack.c.l.b16 %v566
        %v642 = vunpack.c.l.b16 %v567
        %v643 = vunpack.c.l.b16 %v568
        %v644 = vunpack.c.l.b16 %v569
        %v645 = vunpack.c.l.b16 %v570
        %v646 = vunpack.c.l.b16 %v571
        %v647 = vunpack.c.l.b16 %v572
        %v648 = vunpack.c.l.b16 %v573
        %v649 = vunpack.c.l.b16 %v574
        %v650 = vunpack.c.l.b16 %v575
        %v651 = vunpack.c.l.b16 %v576
        %v652 = vunpack.c.l.b16 %v577
        %v653 = vunpack.c.l.b16 %v578
        %v654 = vunpack.c.l.b16 %v579
        %v655 = vunpack.c.l.b16 %v580
        %v656 = vpack.c.b16 %v625, %v624
        %v657 = vpack.c.b16 %v627, %v626
        %v658 = vpack.c.b16 %v629, %v628
        %v659 = vpack.c.b16 %v631, %v630
        %v660 = vpack.c.b16 %v633, %v632
        %v661 = vpack.c.b16 %v635, %v634
        %v662 = vpack.c.b16 %v637, %v636
        %v663 = vpack.c.b16 %v639, %v638
        %v664 = vpack.c.b16 %v641, %v640
        %v665 = vpack.c.b16 %v643, %v642
        %v666 = vpack.c.b16 %v645, %v644
        %v667 = vpack.c.b16 %v647, %v646
        %v668 = vpack.c.b16 %v649, %v648
        %v669 = vpack.c.b16 %v651, %v650
        %v670 = vpack.c.b16 %v653, %v652
        %v671 = vpack.c.b16 %v655, %v654
        %v676 = vunpack.c.l.b16 %v581
        %v677 = vunpack.c.l.b16 %v582
        %v678 = vunpack.c.l.b16 %v583
        %v679 = vunpack.c.l.b16 %v584
        %v680 = vpack.c.b16 %v677, %v676
        %v681 = vpack.c.b16 %v679, %v678
        %vm684 = vcmask 261120
        %v686 = vsel %vm684, %v656, 0
        %v689 = vsel %vm684, %v657, 0
        %v692 = vsel %vm684, %v658, 0
        %v695 = vsel %vm684, %v659, 0
        %v698 = vsel %vm684, %v660, 0
        %v701 = vsel %vm684, %v661, 0
        %v704 = vsel %vm684, %v662, 0
        %v707 = vsel %vm684, %v663, 0
        %v710 = vsel %vm684, %v664, 0
        %v713 = vsel %vm684, %v665, 0
        %v716 = vsel %vm684, %v666, 0
        %v719 = vsel %vm684, %v667, 0
        %v722 = vsel %vm684, %v668, 0
        %v725 = vsel %vm684, %v669, 0
        %v728 = vsel %vm684, %v670, 0
        %v731 = vsel %vm684, %v671, 0
        %733 = vmatprep.subr.bf16.mxu0 0
        %734 = vmatpush1.bf16.msra.mxu0 %v680
        %735 = vmatprep.subr.bf16.mxu0 0
        %736 = vmatpush1.bf16.msra.mxu0 %v681
        %737 = vmatprep.subr.bf16.mxu0 0
        %738 = vmatpush1.bf16.msra.mxu0 0
        %739 = vmatprep.subr.bf16.mxu0 0
        %740 = vmatpush1.bf16.msra.mxu0 0
        %741 = vmatprep.subr.bf16.mxu0 0
        %742 = vmatpush1.bf16.msra.mxu0 0
        %743 = vmatprep.subr.bf16.mxu0 0
        %744 = vmatpush1.bf16.msra.mxu0 0
        %745 = vmatprep.subr.bf16.mxu0 0
        %746 = vmatpush1.bf16.msra.mxu0 0
        %747 = vmatprep.subr.bf16.mxu0 0
        %748 = vmatpush1.bf16.msra.mxu0 0
        %749 = vmatprep.subr.bf16.mxu0 0
        %750 = vmatpush1.bf16.msra.mxu0 0
        %751 = vmatprep.subr.bf16.mxu0 0
        %752 = vmatpush1.bf16.msra.mxu0 0
        %753 = vmatprep.subr.bf16.mxu0 0
        %754 = vmatpush1.bf16.msra.mxu0 0
        %755 = vmatprep.subr.bf16.mxu0 0
        %756 = vmatpush1.bf16.msra.mxu0 0
        %757 = vmatprep.subr.bf16.mxu0 0
        %758 = vmatpush1.bf16.msra.mxu0 0
        %759 = vmatprep.subr.bf16.mxu0 0
        %760 = vmatpush1.bf16.msra.mxu0 0
        %761 = vmatprep.subr.bf16.mxu0 0
        %762 = vmatpush1.bf16.msra.mxu0 0
        %763 = vmatprep.subr.bf16.mxu0 0
        %764 = vmatpush1.bf16.msra.mxu0 0
        %765 = vmatprep.mubr.bf16.mxu0 0
        %766 = vmatmul.mubr.bf16.gmra.mrb[0].mxu0 %v686
        %v767 = vpop.f32.mrb[0].mxu0
        %v768 = vadd.f32 %v590, %v767
        %v769 = vpop.f32.mrb[0].mxu0
        %v770 = vpop.f32.mrb[0].mxu0
        %v771 = vadd.f32 %v590, %v770
        %v772 = vpop.f32.mrb[0].mxu0
        %773 = vmatprep.mubr.bf16.mxu0 0
        %774 = vmatmul.mubr.bf16.gmra.mrb[0].mxu0 %v689
        %v775 = vpop.f32.mrb[0].mxu0
        %v776 = vadd.f32 %v590, %v775
        %v777 = vpop.f32.mrb[0].mxu0
        %v778 = vpop.f32.mrb[0].mxu0
        %v779 = vadd.f32 %v590, %v778
        %v780 = vpop.f32.mrb[0].mxu0
        %781 = vmatprep.mubr.bf16.mxu0 0
        %782 = vmatmul.mubr.bf16.gmra.mrb[0].mxu0 %v692
        %v783 = vpop.f32.mrb[0].mxu0
        %v784 = vadd.f32 %v590, %v783
        %v785 = vpop.f32.mrb[0].mxu0
        %v786 = vpop.f32.mrb[0].mxu0
        %v787 = vadd.f32 %v590, %v786
        %v788 = vpop.f32.mrb[0].mxu0
        %789 = vmatprep.mubr.bf16.mxu0 0
        %790 = vmatmul.mubr.bf16.gmra.mrb[0].mxu0 %v695
        %v791 = vpop.f32.mrb[0].mxu0
        %v792 = vadd.f32 %v590, %v791
        %v793 = vpop.f32.mrb[0].mxu0
        %v794 = vpop.f32.mrb[0].mxu0
        %v795 = vadd.f32 %v590, %v794
        %v796 = vpop.f32.mrb[0].mxu0
        %797 = vmatprep.mubr.bf16.mxu0 0
        %798 = vmatmul.mubr.bf16.gmra.mrb[0].mxu0 %v698
        %v799 = vpop.f32.mrb[0].mxu0
        %v800 = vadd.f32 %v590, %v799
        %v801 = vpop.f32.mrb[0].mxu0
        %v802 = vpop.f32.mrb[0].mxu0
        %v803 = vadd.f32 %v590, %v802
        %v804 = vpop.f32.mrb[0].mxu0
        %805 = vmatprep.mubr.bf16.mxu0 0
        %806 = vmatmul.mubr.bf16.gmra.mrb[0].mxu0 %v701
        %v807 = vpop.f32.mrb[0].mxu0
        %v808 = vadd.f32 %v590, %v807
        %v809 = vpop.f32.mrb[0].mxu0
        %v810 = vpop.f32.mrb[0].mxu0
        %v811 = vadd.f32 %v590, %v810
        %v812 = vpop.f32.mrb[0].mxu0
        %813 = vmatprep.mubr.bf16.mxu0 0
        %814 = vmatmul.mubr.bf16.gmra.mrb[0].mxu0 %v704
        %v815 = vpop.f32.mrb[0].mxu0
        %v816 = vadd.f32 %v590, %v815
        %v817 = vpop.f32.mrb[0].mxu0
        %v818 = vpop.f32.mrb[0].mxu0
        %v819 = vadd.f32 %v590, %v818
        %v820 = vpop.f32.mrb[0].mxu0
        %821 = vmatprep.mubr.bf16.mxu0 0
        %822 = vmatmul.mubr.bf16.gmra.mrb[0].mxu0 %v707
        %v823 = vpop.f32.mrb[0].mxu0
        %v824 = vadd.f32 %v590, %v823
        %v825 = vpop.f32.mrb[0].mxu0
        %v826 = vpop.f32.mrb[0].mxu0
        %v827 = vadd.f32 %v590, %v826
        %v828 = vpop.f32.mrb[0].mxu0
        %829 = vmatprep.mubr.bf16.mxu0 0
        %830 = vmatmul.mubr.bf16.gmra.mrb[0].mxu0 %v710
        %v831 = vpop.f32.mrb[0].mxu0
        %v832 = vadd.f32 %v590, %v831
        %v833 = vpop.f32.mrb[0].mxu0
        %v834 = vpop.f32.mrb[0].mxu0
        %v835 = vadd.f32 %v590, %v834
        %v836 = vpop.f32.mrb[0].mxu0
        %837 = vmatprep.mubr.bf16.mxu0 0
        %838 = vmatmul.mubr.bf16.gmra.mrb[0].mxu0 %v713
        %v839 = vpop.f32.mrb[0].mxu0
        %v840 = vadd.f32 %v590, %v839
        %v841 = vpop.f32.mrb[0].mxu0
        %v842 = vpop.f32.mrb[0].mxu0
        %v843 = vadd.f32 %v590, %v842
        %v844 = vpop.f32.mrb[0].mxu0
        %845 = vmatprep.mubr.bf16.mxu0 0
        %846 = vmatmul.mubr.bf16.gmra.mrb[0].mxu0 %v716
        %v847 = vpop.f32.mrb[0].mxu0
        %v848 = vadd.f32 %v590, %v847
        %v849 = vpop.f32.mrb[0].mxu0
        %v850 = vpop.f32.mrb[0].mxu0
        %v851 = vadd.f32 %v590, %v850
        %v852 = vpop.f32.mrb[0].mxu0
        %853 = vmatprep.mubr.bf16.mxu0 0
        %854 = vmatmul.mubr.bf16.gmra.mrb[0].mxu0 %v719
        %v855 = vpop.f32.mrb[0].mxu0
        %v856 = vadd.f32 %v590, %v855
        %v857 = vpop.f32.mrb[0].mxu0
        %v858 = vpop.f32.mrb[0].mxu0
        %v859 = vadd.f32 %v590, %v858
        %v860 = vpop.f32.mrb[0].mxu0
        %861 = vmatprep.mubr.bf16.mxu0 0
        %862 = vmatmul.mubr.bf16.gmra.mrb[0].mxu0 %v722
        %v863 = vpop.f32.mrb[0].mxu0
        %v864 = vadd.f32 %v590, %v863
        %v865 = vpop.f32.mrb[0].mxu0
        %v866 = vpop.f32.mrb[0].mxu0
        %v867 = vadd.f32 %v590, %v866
        %v868 = vpop.f32.mrb[0].mxu0
        %869 = vmatprep.mubr.bf16.mxu0 0
        %870 = vmatmul.mubr.bf16.gmra.mrb[0].mxu0 %v725
        %v871 = vpop.f32.mrb[0].mxu0
        %v872 = vadd.f32 %v590, %v871
        %v873 = vpop.f32.mrb[0].mxu0
        %v874 = vpop.f32.mrb[0].mxu0
        %v875 = vadd.f32 %v590, %v874
        %v876 = vpop.f32.mrb[0].mxu0
        %877 = vmatprep.mubr.bf16.mxu0 0
        %878 = vmatmul.mubr.bf16.gmra.mrb[0].mxu0 %v728
        %v879 = vpop.f32.mrb[0].mxu0
        %v880 = vadd.f32 %v590, %v879
        %v881 = vpop.f32.mrb[0].mxu0
        %v882 = vpop.f32.mrb[0].mxu0
        %v883 = vadd.f32 %v590, %v882
        %v884 = vpop.f32.mrb[0].mxu0
        %885 = vmatprep.mubr.bf16.mxu0 0
        %886 = vmatmul.mubr.bf16.gmra.mrb[0].mxu0 %v731
        %v887 = vpop.f32.mrb[0].mxu0
        %v888 = vadd.f32 %v590, %v887
        %v889 = vpop.f32.mrb[0].mxu0
        %v890 = vpop.f32.mrb[0].mxu0
        %v891 = vadd.f32 %v590, %v890
        %v892 = vpop.f32.mrb[0].mxu0
        %893 = vdwg.mxu0
        %v894 = vsub.f32 0.0, %v768
        %v895 = vsub.f32 0.0, %v771
        %v896 = vsub.f32 0.0, %v776
        %v897 = vsub.f32 0.0, %v779
        %v898 = vsub.f32 0.0, %v784
        %v899 = vsub.f32 0.0, %v787
        %v900 = vsub.f32 0.0, %v792
        %v901 = vsub.f32 0.0, %v795
        %v902 = vsub.f32 0.0, %v800
        %v903 = vsub.f32 0.0, %v803
        %v904 = vsub.f32 0.0, %v808
        %v905 = vsub.f32 0.0, %v811
        %v906 = vsub.f32 0.0, %v816
        %v907 = vsub.f32 0.0, %v819
        %v908 = vsub.f32 0.0, %v824
        %v909 = vsub.f32 0.0, %v827
        %v910 = vsub.f32 0.0, %v832
        %v911 = vsub.f32 0.0, %v835
        %v912 = vsub.f32 0.0, %v840
        %v913 = vsub.f32 0.0, %v843
        %v914 = vsub.f32 0.0, %v848
        %v915 = vsub.f32 0.0, %v851
        %v916 = vsub.f32 0.0, %v856
        %v917 = vsub.f32 0.0, %v859
        %v918 = vsub.f32 0.0, %v864
        %v919 = vsub.f32 0.0, %v867
        %v920 = vsub.f32 0.0, %v872
        %v921 = vsub.f32 0.0, %v875
        %v922 = vsub.f32 0.0, %v880
        %v923 = vsub.f32 0.0, %v883
        %v924 = vsub.f32 0.0, %v888
        %v925 = vsub.f32 0.0, %v891
        %v926 = vmul.f32 %v894, 1.442695
        %v927 = vpow.pop %v926
        %v928 = vmul.f32 %v895, 1.442695
        %v929 = vpow.pop %v928
        %v930 = vmul.f32 %v896, 1.442695
        %v931 = vpow.pop %v930
        %v932 = vmul.f32 %v897, 1.442695
        %v933 = vpow.pop %v932
        %v934 = vmul.f32 %v898, 1.442695
        %v935 = vpow.pop %v934
        %v936 = vmul.f32 %v899, 1.442695
        %v937 = vpow.pop %v936
        %v938 = vmul.f32 %v900, 1.442695
        %v939 = vpow.pop %v938
        %v940 = vmul.f32 %v901, 1.442695
        %v941 = vpow.pop %v940
        %v942 = vmul.f32 %v902, 1.442695
        %v943 = vpow.pop %v942
        %v944 = vmul.f32 %v903, 1.442695
        %v945 = vpow.pop %v944
        %v946 = vmul.f32 %v904, 1.442695
        %v947 = vpow.pop %v946
        %v948 = vmul.f32 %v905, 1.442695
        %v949 = vpow.pop %v948
        %v950 = vmul.f32 %v906, 1.442695
        %v951 = vpow.pop %v950
        %v952 = vmul.f32 %v907, 1.442695
        %v953 = vpow.pop %v952
        %v954 = vmul.f32 %v908, 1.442695
        %v955 = vpow.pop %v954
        %v956 = vmul.f32 %v909, 1.442695
        %v957 = vpow.pop %v956
        %v958 = vmul.f32 %v910, 1.442695
        %v959 = vpow.pop %v958
        %v960 = vmul.f32 %v911, 1.442695
        %v961 = vpow.pop %v960
        %v962 = vmul.f32 %v912, 1.442695
        %v963 = vpow.pop %v962
        %v964 = vmul.f32 %v913, 1.442695
        %v965 = vpow.pop %v964
        %v966 = vmul.f32 %v914, 1.442695
        %v967 = vpow.pop %v966
        %v968 = vmul.f32 %v915, 1.442695
        %v969 = vpow.pop %v968
        %v970 = vmul.f32 %v916, 1.442695
        %v971 = vpow.pop %v970
        %v972 = vmul.f32 %v917, 1.442695
        %v973 = vpow.pop %v972
        %v974 = vmul.f32 %v918, 1.442695
        %v975 = vpow.pop %v974
        %v976 = vmul.f32 %v919, 1.442695
        %v977 = vpow.pop %v976
        %v978 = vmul.f32 %v920, 1.442695
        %v979 = vpow.pop %v978
        %v980 = vmul.f32 %v921, 1.442695
        %v981 = vpow.pop %v980
        %v982 = vmul.f32 %v922, 1.442695
        %v983 = vpow.pop %v982
        %v984 = vmul.f32 %v923, 1.442695
        %v985 = vpow.pop %v984
        %v986 = vmul.f32 %v924, 1.442695
        %v987 = vpow.pop %v986
        %v988 = vmul.f32 %v925, 1.442695
        %v989 = vpow.pop %v988
        %v990 = vadd.f32 %v927, 1.0
        %v991 = vadd.f32 %v929, 1.0
        %v992 = vadd.f32 %v931, 1.0
        %v993 = vadd.f32 %v933, 1.0
        %v994 = vadd.f32 %v935, 1.0
        %v995 = vadd.f32 %v937, 1.0
        %v996 = vadd.f32 %v939, 1.0
        %v997 = vadd.f32 %v941, 1.0
        %v998 = vadd.f32 %v943, 1.0
        %v999 = vadd.f32 %v945, 1.0
        %v1000 = vadd.f32 %v947, 1.0
        %v1001 = vadd.f32 %v949, 1.0
        %v1002 = vadd.f32 %v951, 1.0
        %v1003 = vadd.f32 %v953, 1.0
        %v1004 = vadd.f32 %v955, 1.0
        %v1005 = vadd.f32 %v957, 1.0
        %v1006 = vadd.f32 %v959, 1.0
        %v1007 = vadd.f32 %v961, 1.0
        %v1008 = vadd.f32 %v963, 1.0
        %v1009 = vadd.f32 %v965, 1.0
        %v1010 = vadd.f32 %v967, 1.0
        %v1011 = vadd.f32 %v969, 1.0
        %v1012 = vadd.f32 %v971, 1.0
        %v1013 = vadd.f32 %v973, 1.0
        %v1014 = vadd.f32 %v975, 1.0
        %v1015 = vadd.f32 %v977, 1.0
        %v1016 = vadd.f32 %v979, 1.0
        %v1017 = vadd.f32 %v981, 1.0
        %v1018 = vadd.f32 %v983, 1.0
        %v1019 = vadd.f32 %v985, 1.0
        %v1020 = vadd.f32 %v987, 1.0
        %v1021 = vadd.f32 %v989, 1.0
        %v1022 = vrcp.pop %v990
        %v1023 = vmul.f32 1.0, %v1022
        %v1024 = vrcp.pop %v991
        %v1025 = vmul.f32 1.0, %v1024
        %v1026 = vrcp.pop %v992
        %v1027 = vmul.f32 1.0, %v1026
        %v1028 = vrcp.pop %v993
        %v1029 = vmul.f32 1.0, %v1028
        %v1030 = vrcp.pop %v994
        %v1031 = vmul.f32 1.0, %v1030
        %v1032 = vrcp.pop %v995
        %v1033 = vmul.f32 1.0, %v1032
        %v1034 = vrcp.pop %v996
        %v1035 = vmul.f32 1.0, %v1034
        %v1036 = vrcp.pop %v997
        %v1037 = vmul.f32 1.0, %v1036
        %v1038 = vrcp.pop %v998
        %v1039 = vmul.f32 1.0, %v1038
        %v1040 = vrcp.pop %v999
        %v1041 = vmul.f32 1.0, %v1040
        %v1042 = vrcp.pop %v1000
        %v1043 = vmul.f32 1.0, %v1042
        %v1044 = vrcp.pop %v1001
        %v1045 = vmul.f32 1.0, %v1044
        %v1046 = vrcp.pop %v1002
        %v1047 = vmul.f32 1.0, %v1046
        %v1048 = vrcp.pop %v1003
        %v1049 = vmul.f32 1.0, %v1048
        %v1050 = vrcp.pop %v1004
        %v1051 = vmul.f32 1.0, %v1050
        %v1052 = vrcp.pop %v1005
        %v1053 = vmul.f32 1.0, %v1052
        %v1054 = vrcp.pop %v1006
        %v1055 = vmul.f32 1.0, %v1054
        %v1056 = vrcp.pop %v1007
        %v1057 = vmul.f32 1.0, %v1056
        %v1058 = vrcp.pop %v1008
        %v1059 = vmul.f32 1.0, %v1058
        %v1060 = vrcp.pop %v1009
        %v1061 = vmul.f32 1.0, %v1060
        %v1062 = vrcp.pop %v1010
        %v1063 = vmul.f32 1.0, %v1062
        %v1064 = vrcp.pop %v1011
        %v1065 = vmul.f32 1.0, %v1064
        %v1066 = vrcp.pop %v1012
        %v1067 = vmul.f32 1.0, %v1066
        %v1068 = vrcp.pop %v1013
        %v1069 = vmul.f32 1.0, %v1068
        %v1070 = vrcp.pop %v1014
        %v1071 = vmul.f32 1.0, %v1070
        %v1072 = vrcp.pop %v1015
        %v1073 = vmul.f32 1.0, %v1072
        %v1074 = vrcp.pop %v1016
        %v1075 = vmul.f32 1.0, %v1074
        %v1076 = vrcp.pop %v1017
        %v1077 = vmul.f32 1.0, %v1076
        %v1078 = vrcp.pop %v1018
        %v1079 = vmul.f32 1.0, %v1078
        %v1080 = vrcp.pop %v1019
        %v1081 = vmul.f32 1.0, %v1080
        %v1082 = vrcp.pop %v1020
        %v1083 = vmul.f32 1.0, %v1082
        %v1084 = vrcp.pop %v1021
        %v1085 = vmul.f32 1.0, %v1084
        %v1086 = vmul.f32 %v768, %v1023
        %v1087 = vmul.f32 %v771, %v1025
        %v1088 = vmul.f32 %v776, %v1027
        %v1089 = vmul.f32 %v779, %v1029
        %v1090 = vmul.f32 %v784, %v1031
        %v1091 = vmul.f32 %v787, %v1033
        %v1092 = vmul.f32 %v792, %v1035
        %v1093 = vmul.f32 %v795, %v1037
        %v1094 = vmul.f32 %v800, %v1039
        %v1095 = vmul.f32 %v803, %v1041
        %v1096 = vmul.f32 %v808, %v1043
        %v1097 = vmul.f32 %v811, %v1045
        %v1098 = vmul.f32 %v816, %v1047
        %v1099 = vmul.f32 %v819, %v1049
        %v1100 = vmul.f32 %v824, %v1051
        %v1101 = vmul.f32 %v827, %v1053
        %v1102 = vmul.f32 %v832, %v1055
        %v1103 = vmul.f32 %v835, %v1057
        %v1104 = vmul.f32 %v840, %v1059
        %v1105 = vmul.f32 %v843, %v1061
        %v1106 = vmul.f32 %v848, %v1063
        %v1107 = vmul.f32 %v851, %v1065
        %v1108 = vmul.f32 %v856, %v1067
        %v1109 = vmul.f32 %v859, %v1069
        %v1110 = vmul.f32 %v864, %v1071
        %v1111 = vmul.f32 %v867, %v1073
        %v1112 = vmul.f32 %v872, %v1075
        %v1113 = vmul.f32 %v875, %v1077
        %v1114 = vmul.f32 %v880, %v1079
        %v1115 = vmul.f32 %v883, %v1081
        %v1116 = vmul.f32 %v888, %v1083
        %v1117 = vmul.f32 %v891, %v1085
        %v1118 = vpack.c.bf16 %v1087, %v1086
        %v1119 = vpack.c.bf16 %v1089, %v1088
        %v1120 = vpack.c.bf16 %v1091, %v1090
        %v1121 = vpack.c.bf16 %v1093, %v1092
        %v1122 = vpack.c.bf16 %v1095, %v1094
        %v1123 = vpack.c.bf16 %v1097, %v1096
        %v1124 = vpack.c.bf16 %v1099, %v1098
        %v1125 = vpack.c.bf16 %v1101, %v1100
        %v1126 = vpack.c.bf16 %v1103, %v1102
        %v1127 = vpack.c.bf16 %v1105, %v1104
        %v1128 = vpack.c.bf16 %v1107, %v1106
        %v1129 = vpack.c.bf16 %v1109, %v1108
        %v1130 = vpack.c.bf16 %v1111, %v1110
        %v1131 = vpack.c.bf16 %v1113, %v1112
        %v1132 = vpack.c.bf16 %v1115, %v1114
        %v1133 = vpack.c.bf16 %v1117, %v1116
        %v1134 = vld [vmem:[%s4] sm:$0xf]
        %v1135 = vld [vmem:[%s4 + $0x4] sm:$0xf]
        %v1136 = vld [vmem:[%s4 + $0x8] sm:$0xf]
        %v1137 = vld [vmem:[%s5] sm:$0x1]
        %v1139 = vlaneseq
        %v1140 = vshrl.u32 %v1139, 7
        %v1141 = vsub.s32 0, %v1140
        %v1142 = vrot.slane %v1137, %v1141
        %v1147 = vunpack.c.l.b16 %v1134
        %v1148 = vunpack.c.l.b16 %v1135
        %v1149 = vunpack.c.l.b16 %v1136
        %v1150 = vpack.c.b16 %v1148, %v1147
        %v1151 = vpack.c.b16 %v1149, %v1149
        %vm1153 = vcmask 195584
        %v1155 = vsel %vm1153, %v1118, 0
        %v1158 = vsel %vm1153, %v1119, 0
        %v1161 = vsel %vm1153, %v1120, 0
        %v1164 = vsel %vm1153, %v1121, 0
        %v1167 = vsel %vm1153, %v1122, 0
        %v1170 = vsel %vm1153, %v1123, 0
        %v1173 = vsel %vm1153, %v1124, 0
        %v1176 = vsel %vm1153, %v1125, 0
        %v1179 = vsel %vm1153, %v1126, 0
        %v1182 = vsel %vm1153, %v1127, 0
        %v1185 = vsel %vm1153, %v1128, 0
        %v1188 = vsel %vm1153, %v1129, 0
        %v1191 = vsel %vm1153, %v1130, 0
        %v1194 = vsel %vm1153, %v1131, 0
        %v1197 = vsel %vm1153, %v1132, 0
        %v1200 = vsel %vm1153, %v1133, 0
        %vm1202 = vcmask 1043456
        %v1204 = vsel %vm1202, %v1151, 0
        %1206 = vmatprep.subr.bf16.mxu0 0
        %1207 = vmatpush1.bf16.msra.mxu0 %v1150
        %1208 = vmatprep.subr.bf16.mxu0 0
        %1209 = vmatpush1.bf16.msra.mxu0 %v1204
        %1210 = vmatprep.subr.bf16.mxu0 0
        %1211 = vmatpush1.bf16.msra.mxu0 0
        %1212 = vmatprep.subr.bf16.mxu0 0
        %1213 = vmatpush1.bf16.msra.mxu0 0
        %1214 = vmatprep.subr.bf16.mxu0 0
        %1215 = vmatpush1.bf16.msra.mxu0 0
        %1216 = vmatprep.subr.bf16.mxu0 0
        %1217 = vmatpush1.bf16.msra.mxu0 0
        %1218 = vmatprep.subr.bf16.mxu0 0
        %1219 = vmatpush1.bf16.msra.mxu0 0
        %1220 = vmatprep.subr.bf16.mxu0 0
        %1221 = vmatpush1.bf16.msra.mxu0 0
        %1222 = vmatprep.subr.bf16.mxu0 0
        %1223 = vmatpush1.bf16.msra.mxu0 0
        %1224 = vmatprep.subr.bf16.mxu0 0
        %1225 = vmatpush1.bf16.msra.mxu0 0
        %1226 = vmatprep.subr.bf16.mxu0 0
        %1227 = vmatpush1.bf16.msra.mxu0 0
        %1228 = vmatprep.subr.bf16.mxu0 0
        %1229 = vmatpush1.bf16.msra.mxu0 0
        %1230 = vmatprep.subr.bf16.mxu0 0
        %1231 = vmatpush1.bf16.msra.mxu0 0
        %1232 = vmatprep.subr.bf16.mxu0 0
        %1233 = vmatpush1.bf16.msra.mxu0 0
        %1234 = vmatprep.subr.bf16.mxu0 0
        %1235 = vmatpush1.bf16.msra.mxu0 0
        %1236 = vmatprep.subr.bf16.mxu0 0
        %1237 = vmatpush1.bf16.msra.mxu0 0
        %1238 = vmatprep.mubr.bf16.mxu0 0
        %1239 = vmatmul.mubr.bf16.gmra.mrb[0].mxu0 %v1155
        %v1240 = vpop.f32.mrb[0].mxu0
        %v1241 = vadd.f32 %v1142, %v1240
        %v1242 = vpop.f32.mrb[0].mxu0
        %v1243 = vpop.f32.mrb[0].mxu0
        %v1244 = vadd.f32 %v1142, %v1243
        %v1245 = vpop.f32.mrb[0].mxu0
        %1246 = vmatprep.mubr.bf16.mxu0 0
        %1247 = vmatmul.mubr.bf16.gmra.mrb[0].mxu0 %v1158
        %v1248 = vpop.f32.mrb[0].mxu0
        %v1249 = vadd.f32 %v1142, %v1248
        %v1250 = vpop.f32.mrb[0].mxu0
        %v1251 = vpop.f32.mrb[0].mxu0
        %v1252 = vadd.f32 %v1142, %v1251
        %v1253 = vpop.f32.mrb[0].mxu0
        %1254 = vmatprep.mubr.bf16.mxu0 0
        %1255 = vmatmul.mubr.bf16.gmra.mrb[0].mxu0 %v1161
        %v1256 = vpop.f32.mrb[0].mxu0
        %v1257 = vadd.f32 %v1142, %v1256
        %v1258 = vpop.f32.mrb[0].mxu0
        %v1259 = vpop.f32.mrb[0].mxu0
        %v1260 = vadd.f32 %v1142, %v1259
        %v1261 = vpop.f32.mrb[0].mxu0
        %1262 = vmatprep.mubr.bf16.mxu0 0
        %1263 = vmatmul.mubr.bf16.gmra.mrb[0].mxu0 %v1164
        %v1264 = vpop.f32.mrb[0].mxu0
        %v1265 = vadd.f32 %v1142, %v1264
        %v1266 = vpop.f32.mrb[0].mxu0
        %v1267 = vpop.f32.mrb[0].mxu0
        %v1268 = vadd.f32 %v1142, %v1267
        %v1269 = vpop.f32.mrb[0].mxu0
        %1270 = vmatprep.mubr.bf16.mxu0 0
        %1271 = vmatmul.mubr.bf16.gmra.mrb[0].mxu0 %v1167
        %v1272 = vpop.f32.mrb[0].mxu0
        %v1273 = vadd.f32 %v1142, %v1272
        %v1274 = vpop.f32.mrb[0].mxu0
        %v1275 = vpop.f32.mrb[0].mxu0
        %v1276 = vadd.f32 %v1142, %v1275
        %v1277 = vpop.f32.mrb[0].mxu0
        %1278 = vmatprep.mubr.bf16.mxu0 0
        %1279 = vmatmul.mubr.bf16.gmra.mrb[0].mxu0 %v1170
        %v1280 = vpop.f32.mrb[0].mxu0
        %v1281 = vadd.f32 %v1142, %v1280
        %v1282 = vpop.f32.mrb[0].mxu0
        %v1283 = vpop.f32.mrb[0].mxu0
        %v1284 = vadd.f32 %v1142, %v1283
        %v1285 = vpop.f32.mrb[0].mxu0
        %1286 = vmatprep.mubr.bf16.mxu0 0
        %1287 = vmatmul.mubr.bf16.gmra.mrb[0].mxu0 %v1173
        %v1288 = vpop.f32.mrb[0].mxu0
        %v1289 = vadd.f32 %v1142, %v1288
        %v1290 = vpop.f32.mrb[0].mxu0
        %v1291 = vpop.f32.mrb[0].mxu0
        %v1292 = vadd.f32 %v1142, %v1291
        %v1293 = vpop.f32.mrb[0].mxu0
        %1294 = vmatprep.mubr.bf16.mxu0 0
        %1295 = vmatmul.mubr.bf16.gmra.mrb[0].mxu0 %v1176
        %v1296 = vpop.f32.mrb[0].mxu0
        %v1297 = vadd.f32 %v1142, %v1296
        %v1298 = vpop.f32.mrb[0].mxu0
        %v1299 = vpop.f32.mrb[0].mxu0
        %v1300 = vadd.f32 %v1142, %v1299
        %v1301 = vpop.f32.mrb[0].mxu0
        %1302 = vmatprep.mubr.bf16.mxu0 0
        %1303 = vmatmul.mubr.bf16.gmra.mrb[0].mxu0 %v1179
        %v1304 = vpop.f32.mrb[0].mxu0
        %v1305 = vadd.f32 %v1142, %v1304
        %v1306 = vpop.f32.mrb[0].mxu0
        %v1307 = vpop.f32.mrb[0].mxu0
        %v1308 = vadd.f32 %v1142, %v1307
        %v1309 = vpop.f32.mrb[0].mxu0
        %1310 = vmatprep.mubr.bf16.mxu0 0
        %1311 = vmatmul.mubr.bf16.gmra.mrb[0].mxu0 %v1182
        %v1312 = vpop.f32.mrb[0].mxu0
        %v1313 = vadd.f32 %v1142, %v1312
        %v1314 = vpop.f32.mrb[0].mxu0
        %v1315 = vpop.f32.mrb[0].mxu0
        %v1316 = vadd.f32 %v1142, %v1315
        %v1317 = vpop.f32.mrb[0].mxu0
        %1318 = vmatprep.mubr.bf16.mxu0 0
        %1319 = vmatmul.mubr.bf16.gmra.mrb[0].mxu0 %v1185
        %v1320 = vpop.f32.mrb[0].mxu0
        %v1321 = vadd.f32 %v1142, %v1320
        %v1322 = vpop.f32.mrb[0].mxu0
        %v1323 = vpop.f32.mrb[0].mxu0
        %v1324 = vadd.f32 %v1142, %v1323
        %v1325 = vpop.f32.mrb[0].mxu0
        %1326 = vmatprep.mubr.bf16.mxu0 0
        %1327 = vmatmul.mubr.bf16.gmra.mrb[0].mxu0 %v1188
        %v1328 = vpop.f32.mrb[0].mxu0
        %v1329 = vadd.f32 %v1142, %v1328
        %v1330 = vpop.f32.mrb[0].mxu0
        %v1331 = vpop.f32.mrb[0].mxu0
        %v1332 = vadd.f32 %v1142, %v1331
        %v1333 = vpop.f32.mrb[0].mxu0
        %1334 = vmatprep.mubr.bf16.mxu0 0
        %1335 = vmatmul.mubr.bf16.gmra.mrb[0].mxu0 %v1191
        %v1336 = vpop.f32.mrb[0].mxu0
        %v1337 = vadd.f32 %v1142, %v1336
        %v1338 = vpop.f32.mrb[0].mxu0
        %v1339 = vpop.f32.mrb[0].mxu0
        %v1340 = vadd.f32 %v1142, %v1339
        %v1341 = vpop.f32.mrb[0].mxu0
        %1342 = vmatprep.mubr.bf16.mxu0 0
        %1343 = vmatmul.mubr.bf16.gmra.mrb[0].mxu0 %v1194
        %v1344 = vpop.f32.mrb[0].mxu0
        %v1345 = vadd.f32 %v1142, %v1344
        %v1346 = vpop.f32.mrb[0].mxu0
        %v1347 = vpop.f32.mrb[0].mxu0
        %v1348 = vadd.f32 %v1142, %v1347
        %v1349 = vpop.f32.mrb[0].mxu0
        %1350 = vmatprep.mubr.bf16.mxu0 0
        %1351 = vmatmul.mubr.bf16.gmra.mrb[0].mxu0 %v1197
        %v1352 = vpop.f32.mrb[0].mxu0
        %v1353 = vadd.f32 %v1142, %v1352
        %v1354 = vpop.f32.mrb[0].mxu0
        %v1355 = vpop.f32.mrb[0].mxu0
        %v1356 = vadd.f32 %v1142, %v1355
        %v1357 = vpop.f32.mrb[0].mxu0
        %1358 = vmatprep.mubr.bf16.mxu0 0
        %1359 = vmatmul.mubr.bf16.gmra.mrb[0].mxu0 %v1200
        %v1360 = vpop.f32.mrb[0].mxu0
        %v1361 = vadd.f32 %v1142, %v1360
        %v1362 = vpop.f32.mrb[0].mxu0
        %v1363 = vpop.f32.mrb[0].mxu0
        %v1364 = vadd.f32 %v1142, %v1363
        %v1365 = vpop.f32.mrb[0].mxu0
        %1366 = vdwg.mxu0
        %v1367 = vsub.f32 0.0, %v1241
        %v1368 = vsub.f32 0.0, %v1244
        %v1369 = vsub.f32 0.0, %v1249
        %v1370 = vsub.f32 0.0, %v1252
        %v1371 = vsub.f32 0.0, %v1257
        %v1372 = vsub.f32 0.0, %v1260
        %v1373 = vsub.f32 0.0, %v1265
        %v1374 = vsub.f32 0.0, %v1268
        %v1375 = vsub.f32 0.0, %v1273
        %v1376 = vsub.f32 0.0, %v1276
        %v1377 = vsub.f32 0.0, %v1281
        %v1378 = vsub.f32 0.0, %v1284
        %v1379 = vsub.f32 0.0, %v1289
        %v1380 = vsub.f32 0.0, %v1292
        %v1381 = vsub.f32 0.0, %v1297
        %v1382 = vsub.f32 0.0, %v1300
        %v1383 = vsub.f32 0.0, %v1305
        %v1384 = vsub.f32 0.0, %v1308
        %v1385 = vsub.f32 0.0, %v1313
        %v1386 = vsub.f32 0.0, %v1316
        %v1387 = vsub.f32 0.0, %v1321
        %v1388 = vsub.f32 0.0, %v1324
        %v1389 = vsub.f32 0.0, %v1329
        %v1390 = vsub.f32 0.0, %v1332
        %v1391 = vsub.f32 0.0, %v1337
        %v1392 = vsub.f32 0.0, %v1340
        %v1393 = vsub.f32 0.0, %v1345
        %v1394 = vsub.f32 0.0, %v1348
        %v1395 = vsub.f32 0.0, %v1353
        %v1396 = vsub.f32 0.0, %v1356
        %v1397 = vsub.f32 0.0, %v1361
        %v1398 = vsub.f32 0.0, %v1364
        %v1399 = vmul.f32 %v1367, 1.442695
        %v1400 = vpow.pop %v1399
        %v1401 = vmul.f32 %v1368, 1.442695
        %v1402 = vpow.pop %v1401
        %v1403 = vmul.f32 %v1369, 1.442695
        %v1404 = vpow.pop %v1403
        %v1405 = vmul.f32 %v1370, 1.442695
        %v1406 = vpow.pop %v1405
        %v1407 = vmul.f32 %v1371, 1.442695
        %v1408 = vpow.pop %v1407
        %v1409 = vmul.f32 %v1372, 1.442695
        %v1410 = vpow.pop %v1409
        %v1411 = vmul.f32 %v1373, 1.442695
        %v1412 = vpow.pop %v1411
        %v1413 = vmul.f32 %v1374, 1.442695
        %v1414 = vpow.pop %v1413
        %v1415 = vmul.f32 %v1375, 1.442695
        %v1416 = vpow.pop %v1415
        %v1417 = vmul.f32 %v1376, 1.442695
        %v1418 = vpow.pop %v1417
        %v1419 = vmul.f32 %v1377, 1.442695
        %v1420 = vpow.pop %v1419
        %v1421 = vmul.f32 %v1378, 1.442695
        %v1422 = vpow.pop %v1421
        %v1423 = vmul.f32 %v1379, 1.442695
        %v1424 = vpow.pop %v1423
        %v1425 = vmul.f32 %v1380, 1.442695
        %v1426 = vpow.pop %v1425
        %v1427 = vmul.f32 %v1381, 1.442695
        %v1428 = vpow.pop %v1427
        %v1429 = vmul.f32 %v1382, 1.442695
        %v1430 = vpow.pop %v1429
        %v1431 = vmul.f32 %v1383, 1.442695
        %v1432 = vpow.pop %v1431
        %v1433 = vmul.f32 %v1384, 1.442695
        %v1434 = vpow.pop %v1433
        %v1435 = vmul.f32 %v1385, 1.442695
        %v1436 = vpow.pop %v1435
        %v1437 = vmul.f32 %v1386, 1.442695
        %v1438 = vpow.pop %v1437
        %v1439 = vmul.f32 %v1387, 1.442695
        %v1440 = vpow.pop %v1439
        %v1441 = vmul.f32 %v1388, 1.442695
        %v1442 = vpow.pop %v1441
        %v1443 = vmul.f32 %v1389, 1.442695
        %v1444 = vpow.pop %v1443
        %v1445 = vmul.f32 %v1390, 1.442695
        %v1446 = vpow.pop %v1445
        %v1447 = vmul.f32 %v1391, 1.442695
        %v1448 = vpow.pop %v1447
        %v1449 = vmul.f32 %v1392, 1.442695
        %v1450 = vpow.pop %v1449
        %v1451 = vmul.f32 %v1393, 1.442695
        %v1452 = vpow.pop %v1451
        %v1453 = vmul.f32 %v1394, 1.442695
        %v1454 = vpow.pop %v1453
        %v1455 = vmul.f32 %v1395, 1.442695
        %v1456 = vpow.pop %v1455
        %v1457 = vmul.f32 %v1396, 1.442695
        %v1458 = vpow.pop %v1457
        %v1459 = vmul.f32 %v1397, 1.442695
        %v1460 = vpow.pop %v1459
        %v1461 = vmul.f32 %v1398, 1.442695
        %v1462 = vpow.pop %v1461
        %v1463 = vadd.f32 %v1400, 1.0
        %v1464 = vadd.f32 %v1402, 1.0
        %v1465 = vadd.f32 %v1404, 1.0
        %v1466 = vadd.f32 %v1406, 1.0
        %v1467 = vadd.f32 %v1408, 1.0
        %v1468 = vadd.f32 %v1410, 1.0
        %v1469 = vadd.f32 %v1412, 1.0
        %v1470 = vadd.f32 %v1414, 1.0
        %v1471 = vadd.f32 %v1416, 1.0
        %v1472 = vadd.f32 %v1418, 1.0
        %v1473 = vadd.f32 %v1420, 1.0
        %v1474 = vadd.f32 %v1422, 1.0
        %v1475 = vadd.f32 %v1424, 1.0
        %v1476 = vadd.f32 %v1426, 1.0
        %v1477 = vadd.f32 %v1428, 1.0
        %v1478 = vadd.f32 %v1430, 1.0
        %v1479 = vadd.f32 %v1432, 1.0
        %v1480 = vadd.f32 %v1434, 1.0
        %v1481 = vadd.f32 %v1436, 1.0
        %v1482 = vadd.f32 %v1438, 1.0
        %v1483 = vadd.f32 %v1440, 1.0
        %v1484 = vadd.f32 %v1442, 1.0
        %v1485 = vadd.f32 %v1444, 1.0
        %v1486 = vadd.f32 %v1446, 1.0
        %v1487 = vadd.f32 %v1448, 1.0
        %v1488 = vadd.f32 %v1450, 1.0
        %v1489 = vadd.f32 %v1452, 1.0
        %v1490 = vadd.f32 %v1454, 1.0
        %v1491 = vadd.f32 %v1456, 1.0
        %v1492 = vadd.f32 %v1458, 1.0
        %v1493 = vadd.f32 %v1460, 1.0
        %v1494 = vadd.f32 %v1462, 1.0
        %v1495 = vrcp.pop %v1463
        %v1496 = vmul.f32 1.0, %v1495
        %v1497 = vrcp.pop %v1464
        %v1498 = vmul.f32 1.0, %v1497
        %v1499 = vrcp.pop %v1465
        %v1500 = vmul.f32 1.0, %v1499
        %v1501 = vrcp.pop %v1466
        %v1502 = vmul.f32 1.0, %v1501
        %v1503 = vrcp.pop %v1467
        %v1504 = vmul.f32 1.0, %v1503
        %v1505 = vrcp.pop %v1468
        %v1506 = vmul.f32 1.0, %v1505
        %v1507 = vrcp.pop %v1469
        %v1508 = vmul.f32 1.0, %v1507
        %v1509 = vrcp.pop %v1470
        %v1510 = vmul.f32 1.0, %v1509
        %v1511 = vrcp.pop %v1471
        %v1512 = vmul.f32 1.0, %v1511
        %v1513 = vrcp.pop %v1472
        %v1514 = vmul.f32 1.0, %v1513
        %v1515 = vrcp.pop %v1473
        %v1516 = vmul.f32 1.0, %v1515
        %v1517 = vrcp.pop %v1474
        %v1518 = vmul.f32 1.0, %v1517
        %v1519 = vrcp.pop %v1475
        %v1520 = vmul.f32 1.0, %v1519
        %v1521 = vrcp.pop %v1476
        %v1522 = vmul.f32 1.0, %v1521
        %v1523 = vrcp.pop %v1477
        %v1524 = vmul.f32 1.0, %v1523
        %v1525 = vrcp.pop %v1478
        %v1526 = vmul.f32 1.0, %v1525
        %v1527 = vrcp.pop %v1479
        %v1528 = vmul.f32 1.0, %v1527
        %v1529 = vrcp.pop %v1480
        %v1530 = vmul.f32 1.0, %v1529
        %v1531 = vrcp.pop %v1481
        %v1532 = vmul.f32 1.0, %v1531
        %v1533 = vrcp.pop %v1482
        %v1534 = vmul.f32 1.0, %v1533
        %v1535 = vrcp.pop %v1483
        %v1536 = vmul.f32 1.0, %v1535
        %v1537 = vrcp.pop %v1484
        %v1538 = vmul.f32 1.0, %v1537
        %v1539 = vrcp.pop %v1485
        %v1540 = vmul.f32 1.0, %v1539
        %v1541 = vrcp.pop %v1486
        %v1542 = vmul.f32 1.0, %v1541
        %v1543 = vrcp.pop %v1487
        %v1544 = vmul.f32 1.0, %v1543
        %v1545 = vrcp.pop %v1488
        %v1546 = vmul.f32 1.0, %v1545
        %v1547 = vrcp.pop %v1489
        %v1548 = vmul.f32 1.0, %v1547
        %v1549 = vrcp.pop %v1490
        %v1550 = vmul.f32 1.0, %v1549
        %v1551 = vrcp.pop %v1491
        %v1552 = vmul.f32 1.0, %v1551
        %v1553 = vrcp.pop %v1492
        %v1554 = vmul.f32 1.0, %v1553
        %v1555 = vrcp.pop %v1493
        %v1556 = vmul.f32 1.0, %v1555
        %v1557 = vrcp.pop %v1494
        %v1558 = vmul.f32 1.0, %v1557
        %v1559 = vmul.f32 %v1241, %v1496
        %v1560 = vmul.f32 %v1244, %v1498
        %v1561 = vmul.f32 %v1249, %v1500
        %v1562 = vmul.f32 %v1252, %v1502
        %v1563 = vmul.f32 %v1257, %v1504
        %v1564 = vmul.f32 %v1260, %v1506
        %v1565 = vmul.f32 %v1265, %v1508
        %v1566 = vmul.f32 %v1268, %v1510
        %v1567 = vmul.f32 %v1273, %v1512
        %v1568 = vmul.f32 %v1276, %v1514
        %v1569 = vmul.f32 %v1281, %v1516
        %v1570 = vmul.f32 %v1284, %v1518
        %v1571 = vmul.f32 %v1289, %v1520
        %v1572 = vmul.f32 %v1292, %v1522
        %v1573 = vmul.f32 %v1297, %v1524
        %v1574 = vmul.f32 %v1300, %v1526
        %v1575 = vmul.f32 %v1305, %v1528
        %v1576 = vmul.f32 %v1308, %v1530
        %v1577 = vmul.f32 %v1313, %v1532
        %v1578 = vmul.f32 %v1316, %v1534
        %v1579 = vmul.f32 %v1321, %v1536
        %v1580 = vmul.f32 %v1324, %v1538
        %v1581 = vmul.f32 %v1329, %v1540
        %v1582 = vmul.f32 %v1332, %v1542
        %v1583 = vmul.f32 %v1337, %v1544
        %v1584 = vmul.f32 %v1340, %v1546
        %v1585 = vmul.f32 %v1345, %v1548
        %v1586 = vmul.f32 %v1348, %v1550
        %v1587 = vmul.f32 %v1353, %v1552
        %v1588 = vmul.f32 %v1356, %v1554
        %v1589 = vmul.f32 %v1361, %v1556
        %v1590 = vmul.f32 %v1364, %v1558
        %v1591 = vrot.slane %v1559, 7
        %v1592 = vrot.slane %v1560, 7
        %v1593 = vrot.slane %v1561, 7
        %v1594 = vrot.slane %v1562, 7
        %v1595 = vrot.slane %v1563, 7
        %v1596 = vrot.slane %v1564, 7
        %v1597 = vrot.slane %v1565, 7
        %v1598 = vrot.slane %v1566, 7
        %v1599 = vrot.slane %v1567, 7
        %v1600 = vrot.slane %v1568, 7
        %v1601 = vrot.slane %v1569, 7
        %v1602 = vrot.slane %v1570, 7
        %v1603 = vrot.slane %v1571, 7
        %v1604 = vrot.slane %v1572, 7
        %v1605 = vrot.slane %v1573, 7
        %v1606 = vrot.slane %v1574, 7
        %v1607 = vrot.slane %v1575, 7
        %v1608 = vrot.slane %v1576, 7
        %v1609 = vrot.slane %v1577, 7
        %v1610 = vrot.slane %v1578, 7
        %v1611 = vrot.slane %v1579, 7
        %v1612 = vrot.slane %v1580, 7
        %v1613 = vrot.slane %v1581, 7
        %v1614 = vrot.slane %v1582, 7
        %v1615 = vrot.slane %v1583, 7
        %v1616 = vrot.slane %v1584, 7
        %v1617 = vrot.slane %v1585, 7
        %v1618 = vrot.slane %v1586, 7
        %v1619 = vrot.slane %v1587, 7
        %v1620 = vrot.slane %v1588, 7
        %v1621 = vrot.slane %v1589, 7
        %v1622 = vrot.slane %v1590, 7
        %v1623 = vlaneseq
        %v1624 = vshrl.u32 %v1623, 7
        %vm1625 = vcmp.lt.s32.totalorder %v1624, 1
        %v1626 = vsel %vm1625, %v1621, %v1622
        %v1627 = vsel %vm1625, %v1620, %v1621
        %v1628 = vsel %vm1625, %v1619, %v1620
        %v1629 = vsel %vm1625, %v1618, %v1619
        %v1630 = vsel %vm1625, %v1617, %v1618
        %v1631 = vsel %vm1625, %v1616, %v1617
        %v1632 = vsel %vm1625, %v1615, %v1616
        %v1633 = vsel %vm1625, %v1614, %v1615
        %v1634 = vsel %vm1625, %v1613, %v1614
        %v1635 = vsel %vm1625, %v1612, %v1613
        %v1636 = vsel %vm1625, %v1611, %v1612
        %v1637 = vsel %vm1625, %v1610, %v1611
        %v1638 = vsel %vm1625, %v1609, %v1610
        %v1639 = vsel %vm1625, %v1608, %v1609
        %v1640 = vsel %vm1625, %v1607, %v1608
        %v1641 = vsel %vm1625, %v1606, %v1607
        %v1642 = vsel %vm1625, %v1605, %v1606
        %v1643 = vsel %vm1625, %v1604, %v1605
        %v1644 = vsel %vm1625, %v1603, %v1604
        %v1645 = vsel %vm1625, %v1602, %v1603
        %v1646 = vsel %vm1625, %v1601, %v1602
        %v1647 = vsel %vm1625, %v1600, %v1601
        %v1648 = vsel %vm1625, %v1599, %v1600
        %v1649 = vsel %vm1625, %v1598, %v1599
        %v1650 = vsel %vm1625, %v1597, %v1598
        %v1651 = vsel %vm1625, %v1596, %v1597
        %v1652 = vsel %vm1625, %v1595, %v1596
        %v1653 = vsel %vm1625, %v1594, %v1595
        %v1654 = vsel %vm1625, %v1593, %v1594
        %v1655 = vsel %vm1625, %v1592, %v1593
        %v1656 = vsel %vm1625, %v1591, %v1592
        %v1657 = vsel %vm1625, %v1622, %v1591
        %v1658 = vld [vmem:[%s1] sm:$0xff]
        %v1659 = vld [vmem:[%s1 + $0x8] sm:$0xff]
        %v1660 = vld [vmem:[%s1 + $0x10] sm:$0xff]
        %v1661 = vld [vmem:[%s1 + $0x18] sm:$0xff]
        %v1662 = vld [vmem:[%s1 + $0x20] sm:$0xff]
        %v1663 = vld [vmem:[%s1 + $0x28] sm:$0xff]
        %v1664 = vld [vmem:[%s1 + $0x30] sm:$0xff]
        %v1665 = vld [vmem:[%s1 + $0x38] sm:$0xff]
        %v1666 = vld [vmem:[%s1 + $0x40] sm:$0xff]
        %v1667 = vld [vmem:[%s1 + $0x48] sm:$0xff]
        %v1668 = vld [vmem:[%s1 + $0x50] sm:$0xff]
        %v1669 = vld [vmem:[%s1 + $0x58] sm:$0xff]
        %v1670 = vld [vmem:[%s1 + $0x60] sm:$0xff]
        %v1671 = vld [vmem:[%s1 + $0x68] sm:$0xff]
        %v1672 = vld [vmem:[%s1 + $0x70] sm:$0xff]
        %v1673 = vld [vmem:[%s1 + $0x78] sm:$0xff]
        %v1674 = vld [vmem:[%s1 + $0x80] sm:$0xff]
        %v1675 = vld [vmem:[%s1 + $0x88] sm:$0xff]
        %v1676 = vld [vmem:[%s1 + $0x90] sm:$0xff]
        %v1677 = vld [vmem:[%s1 + $0x98] sm:$0xff]
        %v1678 = vld [vmem:[%s1 + $0xa0] sm:$0xff]
        %v1679 = vld [vmem:[%s1 + $0xa8] sm:$0xff]
        %v1680 = vld [vmem:[%s1 + $0xb0] sm:$0xff]
        %v1681 = vld [vmem:[%s1 + $0xb8] sm:$0xff]
        %v1682 = vld [vmem:[%s1 + $0xc0] sm:$0xff]
        %v1683 = vld [vmem:[%s1 + $0xc8] sm:$0xff]
        %v1684 = vld [vmem:[%s1 + $0xd0] sm:$0xff]
        %v1685 = vld [vmem:[%s1 + $0xd8] sm:$0xff]
        %v1686 = vld [vmem:[%s1 + $0xe0] sm:$0xff]
        %v1687 = vld [vmem:[%s1 + $0xe8] sm:$0xff]
        %v1688 = vld [vmem:[%s1 + $0xf0] sm:$0xff]
        %v1689 = vld [vmem:[%s1 + $0xf8] sm:$0xff]
        %v1690 = vmul.f32 %v1627, %v1658
        %v1691 = vmul.f32 %v1626, %v1659
        %v1692 = vmul.f32 %v1657, %v1660
        %v1693 = vmul.f32 %v1656, %v1661
        %v1694 = vmul.f32 %v1655, %v1662
        %v1695 = vmul.f32 %v1654, %v1663
        %v1696 = vmul.f32 %v1653, %v1664
        %v1697 = vmul.f32 %v1652, %v1665
        %v1698 = vmul.f32 %v1651, %v1666
        %v1699 = vmul.f32 %v1650, %v1667
        %v1700 = vmul.f32 %v1649, %v1668
        %v1701 = vmul.f32 %v1648, %v1669
        %v1702 = vmul.f32 %v1647, %v1670
        %v1703 = vmul.f32 %v1646, %v1671
        %v1704 = vmul.f32 %v1645, %v1672
        %v1705 = vmul.f32 %v1644, %v1673
        %v1706 = vmul.f32 %v1643, %v1674
        %v1707 = vmul.f32 %v1642, %v1675
        %v1708 = vmul.f32 %v1641, %v1676
        %v1709 = vmul.f32 %v1640, %v1677
        %v1710 = vmul.f32 %v1639, %v1678
        %v1711 = vmul.f32 %v1638, %v1679
        %v1712 = vmul.f32 %v1637, %v1680
        %v1713 = vmul.f32 %v1636, %v1681
        %v1714 = vmul.f32 %v1635, %v1682
        %v1715 = vmul.f32 %v1634, %v1683
        %v1716 = vmul.f32 %v1633, %v1684
        %v1717 = vmul.f32 %v1632, %v1685
        %v1718 = vmul.f32 %v1631, %v1686
        %v1719 = vmul.f32 %v1630, %v1687
        %v1720 = vmul.f32 %v1629, %v1688
        %v1721 = vmul.f32 %v1628, %v1689
        %v1722 = vadd.f32 %v1690, 0.0
        %v1723 = vadd.f32 %v1691, 0.0
        %v1724 = vadd.f32 %v1692, 0.0
        %v1725 = vadd.f32 %v1693, 0.0
        %v1726 = vadd.f32 %v1694, 0.0
        %v1727 = vadd.f32 %v1695, 0.0
        %v1728 = vadd.f32 %v1696, 0.0
        %v1729 = vadd.f32 %v1697, 0.0
        %v1730 = vadd.f32 %v1698, 0.0
        %v1731 = vadd.f32 %v1699, 0.0
        %v1732 = vadd.f32 %v1700, 0.0
        %v1733 = vadd.f32 %v1701, 0.0
        %v1734 = vadd.f32 %v1702, 0.0
        %v1735 = vadd.f32 %v1703, 0.0
        %v1736 = vadd.f32 %v1704, 0.0
        %v1737 = vadd.f32 %v1705, 0.0
        %v1738 = vadd.f32 %v1706, 0.0
        %v1739 = vadd.f32 %v1707, 0.0
        %v1740 = vadd.f32 %v1708, 0.0
        %v1741 = vadd.f32 %v1709, 0.0
        %v1742 = vadd.f32 %v1710, 0.0
        %v1743 = vadd.f32 %v1711, 0.0
        %v1744 = vadd.f32 %v1712, 0.0
        %v1745 = vadd.f32 %v1713, 0.0
        %v1746 = vadd.f32 %v1714, 0.0
        %v1747 = vadd.f32 %v1715, 0.0
        %v1748 = vadd.f32 %v1716, 0.0
        %v1749 = vadd.f32 %v1717, 0.0
        %v1750 = vadd.f32 %v1718, 0.0
        %v1751 = vadd.f32 %v1719, 0.0
        %v1752 = vadd.f32 %v1720, 0.0
        %v1753 = vadd.f32 %v1721, 0.0
        %s1754 = scalar_lea.vmem %s1, 256
        %v1755 = vld [vmem:[%s1754] sm:$0xff]
        %v1756 = vld [vmem:[%s1754 + $0x8] sm:$0xff]
        %v1757 = vld [vmem:[%s1754 + $0x10] sm:$0xff]
        %v1758 = vld [vmem:[%s1754 + $0x18] sm:$0xff]
        %v1759 = vld [vmem:[%s1754 + $0x20] sm:$0xff]
        %v1760 = vld [vmem:[%s1754 + $0x28] sm:$0xff]
        %v1761 = vld [vmem:[%s1754 + $0x30] sm:$0xff]
        %v1762 = vld [vmem:[%s1754 + $0x38] sm:$0xff]
        %v1763 = vld [vmem:[%s1754 + $0x40] sm:$0xff]
        %v1764 = vld [vmem:[%s1754 + $0x48] sm:$0xff]
        %v1765 = vld [vmem:[%s1754 + $0x50] sm:$0xff]
        %v1766 = vld [vmem:[%s1754 + $0x58] sm:$0xff]
        %v1767 = vld [vmem:[%s1754 + $0x60] sm:$0xff]
        %v1768 = vld [vmem:[%s1754 + $0x68] sm:$0xff]
        %v1769 = vld [vmem:[%s1754 + $0x70] sm:$0xff]
        %v1770 = vld [vmem:[%s1754 + $0x78] sm:$0xff]
        %v1771 = vld [vmem:[%s1754 + $0x80] sm:$0xff]
        %v1772 = vld [vmem:[%s1754 + $0x88] sm:$0xff]
        %v1773 = vld [vmem:[%s1754 + $0x90] sm:$0xff]
        %v1774 = vld [vmem:[%s1754 + $0x98] sm:$0xff]
        %v1775 = vld [vmem:[%s1754 + $0xa0] sm:$0xff]
        %v1776 = vld [vmem:[%s1754 + $0xa8] sm:$0xff]
        %v1777 = vld [vmem:[%s1754 + $0xb0] sm:$0xff]
        %v1778 = vld [vmem:[%s1754 + $0xb8] sm:$0xff]
        %v1779 = vld [vmem:[%s1754 + $0xc0] sm:$0xff]
        %v1780 = vld [vmem:[%s1754 + $0xc8] sm:$0xff]
        %v1781 = vld [vmem:[%s1754 + $0xd0] sm:$0xff]
        %v1782 = vld [vmem:[%s1754 + $0xd8] sm:$0xff]
        %v1783 = vld [vmem:[%s1754 + $0xe0] sm:$0xff]
        %v1784 = vld [vmem:[%s1754 + $0xe8] sm:$0xff]
        %v1785 = vld [vmem:[%s1754 + $0xf0] sm:$0xff]
        %v1786 = vld [vmem:[%s1754 + $0xf8] sm:$0xff]
        %v1787 = vmul.f32 %v1589, %v1755
        %v1788 = vmul.f32 %v1590, %v1756
        %v1789 = vmul.f32 %v1559, %v1757
        %v1790 = vmul.f32 %v1560, %v1758
        %v1791 = vmul.f32 %v1561, %v1759
        %v1792 = vmul.f32 %v1562, %v1760
        %v1793 = vmul.f32 %v1563, %v1761
        %v1794 = vmul.f32 %v1564, %v1762
        %v1795 = vmul.f32 %v1565, %v1763
        %v1796 = vmul.f32 %v1566, %v1764
        %v1797 = vmul.f32 %v1567, %v1765
        %v1798 = vmul.f32 %v1568, %v1766
        %v1799 = vmul.f32 %v1569, %v1767
        %v1800 = vmul.f32 %v1570, %v1768
        %v1801 = vmul.f32 %v1571, %v1769
        %v1802 = vmul.f32 %v1572, %v1770
        %v1803 = vmul.f32 %v1573, %v1771
        %v1804 = vmul.f32 %v1574, %v1772
        %v1805 = vmul.f32 %v1575, %v1773
        %v1806 = vmul.f32 %v1576, %v1774
        %v1807 = vmul.f32 %v1577, %v1775
        %v1808 = vmul.f32 %v1578, %v1776
        %v1809 = vmul.f32 %v1579, %v1777
        %v1810 = vmul.f32 %v1580, %v1778
        %v1811 = vmul.f32 %v1581, %v1779
        %v1812 = vmul.f32 %v1582, %v1780
        %v1813 = vmul.f32 %v1583, %v1781
        %v1814 = vmul.f32 %v1584, %v1782
        %v1815 = vmul.f32 %v1585, %v1783
        %v1816 = vmul.f32 %v1586, %v1784
        %v1817 = vmul.f32 %v1587, %v1785
        %v1818 = vmul.f32 %v1588, %v1786
        %v1819 = vadd.f32 %v1722, %v1787
        %v1820 = vadd.f32 %v1723, %v1788
        %v1821 = vadd.f32 %v1724, %v1789
        %v1822 = vadd.f32 %v1725, %v1790
        %v1823 = vadd.f32 %v1726, %v1791
        %v1824 = vadd.f32 %v1727, %v1792
        %v1825 = vadd.f32 %v1728, %v1793
        %v1826 = vadd.f32 %v1729, %v1794
        %v1827 = vadd.f32 %v1730, %v1795
        %v1828 = vadd.f32 %v1731, %v1796
        %v1829 = vadd.f32 %v1732, %v1797
        %v1830 = vadd.f32 %v1733, %v1798
        %v1831 = vadd.f32 %v1734, %v1799
        %v1832 = vadd.f32 %v1735, %v1800
        %v1833 = vadd.f32 %v1736, %v1801
        %v1834 = vadd.f32 %v1737, %v1802
        %v1835 = vadd.f32 %v1738, %v1803
        %v1836 = vadd.f32 %v1739, %v1804
        %v1837 = vadd.f32 %v1740, %v1805
        %v1838 = vadd.f32 %v1741, %v1806
        %v1839 = vadd.f32 %v1742, %v1807
        %v1840 = vadd.f32 %v1743, %v1808
        %v1841 = vadd.f32 %v1744, %v1809
        %v1842 = vadd.f32 %v1745, %v1810
        %v1843 = vadd.f32 %v1746, %v1811
        %v1844 = vadd.f32 %v1747, %v1812
        %v1845 = vadd.f32 %v1748, %v1813
        %v1846 = vadd.f32 %v1749, %v1814
        %v1847 = vadd.f32 %v1750, %v1815
        %v1848 = vadd.f32 %v1751, %v1816
        %v1849 = vadd.f32 %v1752, %v1817
        %v1850 = vadd.f32 %v1753, %v1818
        %v1851 = vrot.slane %v1559, 1
        %v1852 = vrot.slane %v1560, 1
        %v1853 = vrot.slane %v1561, 1
        %v1854 = vrot.slane %v1562, 1
        %v1855 = vrot.slane %v1563, 1
        %v1856 = vrot.slane %v1564, 1
        %v1857 = vrot.slane %v1565, 1
        %v1858 = vrot.slane %v1566, 1
        %v1859 = vrot.slane %v1567, 1
        %v1860 = vrot.slane %v1568, 1
        %v1861 = vrot.slane %v1569, 1
        %v1862 = vrot.slane %v1570, 1
        %v1863 = vrot.slane %v1571, 1
        %v1864 = vrot.slane %v1572, 1
        %v1865 = vrot.slane %v1573, 1
        %v1866 = vrot.slane %v1574, 1
        %v1867 = vrot.slane %v1575, 1
        %v1868 = vrot.slane %v1576, 1
        %v1869 = vrot.slane %v1577, 1
        %v1870 = vrot.slane %v1578, 1
        %v1871 = vrot.slane %v1579, 1
        %v1872 = vrot.slane %v1580, 1
        %v1873 = vrot.slane %v1581, 1
        %v1874 = vrot.slane %v1582, 1
        %v1875 = vrot.slane %v1583, 1
        %v1876 = vrot.slane %v1584, 1
        %v1877 = vrot.slane %v1585, 1
        %v1878 = vrot.slane %v1586, 1
        %v1879 = vrot.slane %v1587, 1
        %v1880 = vrot.slane %v1588, 1
        %v1881 = vrot.slane %v1589, 1
        %v1882 = vrot.slane %v1590, 1
        %vm1883 = vcmp.lt.s32.totalorder %v1624, 7
        %v1884 = vsel %vm1883, %v1881, %v1882
        %v1885 = vsel %vm1883, %v1880, %v1881
        %v1886 = vsel %vm1883, %v1879, %v1880
        %v1887 = vsel %vm1883, %v1878, %v1879
        %v1888 = vsel %vm1883, %v1877, %v1878
        %v1889 = vsel %vm1883, %v1876, %v1877
        %v1890 = vsel %vm1883, %v1875, %v1876
        %v1891 = vsel %vm1883, %v1874, %v1875
        %v1892 = vsel %vm1883, %v1873, %v1874
        %v1893 = vsel %vm1883, %v1872, %v1873
        %v1894 = vsel %vm1883, %v1871, %v1872
        %v1895 = vsel %vm1883, %v1870, %v1871
        %v1896 = vsel %vm1883, %v1869, %v1870
        %v1897 = vsel %vm1883, %v1868, %v1869
        %v1898 = vsel %vm1883, %v1867, %v1868
        %v1899 = vsel %vm1883, %v1866, %v1867
        %v1900 = vsel %vm1883, %v1865, %v1866
        %v1901 = vsel %vm1883, %v1864, %v1865
        %v1902 = vsel %vm1883, %v1863, %v1864
        %v1903 = vsel %vm1883, %v1862, %v1863
        %v1904 = vsel %vm1883, %v1861, %v1862
        %v1905 = vsel %vm1883, %v1860, %v1861
        %v1906 = vsel %vm1883, %v1859, %v1860
        %v1907 = vsel %vm1883, %v1858, %v1859
        %v1908 = vsel %vm1883, %v1857, %v1858
        %v1909 = vsel %vm1883, %v1856, %v1857
        %v1910 = vsel %vm1883, %v1855, %v1856
        %v1911 = vsel %vm1883, %v1854, %v1855
        %v1912 = vsel %vm1883, %v1853, %v1854
        %v1913 = vsel %vm1883, %v1852, %v1853
        %v1914 = vsel %vm1883, %v1851, %v1852
        %v1915 = vsel %vm1883, %v1882, %v1851
        %s1916 = scalar_lea.vmem %s1, 512
        %v1917 = vld [vmem:[%s1916] sm:$0xff]
        %v1918 = vld [vmem:[%s1916 + $0x8] sm:$0xff]
        %v1919 = vld [vmem:[%s1916 + $0x10] sm:$0xff]
        %v1920 = vld [vmem:[%s1916 + $0x18] sm:$0xff]
        %v1921 = vld [vmem:[%s1916 + $0x20] sm:$0xff]
        %v1922 = vld [vmem:[%s1916 + $0x28] sm:$0xff]
        %v1923 = vld [vmem:[%s1916 + $0x30] sm:$0xff]
        %v1924 = vld [vmem:[%s1916 + $0x38] sm:$0xff]
        %v1925 = vld [vmem:[%s1916 + $0x40] sm:$0xff]
        %v1926 = vld [vmem:[%s1916 + $0x48] sm:$0xff]
        %v1927 = vld [vmem:[%s1916 + $0x50] sm:$0xff]
        %v1928 = vld [vmem:[%s1916 + $0x58] sm:$0xff]
        %v1929 = vld [vmem:[%s1916 + $0x60] sm:$0xff]
        %v1930 = vld [vmem:[%s1916 + $0x68] sm:$0xff]
        %v1931 = vld [vmem:[%s1916 + $0x70] sm:$0xff]
        %v1932 = vld [vmem:[%s1916 + $0x78] sm:$0xff]
        %v1933 = vld [vmem:[%s1916 + $0x80] sm:$0xff]
        %v1934 = vld [vmem:[%s1916 + $0x88] sm:$0xff]
        %v1935 = vld [vmem:[%s1916 + $0x90] sm:$0xff]
        %v1936 = vld [vmem:[%s1916 + $0x98] sm:$0xff]
        %v1937 = vld [vmem:[%s1916 + $0xa0] sm:$0xff]
        %v1938 = vld [vmem:[%s1916 + $0xa8] sm:$0xff]
        %v1939 = vld [vmem:[%s1916 + $0xb0] sm:$0xff]
        %v1940 = vld [vmem:[%s1916 + $0xb8] sm:$0xff]
        %v1941 = vld [vmem:[%s1916 + $0xc0] sm:$0xff]
        %v1942 = vld [vmem:[%s1916 + $0xc8] sm:$0xff]
        %v1943 = vld [vmem:[%s1916 + $0xd0] sm:$0xff]
        %v1944 = vld [vmem:[%s1916 + $0xd8] sm:$0xff]
        %v1945 = vld [vmem:[%s1916 + $0xe0] sm:$0xff]
        %v1946 = vld [vmem:[%s1916 + $0xe8] sm:$0xff]
        %v1947 = vld [vmem:[%s1916 + $0xf0] sm:$0xff]
        %v1948 = vld [vmem:[%s1916 + $0xf8] sm:$0xff]
        %v1949 = vmul.f32 %v1884, %v1917
        %v1950 = vmul.f32 %v1915, %v1918
        %v1951 = vmul.f32 %v1914, %v1919
        %v1952 = vmul.f32 %v1913, %v1920
        %v1953 = vmul.f32 %v1912, %v1921
        %v1954 = vmul.f32 %v1911, %v1922
        %v1955 = vmul.f32 %v1910, %v1923
        %v1956 = vmul.f32 %v1909, %v1924
        %v1957 = vmul.f32 %v1908, %v1925
        %v1958 = vmul.f32 %v1907, %v1926
        %v1959 = vmul.f32 %v1906, %v1927
        %v1960 = vmul.f32 %v1905, %v1928
        %v1961 = vmul.f32 %v1904, %v1929
        %v1962 = vmul.f32 %v1903, %v1930
        %v1963 = vmul.f32 %v1902, %v1931
        %v1964 = vmul.f32 %v1901, %v1932
        %v1965 = vmul.f32 %v1900, %v1933
        %v1966 = vmul.f32 %v1899, %v1934
        %v1967 = vmul.f32 %v1898, %v1935
        %v1968 = vmul.f32 %v1897, %v1936
        %v1969 = vmul.f32 %v1896, %v1937
        %v1970 = vmul.f32 %v1895, %v1938
        %v1971 = vmul.f32 %v1894, %v1939
        %v1972 = vmul.f32 %v1893, %v1940
        %v1973 = vmul.f32 %v1892, %v1941
        %v1974 = vmul.f32 %v1891, %v1942
        %v1975 = vmul.f32 %v1890, %v1943
        %v1976 = vmul.f32 %v1889, %v1944
        %v1977 = vmul.f32 %v1888, %v1945
        %v1978 = vmul.f32 %v1887, %v1946
        %v1979 = vmul.f32 %v1886, %v1947
        %v1980 = vmul.f32 %v1885, %v1948
        %v1981 = vadd.f32 %v1819, %v1949
        %v1982 = vadd.f32 %v1820, %v1950
        %v1983 = vadd.f32 %v1821, %v1951
        %v1984 = vadd.f32 %v1822, %v1952
        %v1985 = vadd.f32 %v1823, %v1953
        %v1986 = vadd.f32 %v1824, %v1954
        %v1987 = vadd.f32 %v1825, %v1955
        %v1988 = vadd.f32 %v1826, %v1956
        %v1989 = vadd.f32 %v1827, %v1957
        %v1990 = vadd.f32 %v1828, %v1958
        %v1991 = vadd.f32 %v1829, %v1959
        %v1992 = vadd.f32 %v1830, %v1960
        %v1993 = vadd.f32 %v1831, %v1961
        %v1994 = vadd.f32 %v1832, %v1962
        %v1995 = vadd.f32 %v1833, %v1963
        %v1996 = vadd.f32 %v1834, %v1964
        %v1997 = vadd.f32 %v1835, %v1965
        %v1998 = vadd.f32 %v1836, %v1966
        %v1999 = vadd.f32 %v1837, %v1967
        %v2000 = vadd.f32 %v1838, %v1968
        %v2001 = vadd.f32 %v1839, %v1969
        %v2002 = vadd.f32 %v1840, %v1970
        %v2003 = vadd.f32 %v1841, %v1971
        %v2004 = vadd.f32 %v1842, %v1972
        %v2005 = vadd.f32 %v1843, %v1973
        %v2006 = vadd.f32 %v1844, %v1974
        %v2007 = vadd.f32 %v1845, %v1975
        %v2008 = vadd.f32 %v1846, %v1976
        %v2009 = vadd.f32 %v1847, %v1977
        %v2010 = vadd.f32 %v1848, %v1978
        %v2011 = vadd.f32 %v1849, %v1979
        %v2012 = vadd.f32 %v1850, %v1980
        %s2013 = scalar_lea.vmem %s1, 768
        %v2014 = vld [vmem:[%s2013] sm:$0xff]
        %v2015 = vld [vmem:[%s2013 + $0x8] sm:$0xff]
        %v2016 = vld [vmem:[%s2013 + $0x10] sm:$0xff]
        %v2017 = vld [vmem:[%s2013 + $0x18] sm:$0xff]
        %v2018 = vld [vmem:[%s2013 + $0x20] sm:$0xff]
        %v2019 = vld [vmem:[%s2013 + $0x28] sm:$0xff]
        %v2020 = vld [vmem:[%s2013 + $0x30] sm:$0xff]
        %v2021 = vld [vmem:[%s2013 + $0x38] sm:$0xff]
        %v2022 = vld [vmem:[%s2013 + $0x40] sm:$0xff]
        %v2023 = vld [vmem:[%s2013 + $0x48] sm:$0xff]
        %v2024 = vld [vmem:[%s2013 + $0x50] sm:$0xff]
        %v2025 = vld [vmem:[%s2013 + $0x58] sm:$0xff]
        %v2026 = vld [vmem:[%s2013 + $0x60] sm:$0xff]
        %v2027 = vld [vmem:[%s2013 + $0x68] sm:$0xff]
        %v2028 = vld [vmem:[%s2013 + $0x70] sm:$0xff]
        %v2029 = vld [vmem:[%s2013 + $0x78] sm:$0xff]
        %v2030 = vld [vmem:[%s2013 + $0x80] sm:$0xff]
        %v2031 = vld [vmem:[%s2013 + $0x88] sm:$0xff]
        %v2032 = vld [vmem:[%s2013 + $0x90] sm:$0xff]
        %v2033 = vld [vmem:[%s2013 + $0x98] sm:$0xff]
        %v2034 = vld [vmem:[%s2013 + $0xa0] sm:$0xff]
        %v2035 = vld [vmem:[%s2013 + $0xa8] sm:$0xff]
        %v2036 = vld [vmem:[%s2013 + $0xb0] sm:$0xff]
        %v2037 = vld [vmem:[%s2013 + $0xb8] sm:$0xff]
        %v2038 = vld [vmem:[%s2013 + $0xc0] sm:$0xff]
        %v2039 = vld [vmem:[%s2013 + $0xc8] sm:$0xff]
        %v2040 = vld [vmem:[%s2013 + $0xd0] sm:$0xff]
        %v2041 = vld [vmem:[%s2013 + $0xd8] sm:$0xff]
        %v2042 = vld [vmem:[%s2013 + $0xe0] sm:$0xff]
        %v2043 = vld [vmem:[%s2013 + $0xe8] sm:$0xff]
        %v2044 = vld [vmem:[%s2013 + $0xf0] sm:$0xff]
        %v2045 = vld [vmem:[%s2013 + $0xf8] sm:$0xff]
        %v2046 = vmul.f32 %v1657, %v2014
        %v2047 = vmul.f32 %v1656, %v2015
        %v2048 = vmul.f32 %v1655, %v2016
        %v2049 = vmul.f32 %v1654, %v2017
        %v2050 = vmul.f32 %v1653, %v2018
        %v2051 = vmul.f32 %v1652, %v2019
        %v2052 = vmul.f32 %v1651, %v2020
        %v2053 = vmul.f32 %v1650, %v2021
        %v2054 = vmul.f32 %v1649, %v2022
        %v2055 = vmul.f32 %v1648, %v2023
        %v2056 = vmul.f32 %v1647, %v2024
        %v2057 = vmul.f32 %v1646, %v2025
        %v2058 = vmul.f32 %v1645, %v2026
        %v2059 = vmul.f32 %v1644, %v2027
        %v2060 = vmul.f32 %v1643, %v2028
        %v2061 = vmul.f32 %v1642, %v2029
        %v2062 = vmul.f32 %v1641, %v2030
        %v2063 = vmul.f32 %v1640, %v2031
        %v2064 = vmul.f32 %v1639, %v2032
        %v2065 = vmul.f32 %v1638, %v2033
        %v2066 = vmul.f32 %v1637, %v2034
        %v2067 = vmul.f32 %v1636, %v2035
        %v2068 = vmul.f32 %v1635, %v2036
        %v2069 = vmul.f32 %v1634, %v2037
        %v2070 = vmul.f32 %v1633, %v2038
        %v2071 = vmul.f32 %v1632, %v2039
        %v2072 = vmul.f32 %v1631, %v2040
        %v2073 = vmul.f32 %v1630, %v2041
        %v2074 = vmul.f32 %v1629, %v2042
        %v2075 = vmul.f32 %v1628, %v2043
        %v2076 = vmul.f32 %v1627, %v2044
        %v2077 = vmul.f32 %v1626, %v2045
        %v2078 = vadd.f32 %v1981, %v2046
        %v2079 = vadd.f32 %v1982, %v2047
        %v2080 = vadd.f32 %v1983, %v2048
        %v2081 = vadd.f32 %v1984, %v2049
        %v2082 = vadd.f32 %v1985, %v2050
        %v2083 = vadd.f32 %v1986, %v2051
        %v2084 = vadd.f32 %v1987, %v2052
        %v2085 = vadd.f32 %v1988, %v2053
        %v2086 = vadd.f32 %v1989, %v2054
        %v2087 = vadd.f32 %v1990, %v2055
        %v2088 = vadd.f32 %v1991, %v2056
        %v2089 = vadd.f32 %v1992, %v2057
        %v2090 = vadd.f32 %v1993, %v2058
        %v2091 = vadd.f32 %v1994, %v2059
        %v2092 = vadd.f32 %v1995, %v2060
        %v2093 = vadd.f32 %v1996, %v2061
        %v2094 = vadd.f32 %v1997, %v2062
        %v2095 = vadd.f32 %v1998, %v2063
        %v2096 = vadd.f32 %v1999, %v2064
        %v2097 = vadd.f32 %v2000, %v2065
        %v2098 = vadd.f32 %v2001, %v2066
        %v2099 = vadd.f32 %v2002, %v2067
        %v2100 = vadd.f32 %v2003, %v2068
        %v2101 = vadd.f32 %v2004, %v2069
        %v2102 = vadd.f32 %v2005, %v2070
        %v2103 = vadd.f32 %v2006, %v2071
        %v2104 = vadd.f32 %v2007, %v2072
        %v2105 = vadd.f32 %v2008, %v2073
        %v2106 = vadd.f32 %v2009, %v2074
        %v2107 = vadd.f32 %v2010, %v2075
        %v2108 = vadd.f32 %v2011, %v2076
        %v2109 = vadd.f32 %v2012, %v2077
        %s2110 = scalar_lea.vmem %s1, 1024
        %v2111 = vld [vmem:[%s2110] sm:$0xff]
        %v2112 = vld [vmem:[%s2110 + $0x8] sm:$0xff]
        %v2113 = vld [vmem:[%s2110 + $0x10] sm:$0xff]
        %v2114 = vld [vmem:[%s2110 + $0x18] sm:$0xff]
        %v2115 = vld [vmem:[%s2110 + $0x20] sm:$0xff]
        %v2116 = vld [vmem:[%s2110 + $0x28] sm:$0xff]
        %v2117 = vld [vmem:[%s2110 + $0x30] sm:$0xff]
        %v2118 = vld [vmem:[%s2110 + $0x38] sm:$0xff]
        %v2119 = vld [vmem:[%s2110 + $0x40] sm:$0xff]
        %v2120 = vld [vmem:[%s2110 + $0x48] sm:$0xff]
        %v2121 = vld [vmem:[%s2110 + $0x50] sm:$0xff]
        %v2122 = vld [vmem:[%s2110 + $0x58] sm:$0xff]
        %v2123 = vld [vmem:[%s2110 + $0x60] sm:$0xff]
        %v2124 = vld [vmem:[%s2110 + $0x68] sm:$0xff]
        %v2125 = vld [vmem:[%s2110 + $0x70] sm:$0xff]
        %v2126 = vld [vmem:[%s2110 + $0x78] sm:$0xff]
        %v2127 = vld [vmem:[%s2110 + $0x80] sm:$0xff]
        %v2128 = vld [vmem:[%s2110 + $0x88] sm:$0xff]
        %v2129 = vld [vmem:[%s2110 + $0x90] sm:$0xff]
        %v2130 = vld [vmem:[%s2110 + $0x98] sm:$0xff]
        %v2131 = vld [vmem:[%s2110 + $0xa0] sm:$0xff]
        %v2132 = vld [vmem:[%s2110 + $0xa8] sm:$0xff]
        %v2133 = vld [vmem:[%s2110 + $0xb0] sm:$0xff]
        %v2134 = vld [vmem:[%s2110 + $0xb8] sm:$0xff]
        %v2135 = vld [vmem:[%s2110 + $0xc0] sm:$0xff]
        %v2136 = vld [vmem:[%s2110 + $0xc8] sm:$0xff]
        %v2137 = vld [vmem:[%s2110 + $0xd0] sm:$0xff]
        %v2138 = vld [vmem:[%s2110 + $0xd8] sm:$0xff]
        %v2139 = vld [vmem:[%s2110 + $0xe0] sm:$0xff]
        %v2140 = vld [vmem:[%s2110 + $0xe8] sm:$0xff]
        %v2141 = vld [vmem:[%s2110 + $0xf0] sm:$0xff]
        %v2142 = vld [vmem:[%s2110 + $0xf8] sm:$0xff]
        %v2143 = vmul.f32 %v1559, %v2111
        %v2144 = vmul.f32 %v1560, %v2112
        %v2145 = vmul.f32 %v1561, %v2113
        %v2146 = vmul.f32 %v1562, %v2114
        %v2147 = vmul.f32 %v1563, %v2115
        %v2148 = vmul.f32 %v1564, %v2116
        %v2149 = vmul.f32 %v1565, %v2117
        %v2150 = vmul.f32 %v1566, %v2118
        %v2151 = vmul.f32 %v1567, %v2119
        %v2152 = vmul.f32 %v1568, %v2120
        %v2153 = vmul.f32 %v1569, %v2121
        %v2154 = vmul.f32 %v1570, %v2122
        %v2155 = vmul.f32 %v1571, %v2123
        %v2156 = vmul.f32 %v1572, %v2124
        %v2157 = vmul.f32 %v1573, %v2125
        %v2158 = vmul.f32 %v1574, %v2126
        %v2159 = vmul.f32 %v1575, %v2127
        %v2160 = vmul.f32 %v1576, %v2128
        %v2161 = vmul.f32 %v1577, %v2129
        %v2162 = vmul.f32 %v1578, %v2130
        %v2163 = vmul.f32 %v1579, %v2131
        %v2164 = vmul.f32 %v1580, %v2132
        %v2165 = vmul.f32 %v1581, %v2133
        %v2166 = vmul.f32 %v1582, %v2134
        %v2167 = vmul.f32 %v1583, %v2135
        %v2168 = vmul.f32 %v1584, %v2136
        %v2169 = vmul.f32 %v1585, %v2137
        %v2170 = vmul.f32 %v1586, %v2138
        %v2171 = vmul.f32 %v1587, %v2139
        %v2172 = vmul.f32 %v1588, %v2140
        %v2173 = vmul.f32 %v1589, %v2141
        %v2174 = vmul.f32 %v1590, %v2142
        %v2175 = vadd.f32 %v2078, %v2143
        %v2176 = vadd.f32 %v2079, %v2144
        %v2177 = vadd.f32 %v2080, %v2145
        %v2178 = vadd.f32 %v2081, %v2146
        %v2179 = vadd.f32 %v2082, %v2147
        %v2180 = vadd.f32 %v2083, %v2148
        %v2181 = vadd.f32 %v2084, %v2149
        %v2182 = vadd.f32 %v2085, %v2150
        %v2183 = vadd.f32 %v2086, %v2151
        %v2184 = vadd.f32 %v2087, %v2152
        %v2185 = vadd.f32 %v2088, %v2153
        %v2186 = vadd.f32 %v2089, %v2154
        %v2187 = vadd.f32 %v2090, %v2155
        %v2188 = vadd.f32 %v2091, %v2156
        %v2189 = vadd.f32 %v2092, %v2157
        %v2190 = vadd.f32 %v2093, %v2158
        %v2191 = vadd.f32 %v2094, %v2159
        %v2192 = vadd.f32 %v2095, %v2160
        %v2193 = vadd.f32 %v2096, %v2161
        %v2194 = vadd.f32 %v2097, %v2162
        %v2195 = vadd.f32 %v2098, %v2163
        %v2196 = vadd.f32 %v2099, %v2164
        %v2197 = vadd.f32 %v2100, %v2165
        %v2198 = vadd.f32 %v2101, %v2166
        %v2199 = vadd.f32 %v2102, %v2167
        %v2200 = vadd.f32 %v2103, %v2168
        %v2201 = vadd.f32 %v2104, %v2169
        %v2202 = vadd.f32 %v2105, %v2170
        %v2203 = vadd.f32 %v2106, %v2171
        %v2204 = vadd.f32 %v2107, %v2172
        %v2205 = vadd.f32 %v2108, %v2173
        %v2206 = vadd.f32 %v2109, %v2174
        %s2207 = scalar_lea.vmem %s1, 1280
        %v2208 = vld [vmem:[%s2207] sm:$0xff]
        %v2209 = vld [vmem:[%s2207 + $0x8] sm:$0xff]
        %v2210 = vld [vmem:[%s2207 + $0x10] sm:$0xff]
        %v2211 = vld [vmem:[%s2207 + $0x18] sm:$0xff]
        %v2212 = vld [vmem:[%s2207 + $0x20] sm:$0xff]
        %v2213 = vld [vmem:[%s2207 + $0x28] sm:$0xff]
        %v2214 = vld [vmem:[%s2207 + $0x30] sm:$0xff]
        %v2215 = vld [vmem:[%s2207 + $0x38] sm:$0xff]
        %v2216 = vld [vmem:[%s2207 + $0x40] sm:$0xff]
        %v2217 = vld [vmem:[%s2207 + $0x48] sm:$0xff]
        %v2218 = vld [vmem:[%s2207 + $0x50] sm:$0xff]
        %v2219 = vld [vmem:[%s2207 + $0x58] sm:$0xff]
        %v2220 = vld [vmem:[%s2207 + $0x60] sm:$0xff]
        %v2221 = vld [vmem:[%s2207 + $0x68] sm:$0xff]
        %v2222 = vld [vmem:[%s2207 + $0x70] sm:$0xff]
        %v2223 = vld [vmem:[%s2207 + $0x78] sm:$0xff]
        %v2224 = vld [vmem:[%s2207 + $0x80] sm:$0xff]
        %v2225 = vld [vmem:[%s2207 + $0x88] sm:$0xff]
        %v2226 = vld [vmem:[%s2207 + $0x90] sm:$0xff]
        %v2227 = vld [vmem:[%s2207 + $0x98] sm:$0xff]
        %v2228 = vld [vmem:[%s2207 + $0xa0] sm:$0xff]
        %v2229 = vld [vmem:[%s2207 + $0xa8] sm:$0xff]
        %v2230 = vld [vmem:[%s2207 + $0xb0] sm:$0xff]
        %v2231 = vld [vmem:[%s2207 + $0xb8] sm:$0xff]
        %v2232 = vld [vmem:[%s2207 + $0xc0] sm:$0xff]
        %v2233 = vld [vmem:[%s2207 + $0xc8] sm:$0xff]
        %v2234 = vld [vmem:[%s2207 + $0xd0] sm:$0xff]
        %v2235 = vld [vmem:[%s2207 + $0xd8] sm:$0xff]
        %v2236 = vld [vmem:[%s2207 + $0xe0] sm:$0xff]
        %v2237 = vld [vmem:[%s2207 + $0xe8] sm:$0xff]
        %v2238 = vld [vmem:[%s2207 + $0xf0] sm:$0xff]
        %v2239 = vld [vmem:[%s2207 + $0xf8] sm:$0xff]
        %v2240 = vmul.f32 %v1914, %v2208
        %v2241 = vmul.f32 %v1913, %v2209
        %v2242 = vmul.f32 %v1912, %v2210
        %v2243 = vmul.f32 %v1911, %v2211
        %v2244 = vmul.f32 %v1910, %v2212
        %v2245 = vmul.f32 %v1909, %v2213
        %v2246 = vmul.f32 %v1908, %v2214
        %v2247 = vmul.f32 %v1907, %v2215
        %v2248 = vmul.f32 %v1906, %v2216
        %v2249 = vmul.f32 %v1905, %v2217
        %v2250 = vmul.f32 %v1904, %v2218
        %v2251 = vmul.f32 %v1903, %v2219
        %v2252 = vmul.f32 %v1902, %v2220
        %v2253 = vmul.f32 %v1901, %v2221
        %v2254 = vmul.f32 %v1900, %v2222
        %v2255 = vmul.f32 %v1899, %v2223
        %v2256 = vmul.f32 %v1898, %v2224
        %v2257 = vmul.f32 %v1897, %v2225
        %v2258 = vmul.f32 %v1896, %v2226
        %v2259 = vmul.f32 %v1895, %v2227
        %v2260 = vmul.f32 %v1894, %v2228
        %v2261 = vmul.f32 %v1893, %v2229
        %v2262 = vmul.f32 %v1892, %v2230
        %v2263 = vmul.f32 %v1891, %v2231
        %v2264 = vmul.f32 %v1890, %v2232
        %v2265 = vmul.f32 %v1889, %v2233
        %v2266 = vmul.f32 %v1888, %v2234
        %v2267 = vmul.f32 %v1887, %v2235
        %v2268 = vmul.f32 %v1886, %v2236
        %v2269 = vmul.f32 %v1885, %v2237
        %v2270 = vmul.f32 %v1884, %v2238
        %v2271 = vmul.f32 %v1915, %v2239
        %v2272 = vadd.f32 %v2175, %v2240
        %v2273 = vadd.f32 %v2176, %v2241
        %v2274 = vadd.f32 %v2177, %v2242
        %v2275 = vadd.f32 %v2178, %v2243
        %v2276 = vadd.f32 %v2179, %v2244
        %v2277 = vadd.f32 %v2180, %v2245
        %v2278 = vadd.f32 %v2181, %v2246
        %v2279 = vadd.f32 %v2182, %v2247
        %v2280 = vadd.f32 %v2183, %v2248
        %v2281 = vadd.f32 %v2184, %v2249
        %v2282 = vadd.f32 %v2185, %v2250
        %v2283 = vadd.f32 %v2186, %v2251
        %v2284 = vadd.f32 %v2187, %v2252
        %v2285 = vadd.f32 %v2188, %v2253
        %v2286 = vadd.f32 %v2189, %v2254
        %v2287 = vadd.f32 %v2190, %v2255
        %v2288 = vadd.f32 %v2191, %v2256
        %v2289 = vadd.f32 %v2192, %v2257
        %v2290 = vadd.f32 %v2193, %v2258
        %v2291 = vadd.f32 %v2194, %v2259
        %v2292 = vadd.f32 %v2195, %v2260
        %v2293 = vadd.f32 %v2196, %v2261
        %v2294 = vadd.f32 %v2197, %v2262
        %v2295 = vadd.f32 %v2198, %v2263
        %v2296 = vadd.f32 %v2199, %v2264
        %v2297 = vadd.f32 %v2200, %v2265
        %v2298 = vadd.f32 %v2201, %v2266
        %v2299 = vadd.f32 %v2202, %v2267
        %v2300 = vadd.f32 %v2203, %v2268
        %v2301 = vadd.f32 %v2204, %v2269
        %v2302 = vadd.f32 %v2205, %v2270
        %v2303 = vadd.f32 %v2206, %v2271
        %s2304 = scalar_lea.vmem %s1, 1536
        %v2305 = vld [vmem:[%s2304] sm:$0xff]
        %v2306 = vld [vmem:[%s2304 + $0x8] sm:$0xff]
        %v2307 = vld [vmem:[%s2304 + $0x10] sm:$0xff]
        %v2308 = vld [vmem:[%s2304 + $0x18] sm:$0xff]
        %v2309 = vld [vmem:[%s2304 + $0x20] sm:$0xff]
        %v2310 = vld [vmem:[%s2304 + $0x28] sm:$0xff]
        %v2311 = vld [vmem:[%s2304 + $0x30] sm:$0xff]
        %v2312 = vld [vmem:[%s2304 + $0x38] sm:$0xff]
        %v2313 = vld [vmem:[%s2304 + $0x40] sm:$0xff]
        %v2314 = vld [vmem:[%s2304 + $0x48] sm:$0xff]
        %v2315 = vld [vmem:[%s2304 + $0x50] sm:$0xff]
        %v2316 = vld [vmem:[%s2304 + $0x58] sm:$0xff]
        %v2317 = vld [vmem:[%s2304 + $0x60] sm:$0xff]
        %v2318 = vld [vmem:[%s2304 + $0x68] sm:$0xff]
        %v2319 = vld [vmem:[%s2304 + $0x70] sm:$0xff]
        %v2320 = vld [vmem:[%s2304 + $0x78] sm:$0xff]
        %v2321 = vld [vmem:[%s2304 + $0x80] sm:$0xff]
        %v2322 = vld [vmem:[%s2304 + $0x88] sm:$0xff]
        %v2323 = vld [vmem:[%s2304 + $0x90] sm:$0xff]
        %v2324 = vld [vmem:[%s2304 + $0x98] sm:$0xff]
        %v2325 = vld [vmem:[%s2304 + $0xa0] sm:$0xff]
        %v2326 = vld [vmem:[%s2304 + $0xa8] sm:$0xff]
        %v2327 = vld [vmem:[%s2304 + $0xb0] sm:$0xff]
        %v2328 = vld [vmem:[%s2304 + $0xb8] sm:$0xff]
        %v2329 = vld [vmem:[%s2304 + $0xc0] sm:$0xff]
        %v2330 = vld [vmem:[%s2304 + $0xc8] sm:$0xff]
        %v2331 = vld [vmem:[%s2304 + $0xd0] sm:$0xff]
        %v2332 = vld [vmem:[%s2304 + $0xd8] sm:$0xff]
        %v2333 = vld [vmem:[%s2304 + $0xe0] sm:$0xff]
        %v2334 = vld [vmem:[%s2304 + $0xe8] sm:$0xff]
        %v2335 = vld [vmem:[%s2304 + $0xf0] sm:$0xff]
        %v2336 = vld [vmem:[%s2304 + $0xf8] sm:$0xff]
        %v2337 = vmul.f32 %v1655, %v2305
        %v2338 = vmul.f32 %v1654, %v2306
        %v2339 = vmul.f32 %v1653, %v2307
        %v2340 = vmul.f32 %v1652, %v2308
        %v2341 = vmul.f32 %v1651, %v2309
        %v2342 = vmul.f32 %v1650, %v2310
        %v2343 = vmul.f32 %v1649, %v2311
        %v2344 = vmul.f32 %v1648, %v2312
        %v2345 = vmul.f32 %v1647, %v2313
        %v2346 = vmul.f32 %v1646, %v2314
        %v2347 = vmul.f32 %v1645, %v2315
        %v2348 = vmul.f32 %v1644, %v2316
        %v2349 = vmul.f32 %v1643, %v2317
        %v2350 = vmul.f32 %v1642, %v2318
        %v2351 = vmul.f32 %v1641, %v2319
        %v2352 = vmul.f32 %v1640, %v2320
        %v2353 = vmul.f32 %v1639, %v2321
        %v2354 = vmul.f32 %v1638, %v2322
        %v2355 = vmul.f32 %v1637, %v2323
        %v2356 = vmul.f32 %v1636, %v2324
        %v2357 = vmul.f32 %v1635, %v2325
        %v2358 = vmul.f32 %v1634, %v2326
        %v2359 = vmul.f32 %v1633, %v2327
        %v2360 = vmul.f32 %v1632, %v2328
        %v2361 = vmul.f32 %v1631, %v2329
        %v2362 = vmul.f32 %v1630, %v2330
        %v2363 = vmul.f32 %v1629, %v2331
        %v2364 = vmul.f32 %v1628, %v2332
        %v2365 = vmul.f32 %v1627, %v2333
        %v2366 = vmul.f32 %v1626, %v2334
        %v2367 = vmul.f32 %v1657, %v2335
        %v2368 = vmul.f32 %v1656, %v2336
        %v2369 = vadd.f32 %v2272, %v2337
        %v2370 = vadd.f32 %v2273, %v2338
        %v2371 = vadd.f32 %v2274, %v2339
        %v2372 = vadd.f32 %v2275, %v2340
        %v2373 = vadd.f32 %v2276, %v2341
        %v2374 = vadd.f32 %v2277, %v2342
        %v2375 = vadd.f32 %v2278, %v2343
        %v2376 = vadd.f32 %v2279, %v2344
        %v2377 = vadd.f32 %v2280, %v2345
        %v2378 = vadd.f32 %v2281, %v2346
        %v2379 = vadd.f32 %v2282, %v2347
        %v2380 = vadd.f32 %v2283, %v2348
        %v2381 = vadd.f32 %v2284, %v2349
        %v2382 = vadd.f32 %v2285, %v2350
        %v2383 = vadd.f32 %v2286, %v2351
        %v2384 = vadd.f32 %v2287, %v2352
        %v2385 = vadd.f32 %v2288, %v2353
        %v2386 = vadd.f32 %v2289, %v2354
        %v2387 = vadd.f32 %v2290, %v2355
        %v2388 = vadd.f32 %v2291, %v2356
        %v2389 = vadd.f32 %v2292, %v2357
        %v2390 = vadd.f32 %v2293, %v2358
        %v2391 = vadd.f32 %v2294, %v2359
        %v2392 = vadd.f32 %v2295, %v2360
        %v2393 = vadd.f32 %v2296, %v2361
        %v2394 = vadd.f32 %v2297, %v2362
        %v2395 = vadd.f32 %v2298, %v2363
        %v2396 = vadd.f32 %v2299, %v2364
        %v2397 = vadd.f32 %v2300, %v2365
        %v2398 = vadd.f32 %v2301, %v2366
        %v2399 = vadd.f32 %v2302, %v2367
        %v2400 = vadd.f32 %v2303, %v2368
        %s2401 = scalar_lea.vmem %s1, 1792
        %v2402 = vld [vmem:[%s2401] sm:$0xff]
        %v2403 = vld [vmem:[%s2401 + $0x8] sm:$0xff]
        %v2404 = vld [vmem:[%s2401 + $0x10] sm:$0xff]
        %v2405 = vld [vmem:[%s2401 + $0x18] sm:$0xff]
        %v2406 = vld [vmem:[%s2401 + $0x20] sm:$0xff]
        %v2407 = vld [vmem:[%s2401 + $0x28] sm:$0xff]
        %v2408 = vld [vmem:[%s2401 + $0x30] sm:$0xff]
        %v2409 = vld [vmem:[%s2401 + $0x38] sm:$0xff]
        %v2410 = vld [vmem:[%s2401 + $0x40] sm:$0xff]
        %v2411 = vld [vmem:[%s2401 + $0x48] sm:$0xff]
        %v2412 = vld [vmem:[%s2401 + $0x50] sm:$0xff]
        %v2413 = vld [vmem:[%s2401 + $0x58] sm:$0xff]
        %v2414 = vld [vmem:[%s2401 + $0x60] sm:$0xff]
        %v2415 = vld [vmem:[%s2401 + $0x68] sm:$0xff]
        %v2416 = vld [vmem:[%s2401 + $0x70] sm:$0xff]
        %v2417 = vld [vmem:[%s2401 + $0x78] sm:$0xff]
        %v2418 = vld [vmem:[%s2401 + $0x80] sm:$0xff]
        %v2419 = vld [vmem:[%s2401 + $0x88] sm:$0xff]
        %v2420 = vld [vmem:[%s2401 + $0x90] sm:$0xff]
        %v2421 = vld [vmem:[%s2401 + $0x98] sm:$0xff]
        %v2422 = vld [vmem:[%s2401 + $0xa0] sm:$0xff]
        %v2423 = vld [vmem:[%s2401 + $0xa8] sm:$0xff]
        %v2424 = vld [vmem:[%s2401 + $0xb0] sm:$0xff]
        %v2425 = vld [vmem:[%s2401 + $0xb8] sm:$0xff]
        %v2426 = vld [vmem:[%s2401 + $0xc0] sm:$0xff]
        %v2427 = vld [vmem:[%s2401 + $0xc8] sm:$0xff]
        %v2428 = vld [vmem:[%s2401 + $0xd0] sm:$0xff]
        %v2429 = vld [vmem:[%s2401 + $0xd8] sm:$0xff]
        %v2430 = vld [vmem:[%s2401 + $0xe0] sm:$0xff]
        %v2431 = vld [vmem:[%s2401 + $0xe8] sm:$0xff]
        %v2432 = vld [vmem:[%s2401 + $0xf0] sm:$0xff]
        %v2433 = vld [vmem:[%s2401 + $0xf8] sm:$0xff]
        %v2434 = vmul.f32 %v1561, %v2402
        %v2435 = vmul.f32 %v1562, %v2403
        %v2436 = vmul.f32 %v1563, %v2404
        %v2437 = vmul.f32 %v1564, %v2405
        %v2438 = vmul.f32 %v1565, %v2406
        %v2439 = vmul.f32 %v1566, %v2407
        %v2440 = vmul.f32 %v1567, %v2408
        %v2441 = vmul.f32 %v1568, %v2409
        %v2442 = vmul.f32 %v1569, %v2410
        %v2443 = vmul.f32 %v1570, %v2411
        %v2444 = vmul.f32 %v1571, %v2412
        %v2445 = vmul.f32 %v1572, %v2413
        %v2446 = vmul.f32 %v1573, %v2414
        %v2447 = vmul.f32 %v1574, %v2415
        %v2448 = vmul.f32 %v1575, %v2416
        %v2449 = vmul.f32 %v1576, %v2417
        %v2450 = vmul.f32 %v1577, %v2418
        %v2451 = vmul.f32 %v1578, %v2419
        %v2452 = vmul.f32 %v1579, %v2420
        %v2453 = vmul.f32 %v1580, %v2421
        %v2454 = vmul.f32 %v1581, %v2422
        %v2455 = vmul.f32 %v1582, %v2423
        %v2456 = vmul.f32 %v1583, %v2424
        %v2457 = vmul.f32 %v1584, %v2425
        %v2458 = vmul.f32 %v1585, %v2426
        %v2459 = vmul.f32 %v1586, %v2427
        %v2460 = vmul.f32 %v1587, %v2428
        %v2461 = vmul.f32 %v1588, %v2429
        %v2462 = vmul.f32 %v1589, %v2430
        %v2463 = vmul.f32 %v1590, %v2431
        %v2464 = vmul.f32 %v1559, %v2432
        %v2465 = vmul.f32 %v1560, %v2433
        %v2466 = vadd.f32 %v2369, %v2434
        %v2467 = vadd.f32 %v2370, %v2435
        %v2468 = vadd.f32 %v2371, %v2436
        %v2469 = vadd.f32 %v2372, %v2437
        %v2470 = vadd.f32 %v2373, %v2438
        %v2471 = vadd.f32 %v2374, %v2439
        %v2472 = vadd.f32 %v2375, %v2440
        %v2473 = vadd.f32 %v2376, %v2441
        %v2474 = vadd.f32 %v2377, %v2442
        %v2475 = vadd.f32 %v2378, %v2443
        %v2476 = vadd.f32 %v2379, %v2444
        %v2477 = vadd.f32 %v2380, %v2445
        %v2478 = vadd.f32 %v2381, %v2446
        %v2479 = vadd.f32 %v2382, %v2447
        %v2480 = vadd.f32 %v2383, %v2448
        %v2481 = vadd.f32 %v2384, %v2449
        %v2482 = vadd.f32 %v2385, %v2450
        %v2483 = vadd.f32 %v2386, %v2451
        %v2484 = vadd.f32 %v2387, %v2452
        %v2485 = vadd.f32 %v2388, %v2453
        %v2486 = vadd.f32 %v2389, %v2454
        %v2487 = vadd.f32 %v2390, %v2455
        %v2488 = vadd.f32 %v2391, %v2456
        %v2489 = vadd.f32 %v2392, %v2457
        %v2490 = vadd.f32 %v2393, %v2458
        %v2491 = vadd.f32 %v2394, %v2459
        %v2492 = vadd.f32 %v2395, %v2460
        %v2493 = vadd.f32 %v2396, %v2461
        %v2494 = vadd.f32 %v2397, %v2462
        %v2495 = vadd.f32 %v2398, %v2463
        %v2496 = vadd.f32 %v2399, %v2464
        %v2497 = vadd.f32 %v2400, %v2465
        %s2498 = scalar_lea.vmem %s1, 2048
        %v2499 = vld [vmem:[%s2498] sm:$0xff]
        %v2500 = vld [vmem:[%s2498 + $0x8] sm:$0xff]
        %v2501 = vld [vmem:[%s2498 + $0x10] sm:$0xff]
        %v2502 = vld [vmem:[%s2498 + $0x18] sm:$0xff]
        %v2503 = vld [vmem:[%s2498 + $0x20] sm:$0xff]
        %v2504 = vld [vmem:[%s2498 + $0x28] sm:$0xff]
        %v2505 = vld [vmem:[%s2498 + $0x30] sm:$0xff]
        %v2506 = vld [vmem:[%s2498 + $0x38] sm:$0xff]
        %v2507 = vld [vmem:[%s2498 + $0x40] sm:$0xff]
        %v2508 = vld [vmem:[%s2498 + $0x48] sm:$0xff]
        %v2509 = vld [vmem:[%s2498 + $0x50] sm:$0xff]
        %v2510 = vld [vmem:[%s2498 + $0x58] sm:$0xff]
        %v2511 = vld [vmem:[%s2498 + $0x60] sm:$0xff]
        %v2512 = vld [vmem:[%s2498 + $0x68] sm:$0xff]
        %v2513 = vld [vmem:[%s2498 + $0x70] sm:$0xff]
        %v2514 = vld [vmem:[%s2498 + $0x78] sm:$0xff]
        %v2515 = vld [vmem:[%s2498 + $0x80] sm:$0xff]
        %v2516 = vld [vmem:[%s2498 + $0x88] sm:$0xff]
        %v2517 = vld [vmem:[%s2498 + $0x90] sm:$0xff]
        %v2518 = vld [vmem:[%s2498 + $0x98] sm:$0xff]
        %v2519 = vld [vmem:[%s2498 + $0xa0] sm:$0xff]
        %v2520 = vld [vmem:[%s2498 + $0xa8] sm:$0xff]
        %v2521 = vld [vmem:[%s2498 + $0xb0] sm:$0xff]
        %v2522 = vld [vmem:[%s2498 + $0xb8] sm:$0xff]
        %v2523 = vld [vmem:[%s2498 + $0xc0] sm:$0xff]
        %v2524 = vld [vmem:[%s2498 + $0xc8] sm:$0xff]
        %v2525 = vld [vmem:[%s2498 + $0xd0] sm:$0xff]
        %v2526 = vld [vmem:[%s2498 + $0xd8] sm:$0xff]
        %v2527 = vld [vmem:[%s2498 + $0xe0] sm:$0xff]
        %v2528 = vld [vmem:[%s2498 + $0xe8] sm:$0xff]
        %v2529 = vld [vmem:[%s2498 + $0xf0] sm:$0xff]
        %v2530 = vld [vmem:[%s2498 + $0xf8] sm:$0xff]
        %v2531 = vmul.f32 %v1912, %v2499
        %v2532 = vmul.f32 %v1911, %v2500
        %v2533 = vmul.f32 %v1910, %v2501
        %v2534 = vmul.f32 %v1909, %v2502
        %v2535 = vmul.f32 %v1908, %v2503
        %v2536 = vmul.f32 %v1907, %v2504
        %v2537 = vmul.f32 %v1906, %v2505
        %v2538 = vmul.f32 %v1905, %v2506
        %v2539 = vmul.f32 %v1904, %v2507
        %v2540 = vmul.f32 %v1903, %v2508
        %v2541 = vmul.f32 %v1902, %v2509
        %v2542 = vmul.f32 %v1901, %v2510
        %v2543 = vmul.f32 %v1900, %v2511
        %v2544 = vmul.f32 %v1899, %v2512
        %v2545 = vmul.f32 %v1898, %v2513
        %v2546 = vmul.f32 %v1897, %v2514
        %v2547 = vmul.f32 %v1896, %v2515
        %v2548 = vmul.f32 %v1895, %v2516
        %v2549 = vmul.f32 %v1894, %v2517
        %v2550 = vmul.f32 %v1893, %v2518
        %v2551 = vmul.f32 %v1892, %v2519
        %v2552 = vmul.f32 %v1891, %v2520
        %v2553 = vmul.f32 %v1890, %v2521
        %v2554 = vmul.f32 %v1889, %v2522
        %v2555 = vmul.f32 %v1888, %v2523
        %v2556 = vmul.f32 %v1887, %v2524
        %v2557 = vmul.f32 %v1886, %v2525
        %v2558 = vmul.f32 %v1885, %v2526
        %v2559 = vmul.f32 %v1884, %v2527
        %v2560 = vmul.f32 %v1915, %v2528
        %v2561 = vmul.f32 %v1914, %v2529
        %v2562 = vmul.f32 %v1913, %v2530
        %v2563 = vadd.f32 %v2466, %v2531
        %v2564 = vadd.f32 %v2467, %v2532
        %v2565 = vadd.f32 %v2468, %v2533
        %v2566 = vadd.f32 %v2469, %v2534
        %v2567 = vadd.f32 %v2470, %v2535
        %v2568 = vadd.f32 %v2471, %v2536
        %v2569 = vadd.f32 %v2472, %v2537
        %v2570 = vadd.f32 %v2473, %v2538
        %v2571 = vadd.f32 %v2474, %v2539
        %v2572 = vadd.f32 %v2475, %v2540
        %v2573 = vadd.f32 %v2476, %v2541
        %v2574 = vadd.f32 %v2477, %v2542
        %v2575 = vadd.f32 %v2478, %v2543
        %v2576 = vadd.f32 %v2479, %v2544
        %v2577 = vadd.f32 %v2480, %v2545
        %v2578 = vadd.f32 %v2481, %v2546
        %v2579 = vadd.f32 %v2482, %v2547
        %v2580 = vadd.f32 %v2483, %v2548
        %v2581 = vadd.f32 %v2484, %v2549
        %v2582 = vadd.f32 %v2485, %v2550
        %v2583 = vadd.f32 %v2486, %v2551
        %v2584 = vadd.f32 %v2487, %v2552
        %v2585 = vadd.f32 %v2488, %v2553
        %v2586 = vadd.f32 %v2489, %v2554
        %v2587 = vadd.f32 %v2490, %v2555
        %v2588 = vadd.f32 %v2491, %v2556
        %v2589 = vadd.f32 %v2492, %v2557
        %v2590 = vadd.f32 %v2493, %v2558
        %v2591 = vadd.f32 %v2494, %v2559
        %v2592 = vadd.f32 %v2495, %v2560
        %v2593 = vadd.f32 %v2496, %v2561
        %v2594 = vadd.f32 %v2497, %v2562
        %v2595 = vld [vmem:[%s6] sm:$0x1]
        %v2597 = vlaneseq
        %v2598 = vshrl.u32 %v2597, 7
        %v2599 = vsub.s32 0, %v2598
        %v2600 = vrot.slane %v2595, %v2599
        %v2602 = vadd.f32 %v2563, %v2600
        %v2603 = vadd.f32 %v2564, %v2600
        %v2604 = vadd.f32 %v2565, %v2600
        %v2605 = vadd.f32 %v2566, %v2600
        %v2606 = vadd.f32 %v2567, %v2600
        %v2607 = vadd.f32 %v2568, %v2600
        %v2608 = vadd.f32 %v2569, %v2600
        %v2609 = vadd.f32 %v2570, %v2600
        %v2610 = vadd.f32 %v2571, %v2600
        %v2611 = vadd.f32 %v2572, %v2600
        %v2612 = vadd.f32 %v2573, %v2600
        %v2613 = vadd.f32 %v2574, %v2600
        %v2614 = vadd.f32 %v2575, %v2600
        %v2615 = vadd.f32 %v2576, %v2600
        %v2616 = vadd.f32 %v2577, %v2600
        %v2617 = vadd.f32 %v2578, %v2600
        %v2618 = vadd.f32 %v2579, %v2600
        %v2619 = vadd.f32 %v2580, %v2600
        %v2620 = vadd.f32 %v2581, %v2600
        %v2621 = vadd.f32 %v2582, %v2600
        %v2622 = vadd.f32 %v2583, %v2600
        %v2623 = vadd.f32 %v2584, %v2600
        %v2624 = vadd.f32 %v2585, %v2600
        %v2625 = vadd.f32 %v2586, %v2600
        %v2626 = vadd.f32 %v2587, %v2600
        %v2627 = vadd.f32 %v2588, %v2600
        %v2628 = vadd.f32 %v2589, %v2600
        %v2629 = vadd.f32 %v2590, %v2600
        %v2630 = vadd.f32 %v2591, %v2600
        %v2631 = vadd.f32 %v2592, %v2600
        %v2632 = vadd.f32 %v2593, %v2600
        %v2633 = vadd.f32 %v2594, %v2600
        %v2634 = vsub.f32 0.0, %v2602
        %v2635 = vsub.f32 0.0, %v2603
        %v2636 = vsub.f32 0.0, %v2604
        %v2637 = vsub.f32 0.0, %v2605
        %v2638 = vsub.f32 0.0, %v2606
        %v2639 = vsub.f32 0.0, %v2607
        %v2640 = vsub.f32 0.0, %v2608
        %v2641 = vsub.f32 0.0, %v2609
        %v2642 = vsub.f32 0.0, %v2610
        %v2643 = vsub.f32 0.0, %v2611
        %v2644 = vsub.f32 0.0, %v2612
        %v2645 = vsub.f32 0.0, %v2613
        %v2646 = vsub.f32 0.0, %v2614
        %v2647 = vsub.f32 0.0, %v2615
        %v2648 = vsub.f32 0.0, %v2616
        %v2649 = vsub.f32 0.0, %v2617
        %v2650 = vsub.f32 0.0, %v2618
        %v2651 = vsub.f32 0.0, %v2619
        %v2652 = vsub.f32 0.0, %v2620
        %v2653 = vsub.f32 0.0, %v2621
        %v2654 = vsub.f32 0.0, %v2622
        %v2655 = vsub.f32 0.0, %v2623
        %v2656 = vsub.f32 0.0, %v2624
        %v2657 = vsub.f32 0.0, %v2625
        %v2658 = vsub.f32 0.0, %v2626
        %v2659 = vsub.f32 0.0, %v2627
        %v2660 = vsub.f32 0.0, %v2628
        %v2661 = vsub.f32 0.0, %v2629
        %v2662 = vsub.f32 0.0, %v2630
        %v2663 = vsub.f32 0.0, %v2631
        %v2664 = vsub.f32 0.0, %v2632
        %v2665 = vsub.f32 0.0, %v2633
        %v2666 = vmul.f32 %v2634, 1.442695
        %v2667 = vpow.pop %v2666
        %v2668 = vmul.f32 %v2635, 1.442695
        %v2669 = vpow.pop %v2668
        %v2670 = vmul.f32 %v2636, 1.442695
        %v2671 = vpow.pop %v2670
        %v2672 = vmul.f32 %v2637, 1.442695
        %v2673 = vpow.pop %v2672
        %v2674 = vmul.f32 %v2638, 1.442695
        %v2675 = vpow.pop %v2674
        %v2676 = vmul.f32 %v2639, 1.442695
        %v2677 = vpow.pop %v2676
        %v2678 = vmul.f32 %v2640, 1.442695
        %v2679 = vpow.pop %v2678
        %v2680 = vmul.f32 %v2641, 1.442695
        %v2681 = vpow.pop %v2680
        %v2682 = vmul.f32 %v2642, 1.442695
        %v2683 = vpow.pop %v2682
        %v2684 = vmul.f32 %v2643, 1.442695
        %v2685 = vpow.pop %v2684
        %v2686 = vmul.f32 %v2644, 1.442695
        %v2687 = vpow.pop %v2686
        %v2688 = vmul.f32 %v2645, 1.442695
        %v2689 = vpow.pop %v2688
        %v2690 = vmul.f32 %v2646, 1.442695
        %v2691 = vpow.pop %v2690
        %v2692 = vmul.f32 %v2647, 1.442695
        %v2693 = vpow.pop %v2692
        %v2694 = vmul.f32 %v2648, 1.442695
        %v2695 = vpow.pop %v2694
        %v2696 = vmul.f32 %v2649, 1.442695
        %v2697 = vpow.pop %v2696
        %v2698 = vmul.f32 %v2650, 1.442695
        %v2699 = vpow.pop %v2698
        %v2700 = vmul.f32 %v2651, 1.442695
        %v2701 = vpow.pop %v2700
        %v2702 = vmul.f32 %v2652, 1.442695
        %v2703 = vpow.pop %v2702
        %v2704 = vmul.f32 %v2653, 1.442695
        %v2705 = vpow.pop %v2704
        %v2706 = vmul.f32 %v2654, 1.442695
        %v2707 = vpow.pop %v2706
        %v2708 = vmul.f32 %v2655, 1.442695
        %v2709 = vpow.pop %v2708
        %v2710 = vmul.f32 %v2656, 1.442695
        %v2711 = vpow.pop %v2710
        %v2712 = vmul.f32 %v2657, 1.442695
        %v2713 = vpow.pop %v2712
        %v2714 = vmul.f32 %v2658, 1.442695
        %v2715 = vpow.pop %v2714
        %v2716 = vmul.f32 %v2659, 1.442695
        %v2717 = vpow.pop %v2716
        %v2718 = vmul.f32 %v2660, 1.442695
        %v2719 = vpow.pop %v2718
        %v2720 = vmul.f32 %v2661, 1.442695
        %v2721 = vpow.pop %v2720
        %v2722 = vmul.f32 %v2662, 1.442695
        %v2723 = vpow.pop %v2722
        %v2724 = vmul.f32 %v2663, 1.442695
        %v2725 = vpow.pop %v2724
        %v2726 = vmul.f32 %v2664, 1.442695
        %v2727 = vpow.pop %v2726
        %v2728 = vmul.f32 %v2665, 1.442695
        %v2729 = vpow.pop %v2728
        %v2730 = vadd.f32 %v2667, 1.0
        %v2731 = vadd.f32 %v2669, 1.0
        %v2732 = vadd.f32 %v2671, 1.0
        %v2733 = vadd.f32 %v2673, 1.0
        %v2734 = vadd.f32 %v2675, 1.0
        %v2735 = vadd.f32 %v2677, 1.0
        %v2736 = vadd.f32 %v2679, 1.0
        %v2737 = vadd.f32 %v2681, 1.0
        %v2738 = vadd.f32 %v2683, 1.0
        %v2739 = vadd.f32 %v2685, 1.0
        %v2740 = vadd.f32 %v2687, 1.0
        %v2741 = vadd.f32 %v2689, 1.0
        %v2742 = vadd.f32 %v2691, 1.0
        %v2743 = vadd.f32 %v2693, 1.0
        %v2744 = vadd.f32 %v2695, 1.0
        %v2745 = vadd.f32 %v2697, 1.0
        %v2746 = vadd.f32 %v2699, 1.0
        %v2747 = vadd.f32 %v2701, 1.0
        %v2748 = vadd.f32 %v2703, 1.0
        %v2749 = vadd.f32 %v2705, 1.0
        %v2750 = vadd.f32 %v2707, 1.0
        %v2751 = vadd.f32 %v2709, 1.0
        %v2752 = vadd.f32 %v2711, 1.0
        %v2753 = vadd.f32 %v2713, 1.0
        %v2754 = vadd.f32 %v2715, 1.0
        %v2755 = vadd.f32 %v2717, 1.0
        %v2756 = vadd.f32 %v2719, 1.0
        %v2757 = vadd.f32 %v2721, 1.0
        %v2758 = vadd.f32 %v2723, 1.0
        %v2759 = vadd.f32 %v2725, 1.0
        %v2760 = vadd.f32 %v2727, 1.0
        %v2761 = vadd.f32 %v2729, 1.0
        %v2762 = vrcp.pop %v2730
        %v2763 = vmul.f32 1.0, %v2762
        %v2764 = vrcp.pop %v2731
        %v2765 = vmul.f32 1.0, %v2764
        %v2766 = vrcp.pop %v2732
        %v2767 = vmul.f32 1.0, %v2766
        %v2768 = vrcp.pop %v2733
        %v2769 = vmul.f32 1.0, %v2768
        %v2770 = vrcp.pop %v2734
        %v2771 = vmul.f32 1.0, %v2770
        %v2772 = vrcp.pop %v2735
        %v2773 = vmul.f32 1.0, %v2772
        %v2774 = vrcp.pop %v2736
        %v2775 = vmul.f32 1.0, %v2774
        %v2776 = vrcp.pop %v2737
        %v2777 = vmul.f32 1.0, %v2776
        %v2778 = vrcp.pop %v2738
        %v2779 = vmul.f32 1.0, %v2778
        %v2780 = vrcp.pop %v2739
        %v2781 = vmul.f32 1.0, %v2780
        %v2782 = vrcp.pop %v2740
        %v2783 = vmul.f32 1.0, %v2782
        %v2784 = vrcp.pop %v2741
        %v2785 = vmul.f32 1.0, %v2784
        %v2786 = vrcp.pop %v2742
        %v2787 = vmul.f32 1.0, %v2786
        %v2788 = vrcp.pop %v2743
        %v2789 = vmul.f32 1.0, %v2788
        %v2790 = vrcp.pop %v2744
        %v2791 = vmul.f32 1.0, %v2790
        %v2792 = vrcp.pop %v2745
        %v2793 = vmul.f32 1.0, %v2792
        %v2794 = vrcp.pop %v2746
        %v2795 = vmul.f32 1.0, %v2794
        %v2796 = vrcp.pop %v2747
        %v2797 = vmul.f32 1.0, %v2796
        %v2798 = vrcp.pop %v2748
        %v2799 = vmul.f32 1.0, %v2798
        %v2800 = vrcp.pop %v2749
        %v2801 = vmul.f32 1.0, %v2800
        %v2802 = vrcp.pop %v2750
        %v2803 = vmul.f32 1.0, %v2802
        %v2804 = vrcp.pop %v2751
        %v2805 = vmul.f32 1.0, %v2804
        %v2806 = vrcp.pop %v2752
        %v2807 = vmul.f32 1.0, %v2806
        %v2808 = vrcp.pop %v2753
        %v2809 = vmul.f32 1.0, %v2808
        %v2810 = vrcp.pop %v2754
        %v2811 = vmul.f32 1.0, %v2810
        %v2812 = vrcp.pop %v2755
        %v2813 = vmul.f32 1.0, %v2812
        %v2814 = vrcp.pop %v2756
        %v2815 = vmul.f32 1.0, %v2814
        %v2816 = vrcp.pop %v2757
        %v2817 = vmul.f32 1.0, %v2816
        %v2818 = vrcp.pop %v2758
        %v2819 = vmul.f32 1.0, %v2818
        %v2820 = vrcp.pop %v2759
        %v2821 = vmul.f32 1.0, %v2820
        %v2822 = vrcp.pop %v2760
        %v2823 = vmul.f32 1.0, %v2822
        %v2824 = vrcp.pop %v2761
        %v2825 = vmul.f32 1.0, %v2824
        %v2826 = vmul.f32 %v2602, %v2763
        %v2827 = vmul.f32 %v2603, %v2765
        %v2828 = vmul.f32 %v2604, %v2767
        %v2829 = vmul.f32 %v2605, %v2769
        %v2830 = vmul.f32 %v2606, %v2771
        %v2831 = vmul.f32 %v2607, %v2773
        %v2832 = vmul.f32 %v2608, %v2775
        %v2833 = vmul.f32 %v2609, %v2777
        %v2834 = vmul.f32 %v2610, %v2779
        %v2835 = vmul.f32 %v2611, %v2781
        %v2836 = vmul.f32 %v2612, %v2783
        %v2837 = vmul.f32 %v2613, %v2785
        %v2838 = vmul.f32 %v2614, %v2787
        %v2839 = vmul.f32 %v2615, %v2789
        %v2840 = vmul.f32 %v2616, %v2791
        %v2841 = vmul.f32 %v2617, %v2793
        %v2842 = vmul.f32 %v2618, %v2795
        %v2843 = vmul.f32 %v2619, %v2797
        %v2844 = vmul.f32 %v2620, %v2799
        %v2845 = vmul.f32 %v2621, %v2801
        %v2846 = vmul.f32 %v2622, %v2803
        %v2847 = vmul.f32 %v2623, %v2805
        %v2848 = vmul.f32 %v2624, %v2807
        %v2849 = vmul.f32 %v2625, %v2809
        %v2850 = vmul.f32 %v2626, %v2811
        %v2851 = vmul.f32 %v2627, %v2813
        %v2852 = vmul.f32 %v2628, %v2815
        %v2853 = vmul.f32 %v2629, %v2817
        %v2854 = vmul.f32 %v2630, %v2819
        %v2855 = vmul.f32 %v2631, %v2821
        %v2856 = vmul.f32 %v2632, %v2823
        %v2857 = vmul.f32 %v2633, %v2825
        %vm2858 = vcmask 785408
        %v2859 = vsel %vm2858, %v2826, 0.0
        %v2860 = vsel %vm2858, %v2827, 0.0
        %v2861 = vadd.f32 %v2859, %v2860
        %v2862 = vsel %vm2858, %v2828, 0.0
        %v2863 = vadd.f32 %v2861, %v2862
        %v2864 = vsel %vm2858, %v2829, 0.0
        %v2865 = vadd.f32 %v2863, %v2864
        %v2866 = vsel %vm2858, %v2830, 0.0
        %v2867 = vadd.f32 %v2865, %v2866
        %v2868 = vsel %vm2858, %v2831, 0.0
        %v2869 = vadd.f32 %v2867, %v2868
        %v2870 = vsel %vm2858, %v2832, 0.0
        %v2871 = vadd.f32 %v2869, %v2870
        %v2872 = vsel %vm2858, %v2833, 0.0
        %v2873 = vadd.f32 %v2871, %v2872
        %v2874 = vsel %vm2858, %v2834, 0.0
        %v2875 = vadd.f32 %v2873, %v2874
        %v2876 = vsel %vm2858, %v2835, 0.0
        %v2877 = vadd.f32 %v2875, %v2876
        %v2878 = vsel %vm2858, %v2836, 0.0
        %v2879 = vadd.f32 %v2877, %v2878
        %v2880 = vsel %vm2858, %v2837, 0.0
        %v2881 = vadd.f32 %v2879, %v2880
        %v2882 = vsel %vm2858, %v2838, 0.0
        %v2883 = vadd.f32 %v2881, %v2882
        %v2884 = vsel %vm2858, %v2839, 0.0
        %v2885 = vadd.f32 %v2883, %v2884
        %v2886 = vsel %vm2858, %v2840, 0.0
        %v2887 = vadd.f32 %v2885, %v2886
        %v2888 = vsel %vm2858, %v2841, 0.0
        %v2889 = vadd.f32 %v2887, %v2888
        %v2890 = vsel %vm2858, %v2842, 0.0
        %v2891 = vadd.f32 %v2889, %v2890
        %v2892 = vsel %vm2858, %v2843, 0.0
        %v2893 = vadd.f32 %v2891, %v2892
        %v2894 = vsel %vm2858, %v2844, 0.0
        %v2895 = vadd.f32 %v2893, %v2894
        %v2896 = vsel %vm2858, %v2845, 0.0
        %v2897 = vadd.f32 %v2895, %v2896
        %v2898 = vsel %vm2858, %v2846, 0.0
        %v2899 = vadd.f32 %v2897, %v2898
        %v2900 = vsel %vm2858, %v2847, 0.0
        %v2901 = vadd.f32 %v2899, %v2900
        %v2902 = vsel %vm2858, %v2848, 0.0
        %v2903 = vadd.f32 %v2901, %v2902
        %v2904 = vsel %vm2858, %v2849, 0.0
        %v2905 = vadd.f32 %v2903, %v2904
        %v2906 = vsel %vm2858, %v2850, 0.0
        %v2907 = vadd.f32 %v2905, %v2906
        %v2908 = vsel %vm2858, %v2851, 0.0
        %v2909 = vadd.f32 %v2907, %v2908
        %v2910 = vsel %vm2858, %v2852, 0.0
        %v2911 = vadd.f32 %v2909, %v2910
        %v2912 = vsel %vm2858, %v2853, 0.0
        %v2913 = vadd.f32 %v2911, %v2912
        %v2914 = vsel %vm2858, %v2854, 0.0
        %v2915 = vadd.f32 %v2913, %v2914
        %v2916 = vsel %vm2858, %v2855, 0.0
        %v2917 = vadd.f32 %v2915, %v2916
        %v2918 = vsel %vm2858, %v2856, 0.0
        %v2919 = vadd.f32 %v2917, %v2918
        %v2920 = vsel %vm2858, %v2857, 0.0
        %v2921 = vadd.f32 %v2919, %v2920
        %v2922 = vrot.slane %v2921, 4
        %v2923 = vadd.f32 %v2921, %v2922
        %v2924 = vrot.slane %v2923, 2
        %v2925 = vadd.f32 %v2923, %v2924
        %v2926 = vrot.slane %v2925, 1
        %v2927 = vadd.f32 %v2925, %v2926
        %v2928 = vrcp.pop 256.0
        %v2929 = vmul.f32 %v2927, %v2928
        %v2930 = vpack.c.bf16 %v2929, %v2929
        %v2931 = vld [vmem:[%s7] sm:$0xf]
        %v2932 = vld [vmem:[%s7 + $0x4] sm:$0xf]
        %v2933 = vld [vmem:[%s7 + $0x8] sm:$0xf]
        %v2934 = vld [vmem:[%s7 + $0xc] sm:$0xf]
        %v2935 = vld [vmem:[%s7 + $0x10] sm:$0xf]
        %v2936 = vld [vmem:[%s7 + $0x14] sm:$0xf]
        %v2937 = vld [vmem:[%s7 + $0x18] sm:$0xf]
        %v2938 = vld [vmem:[%s7 + $0x1c] sm:$0xf]
        %v2939 = vld [vmem:[%s7 + $0x20] sm:$0xf]
        %v2940 = vld [vmem:[%s7 + $0x24] sm:$0xf]
        %v2941 = vld [vmem:[%s7 + $0x28] sm:$0xf]
        %v2942 = vld [vmem:[%s7 + $0x2c] sm:$0xf]
        %v2943 = vld [vmem:[%s8] sm:$0x1]
        %v2956 = vunpack.c.l.b16 %v2931
        %v2957 = vunpack.c.l.b16 %v2932
        %v2958 = vunpack.c.l.b16 %v2933
        %v2959 = vunpack.c.l.b16 %v2934
        %v2960 = vunpack.c.l.b16 %v2935
        %v2961 = vunpack.c.l.b16 %v2936
        %v2962 = vunpack.c.l.b16 %v2937
        %v2963 = vunpack.c.l.b16 %v2938
        %v2964 = vunpack.c.l.b16 %v2939
        %v2965 = vunpack.c.l.b16 %v2940
        %v2966 = vunpack.c.l.b16 %v2941
        %v2967 = vunpack.c.l.b16 %v2942
        %v2968 = vpack.c.b16 %v2957, %v2956
        %v2969 = vpack.c.b16 %v2959, %v2958
        %v2970 = vpack.c.b16 %v2961, %v2960
        %v2971 = vpack.c.b16 %v2963, %v2962
        %v2972 = vpack.c.b16 %v2965, %v2964
        %v2973 = vpack.c.b16 %v2967, %v2966
        %v2981 = vsel %vm2858, %v2930, 0
        %2983 = vmatprep.subr.bf16.mxu0 0
        %2984 = vmatpush1.bf16.msra.mxu0 %v2968
        %2985 = vmatprep.subr.bf16.mxu0 0
        %2986 = vmatpush1.bf16.msra.mxu0 %v2969
        %2987 = vmatprep.subr.bf16.mxu0 0
        %2988 = vmatpush1.bf16.msra.mxu0 %v2970
        %2989 = vmatprep.subr.bf16.mxu0 0
        %2990 = vmatpush1.bf16.msra.mxu0 %v2971
        %2991 = vmatprep.subr.bf16.mxu0 0
        %2992 = vmatpush1.bf16.msra.mxu0 %v2972
        %2993 = vmatprep.subr.bf16.mxu0 0
        %2994 = vmatpush1.bf16.msra.mxu0 %v2973
        %2995 = vmatprep.subr.bf16.mxu0 0
        %2996 = vmatpush1.bf16.msra.mxu0 0
        %2997 = vmatprep.subr.bf16.mxu0 0
        %2998 = vmatpush1.bf16.msra.mxu0 0
        %2999 = vmatprep.subr.bf16.mxu0 0
        %3000 = vmatpush1.bf16.msra.mxu0 0
        %3001 = vmatprep.subr.bf16.mxu0 0
        %3002 = vmatpush1.bf16.msra.mxu0 0
        %3003 = vmatprep.subr.bf16.mxu0 0
        %3004 = vmatpush1.bf16.msra.mxu0 0
        %3005 = vmatprep.subr.bf16.mxu0 0
        %3006 = vmatpush1.bf16.msra.mxu0 0
        %3007 = vmatprep.subr.bf16.mxu0 0
        %3008 = vmatpush1.bf16.msra.mxu0 0
        %3009 = vmatprep.subr.bf16.mxu0 0
        %3010 = vmatpush1.bf16.msra.mxu0 0
        %3011 = vmatprep.subr.bf16.mxu0 0
        %3012 = vmatpush1.bf16.msra.mxu0 0
        %3013 = vmatprep.subr.bf16.mxu0 0
        %3014 = vmatpush1.bf16.msra.mxu0 0
        %3015 = vmatprep.mubr.bf16.mxu0 0
        %3016 = vmatmul.mubr.bf16.gmra.mrb[0].mxu0 %v2981
        %v3017 = vpop.f32.mrb[0].mxu0
        %v3018 = vadd.f32 %v2943, %v3017
        %v3019 = vpop.f32.mrb[0].mxu0
        %v3020 = vpop.f32.mrb[0].mxu0
        %v3021 = vpop.f32.mrb[0].mxu0
        %3022 = vdwg.mxu0
        %v3023 = vsub.f32 0.0, %v3018
        %v3024 = vmul.f32 %v3023, 1.442695
        %v3025 = vpow.pop %v3024
        %v3026 = vadd.f32 %v3025, 1.0
        %v3027 = vrcp.pop %v3026
        %v3028 = vmul.f32 1.0, %v3027
        %v3029 = vmul.f32 %v3018, %v3028
        %v3030 = vpack.c.bf16 %v3029, %v3029
        %v3031 = vld [vmem:[%s9] sm:$0x7]
        %v3032 = vld [vmem:[%s10] sm:$0x1]
        %vm3033 = vcmask 48128
        %v3035 = vsel %vm3033, %v3030, 0
        %vm3037 = vcmask 1042432
        %v3039 = vsel %vm3037, %v3031, 0
        %3041 = vmatprep.subr.bf16.mxu0 0
        %3042 = vmatpush1.bf16.msra.mxu0 %v3039
        %3043 = vmatprep.subr.bf16.mxu0 0
        %3044 = vmatpush1.bf16.msra.mxu0 0
        %3045 = vmatprep.subr.bf16.mxu0 0
        %3046 = vmatpush1.bf16.msra.mxu0 0
        %3047 = vmatprep.subr.bf16.mxu0 0
        %3048 = vmatpush1.bf16.msra.mxu0 0
        %3049 = vmatprep.subr.bf16.mxu0 0
        %3050 = vmatpush1.bf16.msra.mxu0 0
        %3051 = vmatprep.subr.bf16.mxu0 0
        %3052 = vmatpush1.bf16.msra.mxu0 0
        %3053 = vmatprep.subr.bf16.mxu0 0
        %3054 = vmatpush1.bf16.msra.mxu0 0
        %3055 = vmatprep.subr.bf16.mxu0 0
        %3056 = vmatpush1.bf16.msra.mxu0 0
        %3057 = vmatprep.subr.bf16.mxu0 0
        %3058 = vmatpush1.bf16.msra.mxu0 0
        %3059 = vmatprep.subr.bf16.mxu0 0
        %3060 = vmatpush1.bf16.msra.mxu0 0
        %3061 = vmatprep.subr.bf16.mxu0 0
        %3062 = vmatpush1.bf16.msra.mxu0 0
        %3063 = vmatprep.subr.bf16.mxu0 0
        %3064 = vmatpush1.bf16.msra.mxu0 0
        %3065 = vmatprep.subr.bf16.mxu0 0
        %3066 = vmatpush1.bf16.msra.mxu0 0
        %3067 = vmatprep.subr.bf16.mxu0 0
        %3068 = vmatpush1.bf16.msra.mxu0 0
        %3069 = vmatprep.subr.bf16.mxu0 0
        %3070 = vmatpush1.bf16.msra.mxu0 0
        %3071 = vmatprep.subr.bf16.mxu0 0
        %3072 = vmatpush1.bf16.msra.mxu0 0
        %3073 = vmatprep.mubr.bf16.mxu0 0
        %3074 = vmatmul.mubr.bf16.gmra.mrb[0].mxu0 %v3035
        %v3075 = vpop.f32.mrb[0].mxu0
        %v3076 = vadd.f32 %v3032, %v3075
        %v3077 = vpop.f32.mrb[0].mxu0
        %v3078 = vpop.f32.mrb[0].mxu0
        %v3079 = vpop.f32.mrb[0].mxu0
        %3080 = vdwg.mxu0
        %v3081 = vsub.f32 0.0, %v3076
        %v3082 = vmul.f32 %v3081, 1.442695
        %v3083 = vpow.pop %v3082
        %v3084 = vadd.f32 %v3083, 1.0
        %v3085 = vrcp.pop %v3084
        %v3086 = vmul.f32 1.0, %v3085
        %v3087 = vlaneseq
        %v3088 = vshrl.u32 %v3087, 7
        %v3089 = vsub.s32 0, %v3088
        %v3090 = vrot.slane %v3086, %v3089
        %v3091 = vmul.f32 %v2826, %v3090
        %v3092 = vmul.f32 %v2827, %v3090
        %v3093 = vmul.f32 %v2828, %v3090
        %v3094 = vmul.f32 %v2829, %v3090
        %v3095 = vmul.f32 %v2830, %v3090
        %v3096 = vmul.f32 %v2831, %v3090
        %v3097 = vmul.f32 %v2832, %v3090
        %v3098 = vmul.f32 %v2833, %v3090
        %v3099 = vmul.f32 %v2834, %v3090
        %v3100 = vmul.f32 %v2835, %v3090
        %v3101 = vmul.f32 %v2836, %v3090
        %v3102 = vmul.f32 %v2837, %v3090
        %v3103 = vmul.f32 %v2838, %v3090
        %v3104 = vmul.f32 %v2839, %v3090
        %v3105 = vmul.f32 %v2840, %v3090
        %v3106 = vmul.f32 %v2841, %v3090
        %v3107 = vmul.f32 %v2842, %v3090
        %v3108 = vmul.f32 %v2843, %v3090
        %v3109 = vmul.f32 %v2844, %v3090
        %v3110 = vmul.f32 %v2845, %v3090
        %v3111 = vmul.f32 %v2846, %v3090
        %v3112 = vmul.f32 %v2847, %v3090
        %v3113 = vmul.f32 %v2848, %v3090
        %v3114 = vmul.f32 %v2849, %v3090
        %v3115 = vmul.f32 %v2850, %v3090
        %v3116 = vmul.f32 %v2851, %v3090
        %v3117 = vmul.f32 %v2852, %v3090
        %v3118 = vmul.f32 %v2853, %v3090
        %v3119 = vmul.f32 %v2854, %v3090
        %v3120 = vmul.f32 %v2855, %v3090
        %v3121 = vmul.f32 %v2856, %v3090
        %v3122 = vmul.f32 %v2857, %v3090
        %v3123 = vpack.c.bf16 %v3092, %v3091
        %v3124 = vpack.c.bf16 %v3094, %v3093
        %v3125 = vpack.c.bf16 %v3096, %v3095
        %v3126 = vpack.c.bf16 %v3098, %v3097
        %v3127 = vpack.c.bf16 %v3100, %v3099
        %v3128 = vpack.c.bf16 %v3102, %v3101
        %v3129 = vpack.c.bf16 %v3104, %v3103
        %v3130 = vpack.c.bf16 %v3106, %v3105
        %v3131 = vpack.c.bf16 %v3108, %v3107
        %v3132 = vpack.c.bf16 %v3110, %v3109
        %v3133 = vpack.c.bf16 %v3112, %v3111
        %v3134 = vpack.c.bf16 %v3114, %v3113
        %v3135 = vpack.c.bf16 %v3116, %v3115
        %v3136 = vpack.c.bf16 %v3118, %v3117
        %v3137 = vpack.c.bf16 %v3120, %v3119
        %v3138 = vpack.c.bf16 %v3122, %v3121
        %v3139 = vld [vmem:[%s11] sm:$0xf]
        %v3140 = vld [vmem:[%s11 + $0x4] sm:$0xf]
        %v3141 = vld [vmem:[%s11 + $0x8] sm:$0xf]
        %v3142 = vld [vmem:[%s11 + $0xc] sm:$0xf]
        %v3143 = vld [vmem:[%s11 + $0x10] sm:$0xf]
        %v3144 = vld [vmem:[%s11 + $0x14] sm:$0xf]
        %v3145 = vld [vmem:[%s11 + $0x18] sm:$0xf]
        %v3146 = vld [vmem:[%s11 + $0x1c] sm:$0xf]
        %v3147 = vld [vmem:[%s11 + $0x20] sm:$0xf]
        %v3148 = vld [vmem:[%s11 + $0x24] sm:$0xf]
        %v3149 = vld [vmem:[%s11 + $0x28] sm:$0xf]
        %v3150 = vld [vmem:[%s11 + $0x2c] sm:$0xf]
        %v3151 = vld [vmem:[%s12] sm:$0x1]
        %v3153 = vlaneseq
        %v3154 = vshrl.u32 %v3153, 7
        %v3155 = vsub.s32 0, %v3154
        %v3156 = vrot.slane %v3151, %v3155
        %v3170 = vunpack.c.l.b16 %v3139
        %v3171 = vunpack.c.l.b16 %v3140
        %v3172 = vunpack.c.l.b16 %v3141
        %v3173 = vunpack.c.l.b16 %v3142
        %v3174 = vunpack.c.l.b16 %v3143
        %v3175 = vunpack.c.l.b16 %v3144
        %v3176 = vunpack.c.l.b16 %v3145
        %v3177 = vunpack.c.l.b16 %v3146
        %v3178 = vunpack.c.l.b16 %v3147
        %v3179 = vunpack.c.l.b16 %v3148
        %v3180 = vunpack.c.l.b16 %v3149
        %v3181 = vunpack.c.l.b16 %v3150
        %v3182 = vpack.c.b16 %v3171, %v3170
        %v3183 = vpack.c.b16 %v3173, %v3172
        %v3184 = vpack.c.b16 %v3175, %v3174
        %v3185 = vpack.c.b16 %v3177, %v3176
        %v3186 = vpack.c.b16 %v3179, %v3178
        %v3187 = vpack.c.b16 %v3181, %v3180
        %v3195 = vsel %vm2858, %v3123, 0
        %v3198 = vsel %vm2858, %v3124, 0
        %v3201 = vsel %vm2858, %v3125, 0
        %v3204 = vsel %vm2858, %v3126, 0
        %v3207 = vsel %vm2858, %v3127, 0
        %v3210 = vsel %vm2858, %v3128, 0
        %v3213 = vsel %vm2858, %v3129, 0
        %v3216 = vsel %vm2858, %v3130, 0
        %v3219 = vsel %vm2858, %v3131, 0
        %v3222 = vsel %vm2858, %v3132, 0
        %v3225 = vsel %vm2858, %v3133, 0
        %v3228 = vsel %vm2858, %v3134, 0
        %v3231 = vsel %vm2858, %v3135, 0
        %v3234 = vsel %vm2858, %v3136, 0
        %v3237 = vsel %vm2858, %v3137, 0
        %v3240 = vsel %vm2858, %v3138, 0
        %3242 = vmatprep.subr.bf16.mxu0 0
        %3243 = vmatpush1.bf16.msra.mxu0 %v3182
        %3244 = vmatprep.subr.bf16.mxu0 0
        %3245 = vmatpush1.bf16.msra.mxu0 %v3183
        %3246 = vmatprep.subr.bf16.mxu0 0
        %3247 = vmatpush1.bf16.msra.mxu0 %v3184
        %3248 = vmatprep.subr.bf16.mxu0 0
        %3249 = vmatpush1.bf16.msra.mxu0 %v3185
        %3250 = vmatprep.subr.bf16.mxu0 0
        %3251 = vmatpush1.bf16.msra.mxu0 %v3186
        %3252 = vmatprep.subr.bf16.mxu0 0
        %3253 = vmatpush1.bf16.msra.mxu0 %v3187
        %3254 = vmatprep.subr.bf16.mxu0 0
        %3255 = vmatpush1.bf16.msra.mxu0 0
        %3256 = vmatprep.subr.bf16.mxu0 0
        %3257 = vmatpush1.bf16.msra.mxu0 0
        %3258 = vmatprep.subr.bf16.mxu0 0
        %3259 = vmatpush1.bf16.msra.mxu0 0
        %3260 = vmatprep.subr.bf16.mxu0 0
        %3261 = vmatpush1.bf16.msra.mxu0 0
        %3262 = vmatprep.subr.bf16.mxu0 0
        %3263 = vmatpush1.bf16.msra.mxu0 0
        %3264 = vmatprep.subr.bf16.mxu0 0
        %3265 = vmatpush1.bf16.msra.mxu0 0
        %3266 = vmatprep.subr.bf16.mxu0 0
        %3267 = vmatpush1.bf16.msra.mxu0 0
        %3268 = vmatprep.subr.bf16.mxu0 0
        %3269 = vmatpush1.bf16.msra.mxu0 0
        %3270 = vmatprep.subr.bf16.mxu0 0
        %3271 = vmatpush1.bf16.msra.mxu0 0
        %3272 = vmatprep.subr.bf16.mxu0 0
        %3273 = vmatpush1.bf16.msra.mxu0 0
        %3274 = vmatprep.mubr.bf16.mxu0 0
        %3275 = vmatmul.mubr.bf16.gmra.mrb[0].mxu0 %v3195
        %v3276 = vpop.f32.mrb[0].mxu0
        %v3277 = vadd.f32 %v3156, %v3276
        %v3278 = vpop.f32.mrb[0].mxu0
        %v3279 = vpop.f32.mrb[0].mxu0
        %v3280 = vadd.f32 %v3156, %v3279
        %v3281 = vpop.f32.mrb[0].mxu0
        %3282 = vmatprep.mubr.bf16.mxu0 0
        %3283 = vmatmul.mubr.bf16.gmra.mrb[0].mxu0 %v3198
        %v3284 = vpop.f32.mrb[0].mxu0
        %v3285 = vadd.f32 %v3156, %v3284
        %v3286 = vpop.f32.mrb[0].mxu0
        %v3287 = vpop.f32.mrb[0].mxu0
        %v3288 = vadd.f32 %v3156, %v3287
        %v3289 = vpop.f32.mrb[0].mxu0
        %3290 = vmatprep.mubr.bf16.mxu0 0
        %3291 = vmatmul.mubr.bf16.gmra.mrb[0].mxu0 %v3201
        %v3292 = vpop.f32.mrb[0].mxu0
        %v3293 = vadd.f32 %v3156, %v3292
        %v3294 = vpop.f32.mrb[0].mxu0
        %v3295 = vpop.f32.mrb[0].mxu0
        %v3296 = vadd.f32 %v3156, %v3295
        %v3297 = vpop.f32.mrb[0].mxu0
        %3298 = vmatprep.mubr.bf16.mxu0 0
        %3299 = vmatmul.mubr.bf16.gmra.mrb[0].mxu0 %v3204
        %v3300 = vpop.f32.mrb[0].mxu0
        %v3301 = vadd.f32 %v3156, %v3300
        %v3302 = vpop.f32.mrb[0].mxu0
        %v3303 = vpop.f32.mrb[0].mxu0
        %v3304 = vadd.f32 %v3156, %v3303
        %v3305 = vpop.f32.mrb[0].mxu0
        %3306 = vmatprep.mubr.bf16.mxu0 0
        %3307 = vmatmul.mubr.bf16.gmra.mrb[0].mxu0 %v3207
        %v3308 = vpop.f32.mrb[0].mxu0
        %v3309 = vadd.f32 %v3156, %v3308
        %v3310 = vpop.f32.mrb[0].mxu0
        %v3311 = vpop.f32.mrb[0].mxu0
        %v3312 = vadd.f32 %v3156, %v3311
        %v3313 = vpop.f32.mrb[0].mxu0
        %3314 = vmatprep.mubr.bf16.mxu0 0
        %3315 = vmatmul.mubr.bf16.gmra.mrb[0].mxu0 %v3210
        %v3316 = vpop.f32.mrb[0].mxu0
        %v3317 = vadd.f32 %v3156, %v3316
        %v3318 = vpop.f32.mrb[0].mxu0
        %v3319 = vpop.f32.mrb[0].mxu0
        %v3320 = vadd.f32 %v3156, %v3319
        %v3321 = vpop.f32.mrb[0].mxu0
        %3322 = vmatprep.mubr.bf16.mxu0 0
        %3323 = vmatmul.mubr.bf16.gmra.mrb[0].mxu0 %v3213
        %v3324 = vpop.f32.mrb[0].mxu0
        %v3325 = vadd.f32 %v3156, %v3324
        %v3326 = vpop.f32.mrb[0].mxu0
        %v3327 = vpop.f32.mrb[0].mxu0
        %v3328 = vadd.f32 %v3156, %v3327
        %v3329 = vpop.f32.mrb[0].mxu0
        %3330 = vmatprep.mubr.bf16.mxu0 0
        %3331 = vmatmul.mubr.bf16.gmra.mrb[0].mxu0 %v3216
        %v3332 = vpop.f32.mrb[0].mxu0
        %v3333 = vadd.f32 %v3156, %v3332
        %v3334 = vpop.f32.mrb[0].mxu0
        %v3335 = vpop.f32.mrb[0].mxu0
        %v3336 = vadd.f32 %v3156, %v3335
        %v3337 = vpop.f32.mrb[0].mxu0
        %3338 = vmatprep.mubr.bf16.mxu0 0
        %3339 = vmatmul.mubr.bf16.gmra.mrb[0].mxu0 %v3219
        %v3340 = vpop.f32.mrb[0].mxu0
        %v3341 = vadd.f32 %v3156, %v3340
        %v3342 = vpop.f32.mrb[0].mxu0
        %v3343 = vpop.f32.mrb[0].mxu0
        %v3344 = vadd.f32 %v3156, %v3343
        %v3345 = vpop.f32.mrb[0].mxu0
        %3346 = vmatprep.mubr.bf16.mxu0 0
        %3347 = vmatmul.mubr.bf16.gmra.mrb[0].mxu0 %v3222
        %v3348 = vpop.f32.mrb[0].mxu0
        %v3349 = vadd.f32 %v3156, %v3348
        %v3350 = vpop.f32.mrb[0].mxu0
        %v3351 = vpop.f32.mrb[0].mxu0
        %v3352 = vadd.f32 %v3156, %v3351
        %v3353 = vpop.f32.mrb[0].mxu0
        %3354 = vmatprep.mubr.bf16.mxu0 0
        %3355 = vmatmul.mubr.bf16.gmra.mrb[0].mxu0 %v3225
        %v3356 = vpop.f32.mrb[0].mxu0
        %v3357 = vadd.f32 %v3156, %v3356
        %v3358 = vpop.f32.mrb[0].mxu0
        %v3359 = vpop.f32.mrb[0].mxu0
        %v3360 = vadd.f32 %v3156, %v3359
        %v3361 = vpop.f32.mrb[0].mxu0
        %3362 = vmatprep.mubr.bf16.mxu0 0
        %3363 = vmatmul.mubr.bf16.gmra.mrb[0].mxu0 %v3228
        %v3364 = vpop.f32.mrb[0].mxu0
        %v3365 = vadd.f32 %v3156, %v3364
        %v3366 = vpop.f32.mrb[0].mxu0
        %v3367 = vpop.f32.mrb[0].mxu0
        %v3368 = vadd.f32 %v3156, %v3367
        %v3369 = vpop.f32.mrb[0].mxu0
        %3370 = vmatprep.mubr.bf16.mxu0 0
        %3371 = vmatmul.mubr.bf16.gmra.mrb[0].mxu0 %v3231
        %v3372 = vpop.f32.mrb[0].mxu0
        %v3373 = vadd.f32 %v3156, %v3372
        %v3374 = vpop.f32.mrb[0].mxu0
        %v3375 = vpop.f32.mrb[0].mxu0
        %v3376 = vadd.f32 %v3156, %v3375
        %v3377 = vpop.f32.mrb[0].mxu0
        %3378 = vmatprep.mubr.bf16.mxu0 0
        %3379 = vmatmul.mubr.bf16.gmra.mrb[0].mxu0 %v3234
        %v3380 = vpop.f32.mrb[0].mxu0
        %v3381 = vadd.f32 %v3156, %v3380
        %v3382 = vpop.f32.mrb[0].mxu0
        %v3383 = vpop.f32.mrb[0].mxu0
        %v3384 = vadd.f32 %v3156, %v3383
        %v3385 = vpop.f32.mrb[0].mxu0
        %3386 = vmatprep.mubr.bf16.mxu0 0
        %3387 = vmatmul.mubr.bf16.gmra.mrb[0].mxu0 %v3237
        %v3388 = vpop.f32.mrb[0].mxu0
        %v3389 = vadd.f32 %v3156, %v3388
        %v3390 = vpop.f32.mrb[0].mxu0
        %v3391 = vpop.f32.mrb[0].mxu0
        %v3392 = vadd.f32 %v3156, %v3391
        %v3393 = vpop.f32.mrb[0].mxu0
        %3394 = vmatprep.mubr.bf16.mxu0 0
        %3395 = vmatmul.mubr.bf16.gmra.mrb[0].mxu0 %v3240
        %v3396 = vpop.f32.mrb[0].mxu0
        %v3397 = vadd.f32 %v3156, %v3396
        %v3398 = vpop.f32.mrb[0].mxu0
        %v3399 = vpop.f32.mrb[0].mxu0
        %v3400 = vadd.f32 %v3156, %v3399
        %v3401 = vpop.f32.mrb[0].mxu0
        %3402 = vdwg.mxu0
        %v3403 = vsub.f32 0.0, %v3277
        %v3404 = vsub.f32 0.0, %v3280
        %v3405 = vsub.f32 0.0, %v3285
        %v3406 = vsub.f32 0.0, %v3288
        %v3407 = vsub.f32 0.0, %v3293
        %v3408 = vsub.f32 0.0, %v3296
        %v3409 = vsub.f32 0.0, %v3301
        %v3410 = vsub.f32 0.0, %v3304
        %v3411 = vsub.f32 0.0, %v3309
        %v3412 = vsub.f32 0.0, %v3312
        %v3413 = vsub.f32 0.0, %v3317
        %v3414 = vsub.f32 0.0, %v3320
        %v3415 = vsub.f32 0.0, %v3325
        %v3416 = vsub.f32 0.0, %v3328
        %v3417 = vsub.f32 0.0, %v3333
        %v3418 = vsub.f32 0.0, %v3336
        %v3419 = vsub.f32 0.0, %v3341
        %v3420 = vsub.f32 0.0, %v3344
        %v3421 = vsub.f32 0.0, %v3349
        %v3422 = vsub.f32 0.0, %v3352
        %v3423 = vsub.f32 0.0, %v3357
        %v3424 = vsub.f32 0.0, %v3360
        %v3425 = vsub.f32 0.0, %v3365
        %v3426 = vsub.f32 0.0, %v3368
        %v3427 = vsub.f32 0.0, %v3373
        %v3428 = vsub.f32 0.0, %v3376
        %v3429 = vsub.f32 0.0, %v3381
        %v3430 = vsub.f32 0.0, %v3384
        %v3431 = vsub.f32 0.0, %v3389
        %v3432 = vsub.f32 0.0, %v3392
        %v3433 = vsub.f32 0.0, %v3397
        %v3434 = vsub.f32 0.0, %v3400
        %v3435 = vmul.f32 %v3403, 1.442695
        %v3436 = vpow.pop %v3435
        %v3437 = vmul.f32 %v3404, 1.442695
        %v3438 = vpow.pop %v3437
        %v3439 = vmul.f32 %v3405, 1.442695
        %v3440 = vpow.pop %v3439
        %v3441 = vmul.f32 %v3406, 1.442695
        %v3442 = vpow.pop %v3441
        %v3443 = vmul.f32 %v3407, 1.442695
        %v3444 = vpow.pop %v3443
        %v3445 = vmul.f32 %v3408, 1.442695
        %v3446 = vpow.pop %v3445
        %v3447 = vmul.f32 %v3409, 1.442695
        %v3448 = vpow.pop %v3447
        %v3449 = vmul.f32 %v3410, 1.442695
        %v3450 = vpow.pop %v3449
        %v3451 = vmul.f32 %v3411, 1.442695
        %v3452 = vpow.pop %v3451
        %v3453 = vmul.f32 %v3412, 1.442695
        %v3454 = vpow.pop %v3453
        %v3455 = vmul.f32 %v3413, 1.442695
        %v3456 = vpow.pop %v3455
        %v3457 = vmul.f32 %v3414, 1.442695
        %v3458 = vpow.pop %v3457
        %v3459 = vmul.f32 %v3415, 1.442695
        %v3460 = vpow.pop %v3459
        %v3461 = vmul.f32 %v3416, 1.442695
        %v3462 = vpow.pop %v3461
        %v3463 = vmul.f32 %v3417, 1.442695
        %v3464 = vpow.pop %v3463
        %v3465 = vmul.f32 %v3418, 1.442695
        %v3466 = vpow.pop %v3465
        %v3467 = vmul.f32 %v3419, 1.442695
        %v3468 = vpow.pop %v3467
        %v3469 = vmul.f32 %v3420, 1.442695
        %v3470 = vpow.pop %v3469
        %v3471 = vmul.f32 %v3421, 1.442695
        %v3472 = vpow.pop %v3471
        %v3473 = vmul.f32 %v3422, 1.442695
        %v3474 = vpow.pop %v3473
        %v3475 = vmul.f32 %v3423, 1.442695
        %v3476 = vpow.pop %v3475
        %v3477 = vmul.f32 %v3424, 1.442695
        %v3478 = vpow.pop %v3477
        %v3479 = vmul.f32 %v3425, 1.442695
        %v3480 = vpow.pop %v3479
        %v3481 = vmul.f32 %v3426, 1.442695
        %v3482 = vpow.pop %v3481
        %v3483 = vmul.f32 %v3427, 1.442695
        %v3484 = vpow.pop %v3483
        %v3485 = vmul.f32 %v3428, 1.442695
        %v3486 = vpow.pop %v3485
        %v3487 = vmul.f32 %v3429, 1.442695
        %v3488 = vpow.pop %v3487
        %v3489 = vmul.f32 %v3430, 1.442695
        %v3490 = vpow.pop %v3489
        %v3491 = vmul.f32 %v3431, 1.442695
        %v3492 = vpow.pop %v3491
        %v3493 = vmul.f32 %v3432, 1.442695
        %v3494 = vpow.pop %v3493
        %v3495 = vmul.f32 %v3433, 1.442695
        %v3496 = vpow.pop %v3495
        %v3497 = vmul.f32 %v3434, 1.442695
        %v3498 = vpow.pop %v3497
        %v3499 = vadd.f32 %v3436, 1.0
        %v3500 = vadd.f32 %v3438, 1.0
        %v3501 = vadd.f32 %v3440, 1.0
        %v3502 = vadd.f32 %v3442, 1.0
        %v3503 = vadd.f32 %v3444, 1.0
        %v3504 = vadd.f32 %v3446, 1.0
        %v3505 = vadd.f32 %v3448, 1.0
        %v3506 = vadd.f32 %v3450, 1.0
        %v3507 = vadd.f32 %v3452, 1.0
        %v3508 = vadd.f32 %v3454, 1.0
        %v3509 = vadd.f32 %v3456, 1.0
        %v3510 = vadd.f32 %v3458, 1.0
        %v3511 = vadd.f32 %v3460, 1.0
        %v3512 = vadd.f32 %v3462, 1.0
        %v3513 = vadd.f32 %v3464, 1.0
        %v3514 = vadd.f32 %v3466, 1.0
        %v3515 = vadd.f32 %v3468, 1.0
        %v3516 = vadd.f32 %v3470, 1.0
        %v3517 = vadd.f32 %v3472, 1.0
        %v3518 = vadd.f32 %v3474, 1.0
        %v3519 = vadd.f32 %v3476, 1.0
        %v3520 = vadd.f32 %v3478, 1.0
        %v3521 = vadd.f32 %v3480, 1.0
        %v3522 = vadd.f32 %v3482, 1.0
        %v3523 = vadd.f32 %v3484, 1.0
        %v3524 = vadd.f32 %v3486, 1.0
        %v3525 = vadd.f32 %v3488, 1.0
        %v3526 = vadd.f32 %v3490, 1.0
        %v3527 = vadd.f32 %v3492, 1.0
        %v3528 = vadd.f32 %v3494, 1.0
        %v3529 = vadd.f32 %v3496, 1.0
        %v3530 = vadd.f32 %v3498, 1.0
        %v3531 = vrcp.pop %v3499
        %v3532 = vmul.f32 1.0, %v3531
        %v3533 = vrcp.pop %v3500
        %v3534 = vmul.f32 1.0, %v3533
        %v3535 = vrcp.pop %v3501
        %v3536 = vmul.f32 1.0, %v3535
        %v3537 = vrcp.pop %v3502
        %v3538 = vmul.f32 1.0, %v3537
        %v3539 = vrcp.pop %v3503
        %v3540 = vmul.f32 1.0, %v3539
        %v3541 = vrcp.pop %v3504
        %v3542 = vmul.f32 1.0, %v3541
        %v3543 = vrcp.pop %v3505
        %v3544 = vmul.f32 1.0, %v3543
        %v3545 = vrcp.pop %v3506
        %v3546 = vmul.f32 1.0, %v3545
        %v3547 = vrcp.pop %v3507
        %v3548 = vmul.f32 1.0, %v3547
        %v3549 = vrcp.pop %v3508
        %v3550 = vmul.f32 1.0, %v3549
        %v3551 = vrcp.pop %v3509
        %v3552 = vmul.f32 1.0, %v3551
        %v3553 = vrcp.pop %v3510
        %v3554 = vmul.f32 1.0, %v3553
        %v3555 = vrcp.pop %v3511
        %v3556 = vmul.f32 1.0, %v3555
        %v3557 = vrcp.pop %v3512
        %v3558 = vmul.f32 1.0, %v3557
        %v3559 = vrcp.pop %v3513
        %v3560 = vmul.f32 1.0, %v3559
        %v3561 = vrcp.pop %v3514
        %v3562 = vmul.f32 1.0, %v3561
        %v3563 = vrcp.pop %v3515
        %v3564 = vmul.f32 1.0, %v3563
        %v3565 = vrcp.pop %v3516
        %v3566 = vmul.f32 1.0, %v3565
        %v3567 = vrcp.pop %v3517
        %v3568 = vmul.f32 1.0, %v3567
        %v3569 = vrcp.pop %v3518
        %v3570 = vmul.f32 1.0, %v3569
        %v3571 = vrcp.pop %v3519
        %v3572 = vmul.f32 1.0, %v3571
        %v3573 = vrcp.pop %v3520
        %v3574 = vmul.f32 1.0, %v3573
        %v3575 = vrcp.pop %v3521
        %v3576 = vmul.f32 1.0, %v3575
        %v3577 = vrcp.pop %v3522
        %v3578 = vmul.f32 1.0, %v3577
        %v3579 = vrcp.pop %v3523
        %v3580 = vmul.f32 1.0, %v3579
        %v3581 = vrcp.pop %v3524
        %v3582 = vmul.f32 1.0, %v3581
        %v3583 = vrcp.pop %v3525
        %v3584 = vmul.f32 1.0, %v3583
        %v3585 = vrcp.pop %v3526
        %v3586 = vmul.f32 1.0, %v3585
        %v3587 = vrcp.pop %v3527
        %v3588 = vmul.f32 1.0, %v3587
        %v3589 = vrcp.pop %v3528
        %v3590 = vmul.f32 1.0, %v3589
        %v3591 = vrcp.pop %v3529
        %v3592 = vmul.f32 1.0, %v3591
        %v3593 = vrcp.pop %v3530
        %v3594 = vmul.f32 1.0, %v3593
        %v3595 = vmul.f32 %v3277, %v3532
        %v3596 = vmul.f32 %v3280, %v3534
        %v3597 = vmul.f32 %v3285, %v3536
        %v3598 = vmul.f32 %v3288, %v3538
        %v3599 = vmul.f32 %v3293, %v3540
        %v3600 = vmul.f32 %v3296, %v3542
        %v3601 = vmul.f32 %v3301, %v3544
        %v3602 = vmul.f32 %v3304, %v3546
        %v3603 = vmul.f32 %v3309, %v3548
        %v3604 = vmul.f32 %v3312, %v3550
        %v3605 = vmul.f32 %v3317, %v3552
        %v3606 = vmul.f32 %v3320, %v3554
        %v3607 = vmul.f32 %v3325, %v3556
        %v3608 = vmul.f32 %v3328, %v3558
        %v3609 = vmul.f32 %v3333, %v3560
        %v3610 = vmul.f32 %v3336, %v3562
        %v3611 = vmul.f32 %v3341, %v3564
        %v3612 = vmul.f32 %v3344, %v3566
        %v3613 = vmul.f32 %v3349, %v3568
        %v3614 = vmul.f32 %v3352, %v3570
        %v3615 = vmul.f32 %v3357, %v3572
        %v3616 = vmul.f32 %v3360, %v3574
        %v3617 = vmul.f32 %v3365, %v3576
        %v3618 = vmul.f32 %v3368, %v3578
        %v3619 = vmul.f32 %v3373, %v3580
        %v3620 = vmul.f32 %v3376, %v3582
        %v3621 = vmul.f32 %v3381, %v3584
        %v3622 = vmul.f32 %v3384, %v3586
        %v3623 = vmul.f32 %v3389, %v3588
        %v3624 = vmul.f32 %v3392, %v3590
        %v3625 = vmul.f32 %v3397, %v3592
        %v3626 = vmul.f32 %v3400, %v3594
        %v3627 = vadd.f32 %v3595, %v3596
        %v3628 = vadd.f32 %v3627, %v3597
        %v3629 = vadd.f32 %v3628, %v3598
        %v3630 = vadd.f32 %v3629, %v3599
        %v3631 = vadd.f32 %v3630, %v3600
        %v3632 = vadd.f32 %v3631, %v3601
        %v3633 = vadd.f32 %v3632, %v3602
        %v3634 = vadd.f32 %v3633, %v3603
        %v3635 = vadd.f32 %v3634, %v3604
        %v3636 = vadd.f32 %v3635, %v3605
        %v3637 = vadd.f32 %v3636, %v3606
        %v3638 = vadd.f32 %v3637, %v3607
        %v3639 = vadd.f32 %v3638, %v3608
        %v3640 = vadd.f32 %v3639, %v3609
        %v3641 = vadd.f32 %v3640, %v3610
        %v3642 = vadd.f32 %v3641, %v3611
        %v3643 = vadd.f32 %v3642, %v3612
        %v3644 = vadd.f32 %v3643, %v3613
        %v3645 = vadd.f32 %v3644, %v3614
        %v3646 = vadd.f32 %v3645, %v3615
        %v3647 = vadd.f32 %v3646, %v3616
        %v3648 = vadd.f32 %v3647, %v3617
        %v3649 = vadd.f32 %v3648, %v3618
        %v3650 = vadd.f32 %v3649, %v3619
        %v3651 = vadd.f32 %v3650, %v3620
        %v3652 = vadd.f32 %v3651, %v3621
        %v3653 = vadd.f32 %v3652, %v3622
        %v3654 = vadd.f32 %v3653, %v3623
        %v3655 = vadd.f32 %v3654, %v3624
        %v3656 = vadd.f32 %v3655, %v3625
        %v3657 = vadd.f32 %v3656, %v3626
        %v3658 = vrot.slane %v3657, 4
        %v3659 = vadd.f32 %v3657, %v3658
        %v3660 = vrot.slane %v3659, 2
        %v3661 = vadd.f32 %v3659, %v3660
        %v3662 = vrot.slane %v3661, 1
        %v3663 = vadd.f32 %v3661, %v3662
        %v3664 = vmul.f32 %v3663, %v2928
        %v3665 = vpack.c.bf16 %v3664, %v3664
        %v3666 = vld [vmem:[%s13] sm:$0xff]
        %v3667 = vld [vmem:[%s13 + $0x8] sm:$0xff]
        %v3668 = vld [vmem:[%s13 + $0x10] sm:$0xff]
        %v3669 = vld [vmem:[%s13 + $0x18] sm:$0xff]
        %v3670 = vld [vmem:[%s13 + $0x20] sm:$0xff]
        %v3671 = vld [vmem:[%s13 + $0x28] sm:$0xff]
        %v3672 = vld [vmem:[%s13 + $0x30] sm:$0xff]
        %v3673 = vld [vmem:[%s13 + $0x38] sm:$0xff]
        %v3674 = vld [vmem:[%s13 + $0x40] sm:$0xff]
        %v3675 = vld [vmem:[%s13 + $0x48] sm:$0xff]
        %v3676 = vld [vmem:[%s13 + $0x50] sm:$0xff]
        %v3677 = vld [vmem:[%s13 + $0x58] sm:$0xff]
        %v3678 = vld [vmem:[%s13 + $0x60] sm:$0xff]
        %v3679 = vld [vmem:[%s13 + $0x68] sm:$0xff]
        %v3680 = vld [vmem:[%s13 + $0x70] sm:$0xff]
        %v3681 = vld [vmem:[%s13 + $0x78] sm:$0xff]
        %v3682 = vld [vmem:[%s13 + $0x80] sm:$0xff]
        %v3683 = vld [vmem:[%s13 + $0x88] sm:$0xff]
        %v3684 = vld [vmem:[%s13 + $0x90] sm:$0xff]
        %v3685 = vld [vmem:[%s13 + $0x98] sm:$0xff]
        %v3686 = vld [vmem:[%s13 + $0xa0] sm:$0xff]
        %v3687 = vld [vmem:[%s13 + $0xa8] sm:$0xff]
        %v3688 = vld [vmem:[%s13 + $0xb0] sm:$0xff]
        %v3689 = vld [vmem:[%s13 + $0xb8] sm:$0xff]
        %v3690 = vld [vmem:[%s13 + $0xc0] sm:$0xff]
        %v3691 = vld [vmem:[%s13 + $0xc8] sm:$0xff]
        %v3692 = vld [vmem:[%s13 + $0xd0] sm:$0xff]
        %v3693 = vld [vmem:[%s13 + $0xd8] sm:$0xff]
        %v3694 = vld [vmem:[%s13 + $0xe0] sm:$0xff]
        %v3695 = vld [vmem:[%s13 + $0xe8] sm:$0xff]
        %v3696 = vld [vmem:[%s13 + $0xf0] sm:$0xff]
        %v3697 = vld [vmem:[%s13 + $0xf8] sm:$0xff]
        %v3698 = vld [vmem:[%s14] sm:$0xf]
        %v3731 = vunpack.c.l.b16 %v3666
        %v3732 = vunpack.c.h.b16 %v3666
        %v3733 = vunpack.c.l.b16 %v3667
        %v3734 = vunpack.c.h.b16 %v3667
        %v3735 = vunpack.c.l.b16 %v3668
        %v3736 = vunpack.c.h.b16 %v3668
        %v3737 = vunpack.c.l.b16 %v3669
        %v3738 = vunpack.c.h.b16 %v3669
        %v3739 = vunpack.c.l.b16 %v3670
        %v3740 = vunpack.c.h.b16 %v3670
        %v3741 = vunpack.c.l.b16 %v3671
        %v3742 = vunpack.c.h.b16 %v3671
        %v3743 = vunpack.c.l.b16 %v3672
        %v3744 = vunpack.c.h.b16 %v3672
        %v3745 = vunpack.c.l.b16 %v3673
        %v3746 = vunpack.c.h.b16 %v3673
        %v3747 = vunpack.c.l.b16 %v3674
        %v3748 = vunpack.c.h.b16 %v3674
        %v3749 = vunpack.c.l.b16 %v3675
        %v3750 = vunpack.c.h.b16 %v3675
        %v3751 = vunpack.c.l.b16 %v3676
        %v3752 = vunpack.c.h.b16 %v3676
        %v3753 = vunpack.c.l.b16 %v3677
        %v3754 = vunpack.c.h.b16 %v3677
        %v3755 = vunpack.c.l.b16 %v3678
        %v3756 = vunpack.c.h.b16 %v3678
        %v3757 = vunpack.c.l.b16 %v3679
        %v3758 = vunpack.c.h.b16 %v3679
        %v3759 = vunpack.c.l.b16 %v3680
        %v3760 = vunpack.c.h.b16 %v3680
        %v3761 = vunpack.c.l.b16 %v3681
        %v3762 = vunpack.c.h.b16 %v3681
        %v3763 = vunpack.c.l.b16 %v3682
        %v3764 = vunpack.c.h.b16 %v3682
        %v3765 = vunpack.c.l.b16 %v3683
        %v3766 = vunpack.c.h.b16 %v3683
        %v3767 = vunpack.c.l.b16 %v3684
        %v3768 = vunpack.c.h.b16 %v3684
        %v3769 = vunpack.c.l.b16 %v3685
        %v3770 = vunpack.c.h.b16 %v3685
        %v3771 = vunpack.c.l.b16 %v3686
        %v3772 = vunpack.c.h.b16 %v3686
        %v3773 = vunpack.c.l.b16 %v3687
        %v3774 = vunpack.c.h.b16 %v3687
        %v3775 = vunpack.c.l.b16 %v3688
        %v3776 = vunpack.c.h.b16 %v3688
        %v3777 = vunpack.c.l.b16 %v3689
        %v3778 = vunpack.c.h.b16 %v3689
        %v3779 = vunpack.c.l.b16 %v3690
        %v3780 = vunpack.c.h.b16 %v3690
        %v3781 = vunpack.c.l.b16 %v3691
        %v3782 = vunpack.c.h.b16 %v3691
        %v3783 = vunpack.c.l.b16 %v3692
        %v3784 = vunpack.c.h.b16 %v3692
        %v3785 = vunpack.c.l.b16 %v3693
        %v3786 = vunpack.c.h.b16 %v3693
        %v3787 = vunpack.c.l.b16 %v3694
        %v3788 = vunpack.c.h.b16 %v3694
        %v3789 = vunpack.c.l.b16 %v3695
        %v3790 = vunpack.c.h.b16 %v3695
        %v3791 = vunpack.c.l.b16 %v3696
        %v3792 = vunpack.c.h.b16 %v3696
        %v3793 = vunpack.c.l.b16 %v3697
        %v3794 = vunpack.c.h.b16 %v3697
        %v3795 = vpack.c.b16 %v3735, %v3731
        %v3796 = vpack.c.b16 %v3736, %v3732
        %v3797 = vpack.c.b16 %v3737, %v3733
        %v3798 = vpack.c.b16 %v3738, %v3734
        %v3799 = vpack.c.b16 %v3743, %v3739
        %v3800 = vpack.c.b16 %v3744, %v3740
        %v3801 = vpack.c.b16 %v3745, %v3741
        %v3802 = vpack.c.b16 %v3746, %v3742
        %v3803 = vpack.c.b16 %v3751, %v3747
        %v3804 = vpack.c.b16 %v3752, %v3748
        %v3805 = vpack.c.b16 %v3753, %v3749
        %v3806 = vpack.c.b16 %v3754, %v3750
        %v3807 = vpack.c.b16 %v3759, %v3755
        %v3808 = vpack.c.b16 %v3760, %v3756
        %v3809 = vpack.c.b16 %v3761, %v3757
        %v3810 = vpack.c.b16 %v3762, %v3758
        %v3811 = vpack.c.b16 %v3767, %v3763
        %v3812 = vpack.c.b16 %v3768, %v3764
        %v3813 = vpack.c.b16 %v3769, %v3765
        %v3814 = vpack.c.b16 %v3770, %v3766
        %v3815 = vpack.c.b16 %v3775, %v3771
        %v3816 = vpack.c.b16 %v3776, %v3772
        %v3817 = vpack.c.b16 %v3777, %v3773
        %v3818 = vpack.c.b16 %v3778, %v3774
        %v3819 = vpack.c.b16 %v3783, %v3779
        %v3820 = vpack.c.b16 %v3784, %v3780
        %v3821 = vpack.c.b16 %v3785, %v3781
        %v3822 = vpack.c.b16 %v3786, %v3782
        %v3823 = vpack.c.b16 %v3791, %v3787
        %v3824 = vpack.c.b16 %v3792, %v3788
        %v3825 = vpack.c.b16 %v3793, %v3789
        %v3826 = vpack.c.b16 %v3794, %v3790
        %v3860 = vlaneseq
        %v3861 = vshrl.u32 %v3860, 7
        %v3862 = vsub.s32 0, %v3861
        %v3863 = vrot.slane %v3698, %v3862
        %v3864 = vlaneseq
        %v3865 = vshrl.u32 %v3864, 7
        %v3866 = vsub.s32 1, %v3865
        %v3867 = vrot.slane %v3698, %v3866
        %v3868 = vlaneseq
        %v3869 = vshrl.u32 %v3868, 7
        %v3870 = vsub.s32 2, %v3869
        %v3871 = vrot.slane %v3698, %v3870
        %v3872 = vlaneseq
        %v3873 = vshrl.u32 %v3872, 7
        %v3874 = vsub.s32 3, %v3873
        %v3875 = vrot.slane %v3698, %v3874
        %3880 = vmatprep.subr.bf16.mxu0 %v3796
        %3881 = vmatpush1.bf16.msra.mxu0 %v3795
        %3882 = vmatprep.subr.bf16.mxu0 %v3800
        %3883 = vmatpush1.bf16.msra.mxu0 %v3799
        %3884 = vmatprep.subr.bf16.mxu0 %v3804
        %3885 = vmatpush1.bf16.msra.mxu0 %v3803
        %3886 = vmatprep.subr.bf16.mxu0 %v3808
        %3887 = vmatpush1.bf16.msra.mxu0 %v3807
        %3888 = vmatprep.subr.bf16.mxu0 %v3812
        %3889 = vmatpush1.bf16.msra.mxu0 %v3811
        %3890 = vmatprep.subr.bf16.mxu0 %v3816
        %3891 = vmatpush1.bf16.msra.mxu0 %v3815
        %3892 = vmatprep.subr.bf16.mxu0 %v3820
        %3893 = vmatpush1.bf16.msra.mxu0 %v3819
        %3894 = vmatprep.subr.bf16.mxu0 %v3824
        %3895 = vmatpush1.bf16.msra.mxu0 %v3823
        %3896 = vmatprep.subr.bf16.mxu0 0
        %3897 = vmatpush1.bf16.msra.mxu0 0
        %3898 = vmatprep.subr.bf16.mxu0 0
        %3899 = vmatpush1.bf16.msra.mxu0 0
        %3900 = vmatprep.subr.bf16.mxu0 0
        %3901 = vmatpush1.bf16.msra.mxu0 0
        %3902 = vmatprep.subr.bf16.mxu0 0
        %3903 = vmatpush1.bf16.msra.mxu0 0
        %3904 = vmatprep.subr.bf16.mxu0 0
        %3905 = vmatpush1.bf16.msra.mxu0 0
        %3906 = vmatprep.subr.bf16.mxu0 0
        %3907 = vmatpush1.bf16.msra.mxu0 0
        %3908 = vmatprep.subr.bf16.mxu0 0
        %3909 = vmatpush1.bf16.msra.mxu0 0
        %3910 = vmatprep.subr.bf16.mxu0 0
        %3911 = vmatpush1.bf16.msra.mxu0 0
        %3912 = vmatprep.mubr.bf16.mxu0 0
        %3913 = vmatmul.mubr.bf16.gmra.mrb[0].mxu0 %v3665
        %v3914 = vpop.f32.mrb[0].mxu0
        %v3915 = vadd.f32 %v3863, %v3914
        %v3916 = vpop.f32.mrb[0].mxu0
        %v3917 = vadd.f32 %v3867, %v3916
        %v3918 = vpop.f32.mrb[0].mxu0
        %v3919 = vpop.f32.mrb[0].mxu0
        %3920 = vdwg.mxu0
        %3921 = vmatprep.subr.bf16.mxu0 %v3798
        %3922 = vmatpush1.bf16.msra.mxu0 %v3797
        %3923 = vmatprep.subr.bf16.mxu0 %v3802
        %3924 = vmatpush1.bf16.msra.mxu0 %v3801
        %3925 = vmatprep.subr.bf16.mxu0 %v3806
        %3926 = vmatpush1.bf16.msra.mxu0 %v3805
        %3927 = vmatprep.subr.bf16.mxu0 %v3810
        %3928 = vmatpush1.bf16.msra.mxu0 %v3809
        %3929 = vmatprep.subr.bf16.mxu0 %v3814
        %3930 = vmatpush1.bf16.msra.mxu0 %v3813
        %3931 = vmatprep.subr.bf16.mxu0 %v3818
        %3932 = vmatpush1.bf16.msra.mxu0 %v3817
        %3933 = vmatprep.subr.bf16.mxu0 %v3822
        %3934 = vmatpush1.bf16.msra.mxu0 %v3821
        %3935 = vmatprep.subr.bf16.mxu0 %v3826
        %3936 = vmatpush1.bf16.msra.mxu0 %v3825
        %3937 = vmatprep.subr.bf16.mxu0 0
        %3938 = vmatpush1.bf16.msra.mxu0 0
        %3939 = vmatprep.subr.bf16.mxu0 0
        %3940 = vmatpush1.bf16.msra.mxu0 0
        %3941 = vmatprep.subr.bf16.mxu0 0
        %3942 = vmatpush1.bf16.msra.mxu0 0
        %3943 = vmatprep.subr.bf16.mxu0 0
        %3944 = vmatpush1.bf16.msra.mxu0 0
        %3945 = vmatprep.subr.bf16.mxu0 0
        %3946 = vmatpush1.bf16.msra.mxu0 0
        %3947 = vmatprep.subr.bf16.mxu0 0
        %3948 = vmatpush1.bf16.msra.mxu0 0
        %3949 = vmatprep.subr.bf16.mxu0 0
        %3950 = vmatpush1.bf16.msra.mxu0 0
        %3951 = vmatprep.subr.bf16.mxu0 0
        %3952 = vmatpush1.bf16.msra.mxu0 0
        %3953 = vmatprep.mubr.bf16.mxu0 0
        %3954 = vmatmul.mubr.bf16.gmra.mrb[0].mxu0 %v3665
        %v3955 = vpop.f32.mrb[0].mxu0
        %v3956 = vadd.f32 %v3871, %v3955
        %v3957 = vpop.f32.mrb[0].mxu0
        %v3958 = vadd.f32 %v3875, %v3957
        %v3959 = vpop.f32.mrb[0].mxu0
        %v3960 = vpop.f32.mrb[0].mxu0
        %3961 = vdwg.mxu0
        %v3962 = vmax.f32 %v3915, 0.0
        %v3963 = vmax.f32 %v3917, 0.0
        %v3964 = vmax.f32 %v3956, 0.0
        %v3965 = vmax.f32 %v3958, 0.0
        %v3966 = vand.u32 2147483647, %v3915
        %v3967 = vand.u32 2147483647, %v3917
        %v3968 = vand.u32 2147483647, %v3956
        %v3969 = vand.u32 2147483647, %v3958
        %v3970 = vsub.f32 0.0, %v3966
        %v3971 = vsub.f32 0.0, %v3967
        %v3972 = vsub.f32 0.0, %v3968
        %v3973 = vsub.f32 0.0, %v3969
        %v3974 = vmul.f32 %v3970, 1.442695
        %v3975 = vpow.pop %v3974
        %v3976 = vmul.f32 %v3971, 1.442695
        %v3977 = vpow.pop %v3976
        %v3978 = vmul.f32 %v3972, 1.442695
        %v3979 = vpow.pop %v3978
        %v3980 = vmul.f32 %v3973, 1.442695
        %v3981 = vpow.pop %v3980
        %v3982 = vadd.f32 %v3975, 1.0
        %v3983 = vlog2.pop %v3982
        %v3984 = vmul.f32 %v3983, 0.6931472
        %v3985 = vmul.f32 -0.5, %v3975
        %v3986 = vadd.f32 %v3985, 1.0
        %v3987 = vmul.f32 %v3986, %v3975
        %v3988 = vand.u32 2147483647, %v3975
        %vm3989 = vcmp.lt.f32.partialorder %v3988, 0.0004427343
        %v3990 = vsel %vm3989, %v3987, %v3984
        %v3991 = vadd.f32 %v3977, 1.0
        %v3992 = vlog2.pop %v3991
        %v3993 = vmul.f32 %v3992, 0.6931472
        %v3994 = vmul.f32 -0.5, %v3977
        %v3995 = vadd.f32 %v3994, 1.0
        %v3996 = vmul.f32 %v3995, %v3977
        %v3997 = vand.u32 2147483647, %v3977
        %vm3998 = vcmp.lt.f32.partialorder %v3997, 0.0004427343
        %v3999 = vsel %vm3998, %v3996, %v3993
        %v4000 = vadd.f32 %v3979, 1.0
        %v4001 = vlog2.pop %v4000
        %v4002 = vmul.f32 %v4001, 0.6931472
        %v4003 = vmul.f32 -0.5, %v3979
        %v4004 = vadd.f32 %v4003, 1.0
        %v4005 = vmul.f32 %v4004, %v3979
        %v4006 = vand.u32 2147483647, %v3979
        %vm4007 = vcmp.lt.f32.partialorder %v4006, 0.0004427343
        %v4008 = vsel %vm4007, %v4005, %v4002
        %v4009 = vadd.f32 %v3981, 1.0
        %v4010 = vlog2.pop %v4009
        %v4011 = vmul.f32 %v4010, 0.6931472
        %v4012 = vmul.f32 -0.5, %v3981
        %v4013 = vadd.f32 %v4012, 1.0
        %v4014 = vmul.f32 %v4013, %v3981
        %v4015 = vand.u32 2147483647, %v3981
        %vm4016 = vcmp.lt.f32.partialorder %v4015, 0.0004427343
        %v4017 = vsel %vm4016, %v4014, %v4011
        %v4018 = vadd.f32 %v3962, %v3990
        %v4019 = vadd.f32 %v3963, %v3999
        %v4020 = vadd.f32 %v3964, %v4008
        %v4021 = vadd.f32 %v3965, %v4017
        %v4022 = vtanh.pop %v4018
        %v4023 = vtanh.pop %v4019
        %v4024 = vtanh.pop %v4020
        %v4025 = vtanh.pop %v4021
        %v4026 = vmul.f32 %v3915, %v4022
        %v4027 = vmul.f32 %v3917, %v4023
        %v4028 = vmul.f32 %v3956, %v4024
        %v4029 = vmul.f32 %v3958, %v4025
        %v4030 = vpack.c.bf16 %v4026, %v4026
        %v4031 = vpack.c.bf16 %v4027, %v4027
        %v4032 = vpack.c.bf16 %v4028, %v4028
        %v4033 = vpack.c.bf16 %v4029, %v4029
        %v4034 = vld [vmem:[%s15] sm:$0xf]
        %v4035 = vld [vmem:[%s15 + $0x4] sm:$0xf]
        %v4036 = vld [vmem:[%s15 + $0x8] sm:$0xf]
        %v4037 = vld [vmem:[%s15 + $0xc] sm:$0xf]
        %v4038 = vld [vmem:[%s15 + $0x10] sm:$0xf]
        %v4039 = vld [vmem:[%s15 + $0x14] sm:$0xf]
        %v4040 = vld [vmem:[%s15 + $0x18] sm:$0xf]
        %v4041 = vld [vmem:[%s15 + $0x1c] sm:$0xf]
        %v4042 = vld [vmem:[%s15 + $0x20] sm:$0xf]
        %v4043 = vld [vmem:[%s15 + $0x24] sm:$0xf]
        %v4044 = vld [vmem:[%s15 + $0x28] sm:$0xf]
        %v4045 = vld [vmem:[%s15 + $0x2c] sm:$0xf]
        %v4046 = vld [vmem:[%s15 + $0x30] sm:$0xf]
        %v4047 = vld [vmem:[%s15 + $0x34] sm:$0xf]
        %v4048 = vld [vmem:[%s15 + $0x38] sm:$0xf]
        %v4049 = vld [vmem:[%s15 + $0x3c] sm:$0xf]
        %v4050 = vld [vmem:[%s15 + $0x40] sm:$0xf]
        %v4051 = vld [vmem:[%s15 + $0x44] sm:$0xf]
        %v4052 = vld [vmem:[%s15 + $0x48] sm:$0xf]
        %v4053 = vld [vmem:[%s15 + $0x4c] sm:$0xf]
        %v4054 = vld [vmem:[%s15 + $0x50] sm:$0xf]
        %v4055 = vld [vmem:[%s15 + $0x54] sm:$0xf]
        %v4056 = vld [vmem:[%s15 + $0x58] sm:$0xf]
        %v4057 = vld [vmem:[%s15 + $0x5c] sm:$0xf]
        %v4058 = vld [vmem:[%s15 + $0x60] sm:$0xf]
        %v4059 = vld [vmem:[%s15 + $0x64] sm:$0xf]
        %v4060 = vld [vmem:[%s15 + $0x68] sm:$0xf]
        %v4061 = vld [vmem:[%s15 + $0x6c] sm:$0xf]
        %v4062 = vld [vmem:[%s15 + $0x70] sm:$0xf]
        %v4063 = vld [vmem:[%s15 + $0x74] sm:$0xf]
        %v4064 = vld [vmem:[%s15 + $0x78] sm:$0xf]
        %v4065 = vld [vmem:[%s15 + $0x7c] sm:$0xf]
        %v4066 = vld [vmem:[%s15 + $0x80] sm:$0xf]
        %v4067 = vld [vmem:[%s15 + $0x84] sm:$0xf]
        %v4068 = vld [vmem:[%s15 + $0x88] sm:$0xf]
        %v4069 = vld [vmem:[%s15 + $0x8c] sm:$0xf]
        %v4070 = vld [vmem:[%s15 + $0x90] sm:$0xf]
        %v4071 = vld [vmem:[%s15 + $0x94] sm:$0xf]
        %v4072 = vld [vmem:[%s15 + $0x98] sm:$0xf]
        %v4073 = vld [vmem:[%s15 + $0x9c] sm:$0xf]
        %v4074 = vld [vmem:[%s15 + $0xa0] sm:$0xf]
        %v4075 = vld [vmem:[%s15 + $0xa4] sm:$0xf]
        %v4076 = vld [vmem:[%s15 + $0xa8] sm:$0xf]
        %v4077 = vld [vmem:[%s15 + $0xac] sm:$0xf]
        %v4078 = vld [vmem:[%s15 + $0xb0] sm:$0xf]
        %v4079 = vld [vmem:[%s15 + $0xb4] sm:$0xf]
        %v4080 = vld [vmem:[%s15 + $0xb8] sm:$0xf]
        %v4081 = vld [vmem:[%s15 + $0xbc] sm:$0xf]
        %v4082 = vld [vmem:[%s15 + $0xc0] sm:$0xf]
        %v4083 = vld [vmem:[%s15 + $0xc4] sm:$0xf]
        %v4084 = vld [vmem:[%s15 + $0xc8] sm:$0xf]
        %v4085 = vld [vmem:[%s15 + $0xcc] sm:$0xf]
        %v4086 = vld [vmem:[%s15 + $0xd0] sm:$0xf]
        %v4087 = vld [vmem:[%s15 + $0xd4] sm:$0xf]
        %v4088 = vld [vmem:[%s15 + $0xd8] sm:$0xf]
        %v4089 = vld [vmem:[%s15 + $0xdc] sm:$0xf]
        %v4090 = vld [vmem:[%s15 + $0xe0] sm:$0xf]
        %v4091 = vld [vmem:[%s15 + $0xe4] sm:$0xf]
        %v4092 = vld [vmem:[%s15 + $0xe8] sm:$0xf]
        %v4093 = vld [vmem:[%s15 + $0xec] sm:$0xf]
        %v4094 = vld [vmem:[%s15 + $0xf0] sm:$0xf]
        %v4095 = vld [vmem:[%s15 + $0xf4] sm:$0xf]
        %v4096 = vld [vmem:[%s15 + $0xf8] sm:$0xf]
        %v4097 = vld [vmem:[%s15 + $0xfc] sm:$0xf]
        %v4098 = vld [vmem:[%s16] sm:$0x1]
        %v4163 = vunpack.c.l.b16 %v4034
        %v4164 = vunpack.c.l.b16 %v4035
        %v4165 = vunpack.c.l.b16 %v4036
        %v4166 = vunpack.c.l.b16 %v4037
        %v4167 = vunpack.c.l.b16 %v4038
        %v4168 = vunpack.c.l.b16 %v4039
        %v4169 = vunpack.c.l.b16 %v4040
        %v4170 = vunpack.c.l.b16 %v4041
        %v4171 = vunpack.c.l.b16 %v4042
        %v4172 = vunpack.c.l.b16 %v4043
        %v4173 = vunpack.c.l.b16 %v4044
        %v4174 = vunpack.c.l.b16 %v4045
        %v4175 = vunpack.c.l.b16 %v4046
        %v4176 = vunpack.c.l.b16 %v4047
        %v4177 = vunpack.c.l.b16 %v4048
        %v4178 = vunpack.c.l.b16 %v4049
        %v4179 = vunpack.c.l.b16 %v4050
        %v4180 = vunpack.c.l.b16 %v4051
        %v4181 = vunpack.c.l.b16 %v4052
        %v4182 = vunpack.c.l.b16 %v4053
        %v4183 = vunpack.c.l.b16 %v4054
        %v4184 = vunpack.c.l.b16 %v4055
        %v4185 = vunpack.c.l.b16 %v4056
        %v4186 = vunpack.c.l.b16 %v4057
        %v4187 = vunpack.c.l.b16 %v4058
        %v4188 = vunpack.c.l.b16 %v4059
        %v4189 = vunpack.c.l.b16 %v4060
        %v4190 = vunpack.c.l.b16 %v4061
        %v4191 = vunpack.c.l.b16 %v4062
        %v4192 = vunpack.c.l.b16 %v4063
        %v4193 = vunpack.c.l.b16 %v4064
        %v4194 = vunpack.c.l.b16 %v4065
        %v4195 = vunpack.c.l.b16 %v4066
        %v4196 = vunpack.c.l.b16 %v4067
        %v4197 = vunpack.c.l.b16 %v4068
        %v4198 = vunpack.c.l.b16 %v4069
        %v4199 = vunpack.c.l.b16 %v4070
        %v4200 = vunpack.c.l.b16 %v4071
        %v4201 = vunpack.c.l.b16 %v4072
        %v4202 = vunpack.c.l.b16 %v4073
        %v4203 = vunpack.c.l.b16 %v4074
        %v4204 = vunpack.c.l.b16 %v4075
        %v4205 = vunpack.c.l.b16 %v4076
        %v4206 = vunpack.c.l.b16 %v4077
        %v4207 = vunpack.c.l.b16 %v4078
        %v4208 = vunpack.c.l.b16 %v4079
        %v4209 = vunpack.c.l.b16 %v4080
        %v4210 = vunpack.c.l.b16 %v4081
        %v4211 = vunpack.c.l.b16 %v4082
        %v4212 = vunpack.c.l.b16 %v4083
        %v4213 = vunpack.c.l.b16 %v4084
        %v4214 = vunpack.c.l.b16 %v4085
        %v4215 = vunpack.c.l.b16 %v4086
        %v4216 = vunpack.c.l.b16 %v4087
        %v4217 = vunpack.c.l.b16 %v4088
        %v4218 = vunpack.c.l.b16 %v4089
        %v4219 = vunpack.c.l.b16 %v4090
        %v4220 = vunpack.c.l.b16 %v4091
        %v4221 = vunpack.c.l.b16 %v4092
        %v4222 = vunpack.c.l.b16 %v4093
        %v4223 = vunpack.c.l.b16 %v4094
        %v4224 = vunpack.c.l.b16 %v4095
        %v4225 = vunpack.c.l.b16 %v4096
        %v4226 = vunpack.c.l.b16 %v4097
        %v4227 = vpack.c.b16 %v4164, %v4163
        %v4228 = vpack.c.b16 %v4166, %v4165
        %v4229 = vpack.c.b16 %v4168, %v4167
        %v4230 = vpack.c.b16 %v4170, %v4169
        %v4231 = vpack.c.b16 %v4172, %v4171
        %v4232 = vpack.c.b16 %v4174, %v4173
        %v4233 = vpack.c.b16 %v4176, %v4175
        %v4234 = vpack.c.b16 %v4178, %v4177
        %v4235 = vpack.c.b16 %v4180, %v4179
        %v4236 = vpack.c.b16 %v4182, %v4181
        %v4237 = vpack.c.b16 %v4184, %v4183
        %v4238 = vpack.c.b16 %v4186, %v4185
        %v4239 = vpack.c.b16 %v4188, %v4187
        %v4240 = vpack.c.b16 %v4190, %v4189
        %v4241 = vpack.c.b16 %v4192, %v4191
        %v4242 = vpack.c.b16 %v4194, %v4193
        %v4243 = vpack.c.b16 %v4196, %v4195
        %v4244 = vpack.c.b16 %v4198, %v4197
        %v4245 = vpack.c.b16 %v4200, %v4199
        %v4246 = vpack.c.b16 %v4202, %v4201
        %v4247 = vpack.c.b16 %v4204, %v4203
        %v4248 = vpack.c.b16 %v4206, %v4205
        %v4249 = vpack.c.b16 %v4208, %v4207
        %v4250 = vpack.c.b16 %v4210, %v4209
        %v4251 = vpack.c.b16 %v4212, %v4211
        %v4252 = vpack.c.b16 %v4214, %v4213
        %v4253 = vpack.c.b16 %v4216, %v4215
        %v4254 = vpack.c.b16 %v4218, %v4217
        %v4255 = vpack.c.b16 %v4220, %v4219
        %v4256 = vpack.c.b16 %v4222, %v4221
        %v4257 = vpack.c.b16 %v4224, %v4223
        %v4258 = vpack.c.b16 %v4226, %v4225
        %4291 = vmatprep.subr.bf16.mxu0 0
        %4292 = vmatpush1.bf16.msra.mxu0 %v4227
        %4293 = vmatprep.subr.bf16.mxu0 0
        %4294 = vmatpush1.bf16.msra.mxu0 %v4228
        %4295 = vmatprep.subr.bf16.mxu0 0
        %4296 = vmatpush1.bf16.msra.mxu0 %v4229
        %4297 = vmatprep.subr.bf16.mxu0 0
        %4298 = vmatpush1.bf16.msra.mxu0 %v4230
        %4299 = vmatprep.subr.bf16.mxu0 0
        %4300 = vmatpush1.bf16.msra.mxu0 %v4231
        %4301 = vmatprep.subr.bf16.mxu0 0
        %4302 = vmatpush1.bf16.msra.mxu0 %v4232
        %4303 = vmatprep.subr.bf16.mxu0 0
        %4304 = vmatpush1.bf16.msra.mxu0 %v4233
        %4305 = vmatprep.subr.bf16.mxu0 0
        %4306 = vmatpush1.bf16.msra.mxu0 %v4234
        %4307 = vmatprep.subr.bf16.mxu0 0
        %4308 = vmatpush1.bf16.msra.mxu0 %v4235
        %4309 = vmatprep.subr.bf16.mxu0 0
        %4310 = vmatpush1.bf16.msra.mxu0 %v4236
        %4311 = vmatprep.subr.bf16.mxu0 0
        %4312 = vmatpush1.bf16.msra.mxu0 %v4237
        %4313 = vmatprep.subr.bf16.mxu0 0
        %4314 = vmatpush1.bf16.msra.mxu0 %v4238
        %4315 = vmatprep.subr.bf16.mxu0 0
        %4316 = vmatpush1.bf16.msra.mxu0 %v4239
        %4317 = vmatprep.subr.bf16.mxu0 0
        %4318 = vmatpush1.bf16.msra.mxu0 %v4240
        %4319 = vmatprep.subr.bf16.mxu0 0
        %4320 = vmatpush1.bf16.msra.mxu0 %v4241
        %4321 = vmatprep.subr.bf16.mxu0 0
        %4322 = vmatpush1.bf16.msra.mxu0 %v4242
        %4323 = vmatprep.mubr.bf16.mxu0 %v4031
        %4324 = vmatmul.mubr.bf16.gmra.mrb[0].mxu0 %v4030
        %v4325 = vpop.f32.mrb[0].mxu0
        %v4326 = vadd.f32 %v4098, %v4325
        %v4327 = vpop.f32.mrb[0].mxu0
        %v4328 = vpop.f32.mrb[0].mxu0
        %v4329 = vpop.f32.mrb[0].mxu0
        %4330 = vdwg.mxu0
        %4331 = vmatprep.subr.bf16.mxu0 0
        %4332 = vmatpush1.bf16.msra.mxu0 %v4243
        %4333 = vmatprep.subr.bf16.mxu0 0
        %4334 = vmatpush1.bf16.msra.mxu0 %v4244
        %4335 = vmatprep.subr.bf16.mxu0 0
        %4336 = vmatpush1.bf16.msra.mxu0 %v4245
        %4337 = vmatprep.subr.bf16.mxu0 0
        %4338 = vmatpush1.bf16.msra.mxu0 %v4246
        %4339 = vmatprep.subr.bf16.mxu0 0
        %4340 = vmatpush1.bf16.msra.mxu0 %v4247
        %4341 = vmatprep.subr.bf16.mxu0 0
        %4342 = vmatpush1.bf16.msra.mxu0 %v4248
        %4343 = vmatprep.subr.bf16.mxu0 0
        %4344 = vmatpush1.bf16.msra.mxu0 %v4249
        %4345 = vmatprep.subr.bf16.mxu0 0
        %4346 = vmatpush1.bf16.msra.mxu0 %v4250
        %4347 = vmatprep.subr.bf16.mxu0 0
        %4348 = vmatpush1.bf16.msra.mxu0 %v4251
        %4349 = vmatprep.subr.bf16.mxu0 0
        %4350 = vmatpush1.bf16.msra.mxu0 %v4252
        %4351 = vmatprep.subr.bf16.mxu0 0
        %4352 = vmatpush1.bf16.msra.mxu0 %v4253
        %4353 = vmatprep.subr.bf16.mxu0 0
        %4354 = vmatpush1.bf16.msra.mxu0 %v4254
        %4355 = vmatprep.subr.bf16.mxu0 0
        %4356 = vmatpush1.bf16.msra.mxu0 %v4255
        %4357 = vmatprep.subr.bf16.mxu0 0
        %4358 = vmatpush1.bf16.msra.mxu0 %v4256
        %4359 = vmatprep.subr.bf16.mxu0 0
        %4360 = vmatpush1.bf16.msra.mxu0 %v4257
        %4361 = vmatprep.subr.bf16.mxu0 0
        %4362 = vmatpush1.bf16.msra.mxu0 %v4258
        %4363 = vmatprep.mubr.bf16.mxu0 %v4033
        %4364 = vmatmul.mubr.bf16.gmra.mrb[0].mxu0 %v4032
        %v4365 = vpop.f32.mrb[0].mxu0
        %v4366 = vadd.f32 %v4326, %v4365
        %v4367 = vpop.f32.mrb[0].mxu0
        %v4368 = vpop.f32.mrb[0].mxu0
        %v4369 = vpop.f32.mrb[0].mxu0
        %4370 = vdwg.mxu0
        %4371 = vst [vmem:[%s541] sm:$0x1] %v4366
        %s4372 = sand.u32 %s401, 1
        %s4373 = scalar_lea.sflag [#allocation3], %s4372
        %s4374 = sand.u32 %s401, 1
        %s4375 = scalar_lea.vmem [#allocation2], %s4374
        // Predicated region
        $region89: #{model_classify_forward.1} parent=87 // pred_check
          %p4376 = pneg %p411
        $region90: #{model_classify_forward.1} parent=87 // pred_check_branch
          %4378 = sbr.rel (%p4376) target = $region92
        $region91: #{model_classify_forward.1} parent=87 // pred_region
          %s4380 = ssub.s32 16, 16
          %4381 = vsyncadd %s4373, %s4380
          %s4382 = smul.addr %s31, 16
          %s4383 = scalar_lea.hbm %s17, %s4382
          %s4385 = sshll.u32 %s4375, 4
          %s4386 = int_to_ptr.vmem [resolvable:$true] %s4385
          %4388 = dma.vmem_to_hbm [thread:$0]  %s4386, 16, %s4383, %s4373
        $region92: #{model_classify_forward.1} parent=87 // pred_fallthru
          _
      $region88: #{model_classify_forward.1} parent=5 // pred_fallthru
        _
      %p4389 = scmp.le.s32.totalorder 2, %s26
      // Predicated region
      $region93: #{model_classify_forward.1} parent=5 // pred_check
        %p4390 = pneg %p4389
      $region94: #{model_classify_forward.1} parent=5 // pred_check_branch
        %4392 = sbr.rel (%p4390) target = $region96
      $region95: #{model_classify_forward.1} parent=5 // pred_region
        %s4393 = ssub.s32 %s26, 2
        // Predicated region
        $region97: #{model_classify_forward.1} parent=95 // pred_check
          %p4394 = pneg %p417
        $region98: #{model_classify_forward.1} parent=95 // pred_check_branch
          %4396 = sbr.rel (%p4394) target = $region100
        $region99: #{model_classify_forward.1} parent=95 // pred_region
          %s4397 = sand.u32 %s402, 1
          %s4398 = scalar_lea.sflag [#allocation3], %s4397
          %s4399 = sand.u32 %s402, 1
          %s4400 = scalar_lea.vmem [#allocation2], %s4399
          %4401 = dma.done %s4398, 16
        $region100: #{model_classify_forward.1} parent=95 // pred_fallthru
          _
      $region96: #{model_classify_forward.1} parent=5 // pred_fallthru
        _
    $region6: #{model_classify_forward.1} parent=1 // loop_footer
      %s30 = sadd.s32 1, %s26
    $region7: #{model_classify_forward.1} parent=1 // loop_footer_branch
      %25 = sbr.rel target = $region3
    $region8: #{model_classify_forward.1} parent=1 // loop_exit
      _
    %4402 = vsyncpa [#allocation3], 1
    %s4403 = scalar_lea.sflag [#allocation3], 1
    %4404 = vsyncpa %s4403, 1

</llo_original>
